<compile_context>
chip_gen: v5e
topology: v5e:2x2
jax: 0.10.0
libtpu: 0.0.40
codegen_flags: <defaults>
</compile_context>

<pallas_src>
import jax
import jax.numpy as jnp
from jax.experimental import pallas as pl
from jax.experimental.pallas import tpu as pltpu


def _classifier_kernel(x_ref, w1_ref, b1_ref, w2_ref, b2_ref, w3_ref, b3_ref,
                       o_ref):
    # x arrives f32 straight from HBM; cast to bf16 in-register just before
    # the MXU (VPU cast hides under the matmul, no extra HBM pass).
    x = x_ref[...].astype(jnp.bfloat16)                  # (TB, 1024)

    # Linear(1024 -> 512) + ReLU   (Dropout(0.5) = identity in eval mode)
    h1 = jnp.dot(x, w1_ref[...], preferred_element_type=jnp.float32)
    h1 = jnp.maximum(h1 + b1_ref[...], 0.0)              # f32

    # Linear(512 -> 256) + ReLU
    h2 = jnp.dot(h1.astype(jnp.bfloat16), w2_ref[...],
                 preferred_element_type=jnp.float32)
    h2 = jnp.maximum(h2 + b2_ref[...], 0.0)              # f32

    # Linear(256 -> 128)
    e = jnp.dot(h2.astype(jnp.bfloat16), w3_ref[...],
                preferred_element_type=jnp.float32)
    e = e + b3_ref[...]                                   # f32

    # F.normalize(e, p=2, dim=1): e / max(||e||_2, 1e-12)
    # == e * rsqrt(max(sum(e^2), 1e-24)); rsqrt runs on the EUP (free slot).
    sumsq = jnp.sum(e * e, axis=1, keepdims=True)
    o_ref[...] = e * jax.lax.rsqrt(jnp.maximum(sumsq, 1e-24))


def prepare_params(params):
    """One-time conversion: weights -> bf16 (MXU native), biases stay f32."""
    return {
        "w1": params["w1"].astype(jnp.bfloat16),
        "w2": params["w2"].astype(jnp.bfloat16),
        "w3": params["w3"].astype(jnp.bfloat16),
        "b1": params["b1"].astype(jnp.float32),
        "b2": params["b2"].astype(jnp.float32),
        "b3": params["b3"].astype(jnp.float32),
    }


def _x_spec(tb, n_steps):
    """x tile spec; triple-buffer the only pipelined input on multi-step grids."""
    if n_steps >= 3:
        try:
            return pl.BlockSpec((tb, 1024), lambda i: (i, 0),
                                pipeline_mode=pl.Buffered(3))
        except TypeError:  # older JAX without pipeline_mode kwarg
            pass
    return pl.BlockSpec((tb, 1024), lambda i: (i, 0))


def simple_classifier_forward(x, params, *, block_rows=1024):
    """x: (B, 1024) float32. params: dict (ideally from prepare_params).

    Returns (B, 128) float32 L2-normalized embeddings.
    """
    B = x.shape[0]
    assert x.shape[1] == 1024
    tb = min(block_rows, B)
    assert B % tb == 0 and tb % 16 == 0, (
        "batch must tile into 16-row-aligned blocks that divide B")
    # v7x megacore: keep at least 4 grid steps when the batch is large enough
    # (halving preserves divisibility and 16-row alignment since tb >= 512).
    while B // tb < 4 and tb >= 512:
        tb //= 2
    grid = (B // tb,)

    # No-ops if params were pre-converted with prepare_params().
    w1 = params["w1"].astype(jnp.bfloat16)
    w2 = params["w2"].astype(jnp.bfloat16)
    w3 = params["w3"].astype(jnp.bfloat16)
    b1, b2, b3 = params["b1"], params["b2"], params["b3"]

    resident = lambda shape: pl.BlockSpec(shape, lambda i: (0, 0))

    return pl.pallas_call(
        _classifier_kernel,
        out_shape=jax.ShapeDtypeStruct((B, 128), jnp.float32),
        grid=grid,
        in_specs=[
            _x_spec(tb, grid[0]),                          # f32 x tile, pipelined
            resident((1024, 512)), resident((1, 512)),     # w1, b1 (VMEM-resident)
            resident((512, 256)),  resident((1, 256)),     # w2, b2
            resident((256, 128)),  resident((1, 128)),     # w3, b3
        ],
        out_specs=pl.BlockSpec((tb, 128), lambda i: (i, 0)),
        compiler_params=pltpu.CompilerParams(
            dimension_semantics=("parallel",),
            vmem_limit_bytes=48 << 20,
        ),
    )(x, w1, b1, w2, b2, w3, b3)


def _reference_forward(x, params):
    """Pure-JAX reference with the same bf16-matmul / f32-accumulate recipe."""
    xb = x.astype(jnp.bfloat16)
    w1 = params["w1"].astype(jnp.bfloat16)
    w2 = params["w2"].astype(jnp.bfloat16)
    w3 = params["w3"].astype(jnp.bfloat16)
    h1 = jnp.maximum(
        jnp.dot(xb, w1, preferred_element_type=jnp.float32) + params["b1"], 0.0)
    h2 = jnp.maximum(
        jnp.dot(h1.astype(jnp.bfloat16), w2, preferred_element_type=jnp.float32)
        + params["b2"], 0.0)
    e = jnp.dot(h2.astype(jnp.bfloat16), w3,
                preferred_element_type=jnp.float32) + params["b3"]
    norm = jnp.sqrt(jnp.sum(e * e, axis=1, keepdims=True))
    return e / jnp.maximum(norm, 1e-12)


def init_params(key):
    """Deterministic init. Weights stored (in, out); biases stored (1, out)."""
    ks = jax.random.split(key, 6)

    def linear(kw, kb, fan_in, fan_out):
        # Mimic PyTorch's default U(-1/sqrt(fan_in), 1/sqrt(fan_in)) init.
        bound = 1.0 / (fan_in ** 0.5)
        w = jax.random.uniform(kw, (fan_in, fan_out), jnp.float32, -bound, bound)
        b = jax.random.uniform(kb, (1, fan_out), jnp.float32, -bound, bound)
        return w, b

    w1, b1 = linear(ks[0], ks[1], 1024, 512)
    w2, b2 = linear(ks[2], ks[3], 512, 256)
    w3, b3 = linear(ks[4], ks[5], 256, 128)
    return {"w1": w1, "b1": b1, "w2": w2, "b2": b2, "w3": w3, "b3": b3}


if __name__ == "__main__":
    key = jax.random.PRNGKey(0)
    k_x, k_p = jax.random.split(key)

    # Pre-cast weights once (outside the per-call path).
    params = prepare_params(init_params(k_p))

    # 1) Small single-step tile.
    B = 64
    x = jax.random.normal(k_x, (B, 1024), dtype=jnp.float32)
    out = simple_classifier_forward(x, params)
    jax.block_until_ready(out)
    assert out.shape == (B, 128)
    norms = jnp.linalg.norm(out, axis=1)
    assert bool(jnp.all(jnp.abs(norms - 1.0) < 1e-4))
    ref = _reference_forward(x, params)
    assert bool(jnp.max(jnp.abs(out - ref)) < 1e-3)

    # 2) Multi-step grid (exercises the pipelined / Buffered(3) x path).
    B2 = 256
    x2 = jax.random.normal(k_x, (B2, 1024), dtype=jnp.float32)
    out2 = simple_classifier_forward(x2, params, block_rows=64)
    jax.block_until_ready(out2)
    ref2 = _reference_forward(x2, params)
    assert out2.shape == (B2, 128)
    assert bool(jnp.max(jnp.abs(out2 - ref2)) < 1e-3)

    # TODO(synk): training-mode Dropout(0.5) omitted (eval-mode identity);
    # could be added with pltpu.prng_seed + pltpu.prng_random_bits if needed.
    print("KERNEL_OK")
</pallas_src>

<mosaic_0001>
module attributes {stable_mosaic.version = 11 : i64} {
  func.func @_classifier_kernel(%arg0: i32, %arg1: memref<64x1024xf32, #tpu.memory_space<vmem>>, %arg2: memref<1024x512xbf16, #tpu.memory_space<vmem>>, %arg3: memref<1x512xf32, #tpu.memory_space<vmem>>, %arg4: memref<512x256xbf16, #tpu.memory_space<vmem>>, %arg5: memref<1x256xf32, #tpu.memory_space<vmem>>, %arg6: memref<256x128xbf16, #tpu.memory_space<vmem>>, %arg7: memref<1x128xf32, #tpu.memory_space<vmem>>, %arg8: memref<64x128xf32, #tpu.memory_space<vmem>>) attributes {dimension_semantics = [#tpu.dimension_semantics<parallel>], iteration_bounds = array<i64: 1>, scalar_prefetch = 0 : i64, scratch_operands = 0 : i64, tpu.core_type = #tpu.core_type<tc>, window_params = [{transform_indices = @transform_0, window_bounds = array<i64: 64, 1024>}, {pipeline_mode = #tpu.pipeline_mode<synchronous>, transform_indices = @transform_1, window_bounds = array<i64: 1024, 512>}, {pipeline_mode = #tpu.pipeline_mode<synchronous>, transform_indices = @transform_2, window_bounds = array<i64: 1, 512>}, {pipeline_mode = #tpu.pipeline_mode<synchronous>, transform_indices = @transform_3, window_bounds = array<i64: 512, 256>}, {pipeline_mode = #tpu.pipeline_mode<synchronous>, transform_indices = @transform_4, window_bounds = array<i64: 1, 256>}, {pipeline_mode = #tpu.pipeline_mode<synchronous>, transform_indices = @transform_5, window_bounds = array<i64: 256, 128>}, {pipeline_mode = #tpu.pipeline_mode<synchronous>, transform_indices = @transform_6, window_bounds = array<i64: 1, 128>}, {transform_indices = @transform_7, window_bounds = array<i64: 64, 128>}]} {
    %c0 = arith.constant 0 : index
    %c0_0 = arith.constant 0 : index
    %0 = vector.load %arg1[%c0, %c0_0] : memref<64x1024xf32, #tpu.memory_space<vmem>>, vector<64x1024xf32>
    %1 = arith.truncf %0 : vector<64x1024xf32> to vector<64x1024xbf16>
    %c0_1 = arith.constant 0 : index
    %c0_2 = arith.constant 0 : index
    %2 = vector.load %arg2[%c0_1, %c0_2] : memref<1024x512xbf16, #tpu.memory_space<vmem>>, vector<1024x512xbf16>
    %cst = arith.constant dense<0.000000e+00> : vector<64x512xf32>
    %3 = tpu.matmul %1, %2, %cst {dimension_numbers = #tpu.dot_dimension_numbers<[1], [0], [0], [1], [0, 0, 1, 1], [], []>} : vector<64x1024xbf16>, vector<1024x512xbf16>, vector<64x512xf32> -> vector<64x512xf32>
    %c0_3 = arith.constant 0 : index
    %c0_4 = arith.constant 0 : index
    %4 = vector.load %arg3[%c0_3, %c0_4] : memref<1x512xf32, #tpu.memory_space<vmem>>, vector<1x512xf32>
    %5 = vector.broadcast %4 : vector<1x512xf32> to vector<64x512xf32>
    %6 = arith.addf %3, %5 : vector<64x512xf32>
    %cst_5 = arith.constant 0.000000e+00 : f32
    %7 = vector.broadcast %cst_5 : f32 to vector<64x512xf32>
    %8 = arith.maximumf %6, %7 : vector<64x512xf32>
    %9 = arith.truncf %8 : vector<64x512xf32> to vector<64x512xbf16>
    %c0_6 = arith.constant 0 : index
    %c0_7 = arith.constant 0 : index
    %10 = vector.load %arg4[%c0_6, %c0_7] : memref<512x256xbf16, #tpu.memory_space<vmem>>, vector<512x256xbf16>
    %cst_8 = arith.constant dense<0.000000e+00> : vector<64x256xf32>
    %11 = tpu.matmul %9, %10, %cst_8 {dimension_numbers = #tpu.dot_dimension_numbers<[1], [0], [0], [1], [0, 0, 1, 1], [], []>} : vector<64x512xbf16>, vector<512x256xbf16>, vector<64x256xf32> -> vector<64x256xf32>
    %c0_9 = arith.constant 0 : index
    %c0_10 = arith.constant 0 : index
    %12 = vector.load %arg5[%c0_9, %c0_10] : memref<1x256xf32, #tpu.memory_space<vmem>>, vector<1x256xf32>
    %13 = vector.broadcast %12 : vector<1x256xf32> to vector<64x256xf32>
    %14 = arith.addf %11, %13 : vector<64x256xf32>
    %cst_11 = arith.constant 0.000000e+00 : f32
    %15 = vector.broadcast %cst_11 : f32 to vector<64x256xf32>
    %16 = arith.maximumf %14, %15 : vector<64x256xf32>
    %17 = arith.truncf %16 : vector<64x256xf32> to vector<64x256xbf16>
    %c0_12 = arith.constant 0 : index
    %c0_13 = arith.constant 0 : index
    %18 = vector.load %arg6[%c0_12, %c0_13] : memref<256x128xbf16, #tpu.memory_space<vmem>>, vector<256x128xbf16>
    %cst_14 = arith.constant dense<0.000000e+00> : vector<64x128xf32>
    %19 = tpu.matmul %17, %18, %cst_14 {dimension_numbers = #tpu.dot_dimension_numbers<[1], [0], [0], [1], [0, 0, 1, 1], [], []>} : vector<64x256xbf16>, vector<256x128xbf16>, vector<64x128xf32> -> vector<64x128xf32>
    %c0_15 = arith.constant 0 : index
    %c0_16 = arith.constant 0 : index
    %20 = vector.load %arg7[%c0_15, %c0_16] : memref<1x128xf32, #tpu.memory_space<vmem>>, vector<1x128xf32>
    %21 = vector.broadcast %20 : vector<1x128xf32> to vector<64x128xf32>
    %22 = arith.addf %19, %21 : vector<64x128xf32>
    %23 = arith.mulf %22, %22 : vector<64x128xf32>
    %cst_17 = arith.constant dense<0.000000e+00> : vector<64xf32>
    %24 = vector.multi_reduction <add>, %23, %cst_17 [1] : vector<64x128xf32> to vector<64xf32>
    %25 = vector.shape_cast %24 : vector<64xf32> to vector<64x1xf32>
    %cst_18 = arith.constant 1.000000e-24 : f32
    %26 = vector.broadcast %cst_18 : f32 to vector<64x1xf32>
    %27 = arith.maximumf %25, %26 : vector<64x1xf32>
    %28 = math.rsqrt %27 : vector<64x1xf32>
    %29 = vector.broadcast %28 : vector<64x1xf32> to vector<64x128xf32>
    %30 = arith.mulf %22, %29 : vector<64x128xf32>
    %c0_19 = arith.constant 0 : index
    %c0_20 = arith.constant 0 : index
    %31 = vector.load %arg8[%c0_19, %c0_20] : memref<64x128xf32, #tpu.memory_space<vmem>>, vector<64x128xf32>
    tpu.vector_store %arg8[%c0_19, %c0_20], %30 {strides = array<i32>} : memref<64x128xf32, #tpu.memory_space<vmem>>, vector<64x128xf32>,
    return
  }
  func.func @transform_0(%arg0: i32) -> (i32, i32) {
    %c0_i32 = arith.constant 0 : i32
    %c0_i32_0 = arith.constant 0 : i32
    return %arg0, %c0_i32 : i32, i32
  }
  func.func @transform_1(%arg0: i32) -> (i32, i32) {
    %c0_i32 = arith.constant 0 : i32
    %c0_i32_0 = arith.constant 0 : i32
    %c0_i32_1 = arith.constant 0 : i32
    return %c0_i32, %c0_i32_0 : i32, i32
  }
  func.func @transform_2(%arg0: i32) -> (i32, i32) {
    %c0_i32 = arith.constant 0 : i32
    %c0_i32_0 = arith.constant 0 : i32
    %c0_i32_1 = arith.constant 0 : i32
    return %c0_i32, %c0_i32_0 : i32, i32
  }
  func.func @transform_3(%arg0: i32) -> (i32, i32) {
    %c0_i32 = arith.constant 0 : i32
    %c0_i32_0 = arith.constant 0 : i32
    %c0_i32_1 = arith.constant 0 : i32
    return %c0_i32, %c0_i32_0 : i32, i32
  }
  func.func @transform_4(%arg0: i32) -> (i32, i32) {
    %c0_i32 = arith.constant 0 : i32
    %c0_i32_0 = arith.constant 0 : i32
    %c0_i32_1 = arith.constant 0 : i32
    return %c0_i32, %c0_i32_0 : i32, i32
  }
  func.func @transform_5(%arg0: i32) -> (i32, i32) {
    %c0_i32 = arith.constant 0 : i32
    %c0_i32_0 = arith.constant 0 : i32
    %c0_i32_1 = arith.constant 0 : i32
    return %c0_i32, %c0_i32_0 : i32, i32
  }
  func.func @transform_6(%arg0: i32) -> (i32, i32) {
    %c0_i32 = arith.constant 0 : i32
    %c0_i32_0 = arith.constant 0 : i32
    %c0_i32_1 = arith.constant 0 : i32
    return %c0_i32, %c0_i32_0 : i32, i32
  }
  func.func @transform_7(%arg0: i32) -> (i32, i32) {
    %c0_i32 = arith.constant 0 : i32
    %c0_i32_0 = arith.constant 0 : i32
    return %arg0, %c0_i32 : i32, i32
  }
}

</mosaic_0001>

<llo_original>
// kernel: tpu_custom_call.1
$region0: #{tpu_custom_call.1}
  #allocation0 [shape = 'u32[]', space=smem, size = 0x4, offset = 0x4, fixed_abs, tag = 'smem constant byte address 0x4 - core index']
  #allocation1 [shape = 'u32[72,128]{1,0:T(1,128)}', space=vmem, size = 0x9000, scoped, tag = 'internal scratch']
  %s0 = inlined_call_operand.hbm [shape: f32[64,1024], index: 0, kind: input, shape index: {}]
  %s1 = inlined_call_operand.hbm [shape: bf16[1024,512], index: 1, kind: input, shape index: {}]
  %s2 = inlined_call_operand.hbm [shape: f32[1,512], index: 2, kind: input, shape index: {}]
  %s3 = inlined_call_operand.hbm [shape: bf16[512,256], index: 3, kind: input, shape index: {}]
  %s4 = inlined_call_operand.vmem [shape: f32[1,256], index: 4, kind: input, shape index: {}]
  %s5 = inlined_call_operand.hbm [shape: bf16[256,128], index: 5, kind: input, shape index: {}]
  %s6 = inlined_call_operand.vmem [shape: f32[1,128], index: 6, kind: input, shape index: {}]
  %s7 = inlined_call_operand.hbm [shape: f32[64,128], index: 7, kind: output, shape index: {}]
  %s8 = sld [smem:[#allocation0]]
  $region58: #{tpu_custom_call.1} parent=0
    _
  %s10 = ssub.s32 1, %s8
  %s11 = scalar_select 0, %s10, %s8
  $region1: #{tpu_custom_call.1} parent=0
    #allocation2 [shape = 'u8[262144]{0}', space=vmem, size = 0x40000, scoped, tag = 'input window, operand 0, single buffered']
    #allocation3 [shape = 's32[1]{0}', space=sflag, size = 0x4, scoped, tag = 'scoped memory for tpu_custom_call.1']
    #allocation4 [shape = 's32[1]{0}', space=sflag, size = 0x4, scoped, tag = 'scoped memory for tpu_custom_call.1']
    #allocation5 [shape = 'u8[1048576]{0}', space=vmem, size = 0x100000, scoped, tag = 'input window, operand 1, single buffered']
    #allocation6 [shape = 's32[1]{0}', space=sflag, size = 0x4, scoped, tag = 'scoped memory for tpu_custom_call.1']
    #allocation7 [shape = 'u8[2048]{0}', space=vmem, size = 0x800, scoped, tag = 'input window, operand 2, single buffered']
    #allocation8 [shape = 'u8[262144]{0}', space=vmem, size = 0x40000, scoped, tag = 'input window, operand 3, single buffered']
    #allocation9 [shape = 's32[1]{0}', space=sflag, size = 0x4, scoped, tag = 'scoped memory for tpu_custom_call.1']
    #allocation10 [shape = 'u8[65536]{0}', space=vmem, size = 0x10000, scoped, tag = 'input window, operand 5, single buffered']
    #allocation11 [shape = 'u8[32768]{0}', space=vmem, size = 0x8000, scoped, tag = 'output window, operand 0, single buffered']
    %12 = vsyncpa [#allocation3], 0
    %13 = vsyncpa [#allocation6], 0
    %14 = vsyncpa [#allocation9], 0
    %15 = vsyncpa [#allocation4], 0
    // Predicated region
    $region2: #{tpu_custom_call.1} parent=1 // pred_check
      _
    $region3: #{tpu_custom_call.1} parent=1 // pred_check_branch
      %17 = sbr.rel (0) target = $region5
    $region4: #{tpu_custom_call.1} parent=1 // pred_region
      %19 = vsyncadd [#allocation3], 0
      %s20 = sshll.u32 %s0, 4
      %s21 = int_to_ptr.hbm [resolvable:$true] %s20
      %s22 = sshll.u32 [#allocation2], 4
      %s23 = int_to_ptr.vmem [resolvable:$true] %s22
      %28 = dma.hbm_to_vmem [thread:$0]  %s21, 8192, %s23, [#allocation3], 1024, 1024, 64
    $region5: #{tpu_custom_call.1} parent=1 // pred_fallthru
      _
    // Predicated region
    $region6: #{tpu_custom_call.1} parent=1 // pred_check
      _
    $region7: #{tpu_custom_call.1} parent=1 // pred_check_branch
      %30 = sbr.rel (0) target = $region9
    $region8: #{tpu_custom_call.1} parent=1 // pred_region
      %32 = vsyncadd [#allocation6], 0
      %s33 = sshll.u32 %s1, 4
      %s34 = int_to_ptr.hbm [resolvable:$true] %s33
      %s35 = sshll.u32 [#allocation5], 4
      %s36 = int_to_ptr.vmem [resolvable:$true] %s35
      %41 = dma.hbm_to_vmem [thread:$0]  %s34, 32768, %s36, [#allocation6], 256, 256, 16
    $region9: #{tpu_custom_call.1} parent=1 // pred_fallthru
      _
    // Predicated region
    $region10: #{tpu_custom_call.1} parent=1 // pred_check
      _
    $region11: #{tpu_custom_call.1} parent=1 // pred_check_branch
      %43 = sbr.rel (0) target = $region13
    $region12: #{tpu_custom_call.1} parent=1 // pred_region
      %45 = vsyncadd [#allocation6], 0
      %s47 = sshll.u32 %s2, 4
      %s48 = int_to_ptr.hbm [resolvable:$true] %s47
      %s49 = sshll.u32 [#allocation7], 4
      %s50 = int_to_ptr.vmem [resolvable:$true] %s49
      %52 = dma.hbm_to_vmem [thread:$0]  %s48, 64, %s50, [#allocation6]
    $region13: #{tpu_custom_call.1} parent=1 // pred_fallthru
      _
    // Predicated region
    $region14: #{tpu_custom_call.1} parent=1 // pred_check
      _
    $region15: #{tpu_custom_call.1} parent=1 // pred_check_branch
      %54 = sbr.rel (0) target = $region17
    $region16: #{tpu_custom_call.1} parent=1 // pred_region
      %56 = vsyncadd [#allocation9], 0
      %s57 = sshll.u32 %s3, 4
      %s58 = int_to_ptr.hbm [resolvable:$true] %s57
      %s59 = sshll.u32 [#allocation8], 4
      %s60 = int_to_ptr.vmem [resolvable:$true] %s59
      %65 = dma.hbm_to_vmem [thread:$0]  %s58, 8192, %s60, [#allocation9], 128, 128, 8
    $region17: #{tpu_custom_call.1} parent=1 // pred_fallthru
      _
    // Predicated region
    $region18: #{tpu_custom_call.1} parent=1 // pred_check
      _
    $region19: #{tpu_custom_call.1} parent=1 // pred_check_branch
      %67 = sbr.rel (0) target = $region21
    $region20: #{tpu_custom_call.1} parent=1 // pred_region
      _
    $region21: #{tpu_custom_call.1} parent=1 // pred_fallthru
      _
    // Predicated region
    $region22: #{tpu_custom_call.1} parent=1 // pred_check
      _
    $region23: #{tpu_custom_call.1} parent=1 // pred_check_branch
      %69 = sbr.rel (0) target = $region25
    $region24: #{tpu_custom_call.1} parent=1 // pred_region
      %71 = vsyncadd [#allocation9], 0
      %s72 = sshll.u32 %s5, 4
      %s73 = int_to_ptr.hbm [resolvable:$true] %s72
      %s74 = sshll.u32 [#allocation10], 4
      %s75 = int_to_ptr.vmem [resolvable:$true] %s74
      %80 = dma.hbm_to_vmem [thread:$0]  %s73, 2048, %s75, [#allocation9], 64, 64, 4
    $region25: #{tpu_custom_call.1} parent=1 // pred_fallthru
      _
    // Predicated region
    $region26: #{tpu_custom_call.1} parent=1 // pred_check
      _
    $region27: #{tpu_custom_call.1} parent=1 // pred_check_branch
      %82 = sbr.rel (0) target = $region29
    $region28: #{tpu_custom_call.1} parent=1 // pred_region
      _
    $region29: #{tpu_custom_call.1} parent=1 // pred_fallthru
      _
    // Predicated region
    $region30: #{tpu_custom_call.1} parent=1 // pred_check
      _
    $region31: #{tpu_custom_call.1} parent=1 // pred_check_branch
      %84 = sbr.rel (0) target = $region33
    $region32: #{tpu_custom_call.1} parent=1 // pred_region
      %86 = dma.done [#allocation3], 8192
    $region33: #{tpu_custom_call.1} parent=1 // pred_fallthru
      _
    // Predicated region
    $region34: #{tpu_custom_call.1} parent=1 // pred_check
      _
    $region35: #{tpu_custom_call.1} parent=1 // pred_check_branch
      %88 = sbr.rel (0) target = $region37
    $region36: #{tpu_custom_call.1} parent=1 // pred_region
      %90 = dma.done [#allocation6], 32768
    $region37: #{tpu_custom_call.1} parent=1 // pred_fallthru
      _
    // Predicated region
    $region38: #{tpu_custom_call.1} parent=1 // pred_check
      _
    $region39: #{tpu_custom_call.1} parent=1 // pred_check_branch
      %92 = sbr.rel (0) target = $region41
    $region40: #{tpu_custom_call.1} parent=1 // pred_region
      %94 = dma.done [#allocation6], 64
    $region41: #{tpu_custom_call.1} parent=1 // pred_fallthru
      _
    // Predicated region
    $region42: #{tpu_custom_call.1} parent=1 // pred_check
      _
    $region43: #{tpu_custom_call.1} parent=1 // pred_check_branch
      %96 = sbr.rel (0) target = $region45
    $region44: #{tpu_custom_call.1} parent=1 // pred_region
      %98 = dma.done [#allocation9], 8192
    $region45: #{tpu_custom_call.1} parent=1 // pred_fallthru
      _
    // Predicated region
    $region46: #{tpu_custom_call.1} parent=1 // pred_check
      _
    $region47: #{tpu_custom_call.1} parent=1 // pred_check_branch
      %100 = sbr.rel (0) target = $region49
    $region48: #{tpu_custom_call.1} parent=1 // pred_region
      %102 = dma.done [#allocation9], 2048
    $region49: #{tpu_custom_call.1} parent=1 // pred_fallthru
      _
    %v103 = vld [vmem:[#allocation2] sm:$0xff]
    %v104 = vld [vmem:[#allocation2 + $0x8] sm:$0xff]
    %v105 = vld [vmem:[#allocation2 + $0x10] sm:$0xff]
    %v106 = vld [vmem:[#allocation2 + $0x18] sm:$0xff]
    %v107 = vld [vmem:[#allocation2 + $0x20] sm:$0xff]
    %v108 = vld [vmem:[#allocation2 + $0x28] sm:$0xff]
    %v109 = vld [vmem:[#allocation2 + $0x30] sm:$0xff]
    %v110 = vld [vmem:[#allocation2 + $0x38] sm:$0xff]
    %v111 = vld [vmem:[#allocation2 + $0x40] sm:$0xff]
    %v112 = vld [vmem:[#allocation2 + $0x48] sm:$0xff]
    %v113 = vld [vmem:[#allocation2 + $0x50] sm:$0xff]
    %v114 = vld [vmem:[#allocation2 + $0x58] sm:$0xff]
    %v115 = vld [vmem:[#allocation2 + $0x60] sm:$0xff]
    %v116 = vld [vmem:[#allocation2 + $0x68] sm:$0xff]
    %v117 = vld [vmem:[#allocation2 + $0x70] sm:$0xff]
    %v118 = vld [vmem:[#allocation2 + $0x78] sm:$0xff]
    %v119 = vld [vmem:[#allocation2 + $0x80] sm:$0xff]
    %v120 = vld [vmem:[#allocation2 + $0x88] sm:$0xff]
    %v121 = vld [vmem:[#allocation2 + $0x90] sm:$0xff]
    %v122 = vld [vmem:[#allocation2 + $0x98] sm:$0xff]
    %v123 = vld [vmem:[#allocation2 + $0xa0] sm:$0xff]
    %v124 = vld [vmem:[#allocation2 + $0xa8] sm:$0xff]
    %v125 = vld [vmem:[#allocation2 + $0xb0] sm:$0xff]
    %v126 = vld [vmem:[#allocation2 + $0xb8] sm:$0xff]
    %v127 = vld [vmem:[#allocation2 + $0xc0] sm:$0xff]
    %v128 = vld [vmem:[#allocation2 + $0xc8] sm:$0xff]
    %v129 = vld [vmem:[#allocation2 + $0xd0] sm:$0xff]
    %v130 = vld [vmem:[#allocation2 + $0xd8] sm:$0xff]
    %v131 = vld [vmem:[#allocation2 + $0xe0] sm:$0xff]
    %v132 = vld [vmem:[#allocation2 + $0xe8] sm:$0xff]
    %v133 = vld [vmem:[#allocation2 + $0xf0] sm:$0xff]
    %v134 = vld [vmem:[#allocation2 + $0xf8] sm:$0xff]
    %v135 = vld [vmem:[#allocation2 + $0x100] sm:$0xff]
    %v136 = vld [vmem:[#allocation2 + $0x108] sm:$0xff]
    %v137 = vld [vmem:[#allocation2 + $0x110] sm:$0xff]
    %v138 = vld [vmem:[#allocation2 + $0x118] sm:$0xff]
    %v139 = vld [vmem:[#allocation2 + $0x120] sm:$0xff]
    %v140 = vld [vmem:[#allocation2 + $0x128] sm:$0xff]
    %v141 = vld [vmem:[#allocation2 + $0x130] sm:$0xff]
    %v142 = vld [vmem:[#allocation2 + $0x138] sm:$0xff]
    %v143 = vld [vmem:[#allocation2 + $0x140] sm:$0xff]
    %v144 = vld [vmem:[#allocation2 + $0x148] sm:$0xff]
    %v145 = vld [vmem:[#allocation2 + $0x150] sm:$0xff]
    %v146 = vld [vmem:[#allocation2 + $0x158] sm:$0xff]
    %v147 = vld [vmem:[#allocation2 + $0x160] sm:$0xff]
    %v148 = vld [vmem:[#allocation2 + $0x168] sm:$0xff]
    %v149 = vld [vmem:[#allocation2 + $0x170] sm:$0xff]
    %v150 = vld [vmem:[#allocation2 + $0x178] sm:$0xff]
    %v151 = vld [vmem:[#allocation2 + $0x180] sm:$0xff]
    %v152 = vld [vmem:[#allocation2 + $0x188] sm:$0xff]
    %v153 = vld [vmem:[#allocation2 + $0x190] sm:$0xff]
    %v154 = vld [vmem:[#allocation2 + $0x198] sm:$0xff]
    %v155 = vld [vmem:[#allocation2 + $0x1a0] sm:$0xff]
    %v156 = vld [vmem:[#allocation2 + $0x1a8] sm:$0xff]
    %v157 = vld [vmem:[#allocation2 + $0x1b0] sm:$0xff]
    %v158 = vld [vmem:[#allocation2 + $0x1b8] sm:$0xff]
    %v159 = vld [vmem:[#allocation2 + $0x1c0] sm:$0xff]
    %v160 = vld [vmem:[#allocation2 + $0x1c8] sm:$0xff]
    %v161 = vld [vmem:[#allocation2 + $0x1d0] sm:$0xff]
    %v162 = vld [vmem:[#allocation2 + $0x1d8] sm:$0xff]
    %v163 = vld [vmem:[#allocation2 + $0x1e0] sm:$0xff]
    %v164 = vld [vmem:[#allocation2 + $0x1e8] sm:$0xff]
    %v165 = vld [vmem:[#allocation2 + $0x1f0] sm:$0xff]
    %v166 = vld [vmem:[#allocation2 + $0x1f8] sm:$0xff]
    %v167 = vpack.c.bf16 %v111, %v103
    %v168 = vpack.c.bf16 %v112, %v104
    %v169 = vpack.c.bf16 %v113, %v105
    %v170 = vpack.c.bf16 %v114, %v106
    %v171 = vpack.c.bf16 %v115, %v107
    %v172 = vpack.c.bf16 %v116, %v108
    %v173 = vpack.c.bf16 %v117, %v109
    %v174 = vpack.c.bf16 %v118, %v110
    %v175 = vpack.c.bf16 %v127, %v119
    %v176 = vpack.c.bf16 %v128, %v120
    %v177 = vpack.c.bf16 %v129, %v121
    %v178 = vpack.c.bf16 %v130, %v122
    %v179 = vpack.c.bf16 %v131, %v123
    %v180 = vpack.c.bf16 %v132, %v124
    %v181 = vpack.c.bf16 %v133, %v125
    %v182 = vpack.c.bf16 %v134, %v126
    %v183 = vpack.c.bf16 %v143, %v135
    %v184 = vpack.c.bf16 %v144, %v136
    %v185 = vpack.c.bf16 %v145, %v137
    %v186 = vpack.c.bf16 %v146, %v138
    %v187 = vpack.c.bf16 %v147, %v139
    %v188 = vpack.c.bf16 %v148, %v140
    %v189 = vpack.c.bf16 %v149, %v141
    %v190 = vpack.c.bf16 %v150, %v142
    %v191 = vpack.c.bf16 %v159, %v151
    %v192 = vpack.c.bf16 %v160, %v152
    %v193 = vpack.c.bf16 %v161, %v153
    %v194 = vpack.c.bf16 %v162, %v154
    %v195 = vpack.c.bf16 %v163, %v155
    %v196 = vpack.c.bf16 %v164, %v156
    %v197 = vpack.c.bf16 %v165, %v157
    %v198 = vpack.c.bf16 %v166, %v158
    %v199 = vld [vmem:[#allocation5] sm:$0xff]
    %v200 = vld [vmem:[#allocation5 + $0x8] sm:$0xff]
    %v201 = vld [vmem:[#allocation5 + $0x10] sm:$0xff]
    %v202 = vld [vmem:[#allocation5 + $0x18] sm:$0xff]
    %v203 = vld [vmem:[#allocation5 + $0x20] sm:$0xff]
    %v204 = vld [vmem:[#allocation5 + $0x28] sm:$0xff]
    %v205 = vld [vmem:[#allocation5 + $0x30] sm:$0xff]
    %v206 = vld [vmem:[#allocation5 + $0x38] sm:$0xff]
    %v207 = vld [vmem:[#allocation5 + $0x40] sm:$0xff]
    %v208 = vld [vmem:[#allocation5 + $0x48] sm:$0xff]
    %v209 = vld [vmem:[#allocation5 + $0x50] sm:$0xff]
    %v210 = vld [vmem:[#allocation5 + $0x58] sm:$0xff]
    %v211 = vld [vmem:[#allocation5 + $0x60] sm:$0xff]
    %v212 = vld [vmem:[#allocation5 + $0x68] sm:$0xff]
    %v213 = vld [vmem:[#allocation5 + $0x70] sm:$0xff]
    %v214 = vld [vmem:[#allocation5 + $0x78] sm:$0xff]
    %v215 = vld [vmem:[#allocation5 + $0x80] sm:$0xff]
    %v216 = vld [vmem:[#allocation5 + $0x88] sm:$0xff]
    %v217 = vld [vmem:[#allocation5 + $0x90] sm:$0xff]
    %v218 = vld [vmem:[#allocation5 + $0x98] sm:$0xff]
    %v219 = vld [vmem:[#allocation5 + $0xa0] sm:$0xff]
    %v220 = vld [vmem:[#allocation5 + $0xa8] sm:$0xff]
    %v221 = vld [vmem:[#allocation5 + $0xb0] sm:$0xff]
    %v222 = vld [vmem:[#allocation5 + $0xb8] sm:$0xff]
    %v223 = vld [vmem:[#allocation5 + $0xc0] sm:$0xff]
    %v224 = vld [vmem:[#allocation5 + $0xc8] sm:$0xff]
    %v225 = vld [vmem:[#allocation5 + $0xd0] sm:$0xff]
    %v226 = vld [vmem:[#allocation5 + $0xd8] sm:$0xff]
    %v227 = vld [vmem:[#allocation5 + $0xe0] sm:$0xff]
    %v228 = vld [vmem:[#allocation5 + $0xe8] sm:$0xff]
    %v229 = vld [vmem:[#allocation5 + $0xf0] sm:$0xff]
    %v230 = vld [vmem:[#allocation5 + $0xf8] sm:$0xff]
    %v231 = vld [vmem:[#allocation5 + $0x100] sm:$0xff]
    %v232 = vld [vmem:[#allocation5 + $0x108] sm:$0xff]
    %v233 = vld [vmem:[#allocation5 + $0x110] sm:$0xff]
    %v234 = vld [vmem:[#allocation5 + $0x118] sm:$0xff]
    %v235 = vld [vmem:[#allocation5 + $0x120] sm:$0xff]
    %v236 = vld [vmem:[#allocation5 + $0x128] sm:$0xff]
    %v237 = vld [vmem:[#allocation5 + $0x130] sm:$0xff]
    %v238 = vld [vmem:[#allocation5 + $0x138] sm:$0xff]
    %v239 = vld [vmem:[#allocation5 + $0x140] sm:$0xff]
    %v240 = vld [vmem:[#allocation5 + $0x148] sm:$0xff]
    %v241 = vld [vmem:[#allocation5 + $0x150] sm:$0xff]
    %v242 = vld [vmem:[#allocation5 + $0x158] sm:$0xff]
    %v243 = vld [vmem:[#allocation5 + $0x160] sm:$0xff]
    %v244 = vld [vmem:[#allocation5 + $0x168] sm:$0xff]
    %v245 = vld [vmem:[#allocation5 + $0x170] sm:$0xff]
    %v246 = vld [vmem:[#allocation5 + $0x178] sm:$0xff]
    %v247 = vld [vmem:[#allocation5 + $0x180] sm:$0xff]
    %v248 = vld [vmem:[#allocation5 + $0x188] sm:$0xff]
    %v249 = vld [vmem:[#allocation5 + $0x190] sm:$0xff]
    %v250 = vld [vmem:[#allocation5 + $0x198] sm:$0xff]
    %v251 = vld [vmem:[#allocation5 + $0x1a0] sm:$0xff]
    %v252 = vld [vmem:[#allocation5 + $0x1a8] sm:$0xff]
    %v253 = vld [vmem:[#allocation5 + $0x1b0] sm:$0xff]
    %v254 = vld [vmem:[#allocation5 + $0x1b8] sm:$0xff]
    %v255 = vld [vmem:[#allocation5 + $0x1c0] sm:$0xff]
    %v256 = vld [vmem:[#allocation5 + $0x1c8] sm:$0xff]
    %v257 = vld [vmem:[#allocation5 + $0x1d0] sm:$0xff]
    %v258 = vld [vmem:[#allocation5 + $0x1d8] sm:$0xff]
    %v259 = vld [vmem:[#allocation5 + $0x1e0] sm:$0xff]
    %v260 = vld [vmem:[#allocation5 + $0x1e8] sm:$0xff]
    %v261 = vld [vmem:[#allocation5 + $0x1f0] sm:$0xff]
    %v262 = vld [vmem:[#allocation5 + $0x1f8] sm:$0xff]
    %v263 = vld [vmem:[#allocation5 + $0x200] sm:$0xff]
    %v264 = vld [vmem:[#allocation5 + $0x208] sm:$0xff]
    %v265 = vld [vmem:[#allocation5 + $0x210] sm:$0xff]
    %v266 = vld [vmem:[#allocation5 + $0x218] sm:$0xff]
    %v267 = vld [vmem:[#allocation5 + $0x220] sm:$0xff]
    %v268 = vld [vmem:[#allocation5 + $0x228] sm:$0xff]
    %v269 = vld [vmem:[#allocation5 + $0x230] sm:$0xff]
    %v270 = vld [vmem:[#allocation5 + $0x238] sm:$0xff]
    %v271 = vld [vmem:[#allocation5 + $0x240] sm:$0xff]
    %v272 = vld [vmem:[#allocation5 + $0x248] sm:$0xff]
    %v273 = vld [vmem:[#allocation5 + $0x250] sm:$0xff]
    %v274 = vld [vmem:[#allocation5 + $0x258] sm:$0xff]
    %v275 = vld [vmem:[#allocation5 + $0x260] sm:$0xff]
    %v276 = vld [vmem:[#allocation5 + $0x268] sm:$0xff]
    %v277 = vld [vmem:[#allocation5 + $0x270] sm:$0xff]
    %v278 = vld [vmem:[#allocation5 + $0x278] sm:$0xff]
    %v279 = vld [vmem:[#allocation5 + $0x280] sm:$0xff]
    %v280 = vld [vmem:[#allocation5 + $0x288] sm:$0xff]
    %v281 = vld [vmem:[#allocation5 + $0x290] sm:$0xff]
    %v282 = vld [vmem:[#allocation5 + $0x298] sm:$0xff]
    %v283 = vld [vmem:[#allocation5 + $0x2a0] sm:$0xff]
    %v284 = vld [vmem:[#allocation5 + $0x2a8] sm:$0xff]
    %v285 = vld [vmem:[#allocation5 + $0x2b0] sm:$0xff]
    %v286 = vld [vmem:[#allocation5 + $0x2b8] sm:$0xff]
    %v287 = vld [vmem:[#allocation5 + $0x2c0] sm:$0xff]
    %v288 = vld [vmem:[#allocation5 + $0x2c8] sm:$0xff]
    %v289 = vld [vmem:[#allocation5 + $0x2d0] sm:$0xff]
    %v290 = vld [vmem:[#allocation5 + $0x2d8] sm:$0xff]
    %v291 = vld [vmem:[#allocation5 + $0x2e0] sm:$0xff]
    %v292 = vld [vmem:[#allocation5 + $0x2e8] sm:$0xff]
    %v293 = vld [vmem:[#allocation5 + $0x2f0] sm:$0xff]
    %v294 = vld [vmem:[#allocation5 + $0x2f8] sm:$0xff]
    %v295 = vld [vmem:[#allocation5 + $0x300] sm:$0xff]
    %v296 = vld [vmem:[#allocation5 + $0x308] sm:$0xff]
    %v297 = vld [vmem:[#allocation5 + $0x310] sm:$0xff]
    %v298 = vld [vmem:[#allocation5 + $0x318] sm:$0xff]
    %v299 = vld [vmem:[#allocation5 + $0x320] sm:$0xff]
    %v300 = vld [vmem:[#allocation5 + $0x328] sm:$0xff]
    %v301 = vld [vmem:[#allocation5 + $0x330] sm:$0xff]
    %v302 = vld [vmem:[#allocation5 + $0x338] sm:$0xff]
    %v303 = vld [vmem:[#allocation5 + $0x340] sm:$0xff]
    %v304 = vld [vmem:[#allocation5 + $0x348] sm:$0xff]
    %v305 = vld [vmem:[#allocation5 + $0x350] sm:$0xff]
    %v306 = vld [vmem:[#allocation5 + $0x358] sm:$0xff]
    %v307 = vld [vmem:[#allocation5 + $0x360] sm:$0xff]
    %v308 = vld [vmem:[#allocation5 + $0x368] sm:$0xff]
    %v309 = vld [vmem:[#allocation5 + $0x370] sm:$0xff]
    %v310 = vld [vmem:[#allocation5 + $0x378] sm:$0xff]
    %v311 = vld [vmem:[#allocation5 + $0x380] sm:$0xff]
    %v312 = vld [vmem:[#allocation5 + $0x388] sm:$0xff]
    %v313 = vld [vmem:[#allocation5 + $0x390] sm:$0xff]
    %v314 = vld [vmem:[#allocation5 + $0x398] sm:$0xff]
    %v315 = vld [vmem:[#allocation5 + $0x3a0] sm:$0xff]
    %v316 = vld [vmem:[#allocation5 + $0x3a8] sm:$0xff]
    %v317 = vld [vmem:[#allocation5 + $0x3b0] sm:$0xff]
    %v318 = vld [vmem:[#allocation5 + $0x3b8] sm:$0xff]
    %v319 = vld [vmem:[#allocation5 + $0x3c0] sm:$0xff]
    %v320 = vld [vmem:[#allocation5 + $0x3c8] sm:$0xff]
    %v321 = vld [vmem:[#allocation5 + $0x3d0] sm:$0xff]
    %v322 = vld [vmem:[#allocation5 + $0x3d8] sm:$0xff]
    %v323 = vld [vmem:[#allocation5 + $0x3e0] sm:$0xff]
    %v324 = vld [vmem:[#allocation5 + $0x3e8] sm:$0xff]
    %v325 = vld [vmem:[#allocation5 + $0x3f0] sm:$0xff]
    %v326 = vld [vmem:[#allocation5 + $0x3f8] sm:$0xff]
    %v327 = vld [vmem:[#allocation5 + $0x400] sm:$0xff]
    %v328 = vld [vmem:[#allocation5 + $0x408] sm:$0xff]
    %v329 = vld [vmem:[#allocation5 + $0x410] sm:$0xff]
    %v330 = vld [vmem:[#allocation5 + $0x418] sm:$0xff]
    %v331 = vld [vmem:[#allocation5 + $0x420] sm:$0xff]
    %v332 = vld [vmem:[#allocation5 + $0x428] sm:$0xff]
    %v333 = vld [vmem:[#allocation5 + $0x430] sm:$0xff]
    %v334 = vld [vmem:[#allocation5 + $0x438] sm:$0xff]
    %v335 = vld [vmem:[#allocation5 + $0x440] sm:$0xff]
    %v336 = vld [vmem:[#allocation5 + $0x448] sm:$0xff]
    %v337 = vld [vmem:[#allocation5 + $0x450] sm:$0xff]
    %v338 = vld [vmem:[#allocation5 + $0x458] sm:$0xff]
    %v339 = vld [vmem:[#allocation5 + $0x460] sm:$0xff]
    %v340 = vld [vmem:[#allocation5 + $0x468] sm:$0xff]
    %v341 = vld [vmem:[#allocation5 + $0x470] sm:$0xff]
    %v342 = vld [vmem:[#allocation5 + $0x478] sm:$0xff]
    %v343 = vld [vmem:[#allocation5 + $0x480] sm:$0xff]
    %v344 = vld [vmem:[#allocation5 + $0x488] sm:$0xff]
    %v345 = vld [vmem:[#allocation5 + $0x490] sm:$0xff]
    %v346 = vld [vmem:[#allocation5 + $0x498] sm:$0xff]
    %v347 = vld [vmem:[#allocation5 + $0x4a0] sm:$0xff]
    %v348 = vld [vmem:[#allocation5 + $0x4a8] sm:$0xff]
    %v349 = vld [vmem:[#allocation5 + $0x4b0] sm:$0xff]
    %v350 = vld [vmem:[#allocation5 + $0x4b8] sm:$0xff]
    %v351 = vld [vmem:[#allocation5 + $0x4c0] sm:$0xff]
    %v352 = vld [vmem:[#allocation5 + $0x4c8] sm:$0xff]
    %v353 = vld [vmem:[#allocation5 + $0x4d0] sm:$0xff]
    %v354 = vld [vmem:[#allocation5 + $0x4d8] sm:$0xff]
    %v355 = vld [vmem:[#allocation5 + $0x4e0] sm:$0xff]
    %v356 = vld [vmem:[#allocation5 + $0x4e8] sm:$0xff]
    %v357 = vld [vmem:[#allocation5 + $0x4f0] sm:$0xff]
    %v358 = vld [vmem:[#allocation5 + $0x4f8] sm:$0xff]
    %v359 = vld [vmem:[#allocation5 + $0x500] sm:$0xff]
    %v360 = vld [vmem:[#allocation5 + $0x508] sm:$0xff]
    %v361 = vld [vmem:[#allocation5 + $0x510] sm:$0xff]
    %v362 = vld [vmem:[#allocation5 + $0x518] sm:$0xff]
    %v363 = vld [vmem:[#allocation5 + $0x520] sm:$0xff]
    %v364 = vld [vmem:[#allocation5 + $0x528] sm:$0xff]
    %v365 = vld [vmem:[#allocation5 + $0x530] sm:$0xff]
    %v366 = vld [vmem:[#allocation5 + $0x538] sm:$0xff]
    %v367 = vld [vmem:[#allocation5 + $0x540] sm:$0xff]
    %v368 = vld [vmem:[#allocation5 + $0x548] sm:$0xff]
    %v369 = vld [vmem:[#allocation5 + $0x550] sm:$0xff]
    %v370 = vld [vmem:[#allocation5 + $0x558] sm:$0xff]
    %v371 = vld [vmem:[#allocation5 + $0x560] sm:$0xff]
    %v372 = vld [vmem:[#allocation5 + $0x568] sm:$0xff]
    %v373 = vld [vmem:[#allocation5 + $0x570] sm:$0xff]
    %v374 = vld [vmem:[#allocation5 + $0x578] sm:$0xff]
    %v375 = vld [vmem:[#allocation5 + $0x580] sm:$0xff]
    %v376 = vld [vmem:[#allocation5 + $0x588] sm:$0xff]
    %v377 = vld [vmem:[#allocation5 + $0x590] sm:$0xff]
    %v378 = vld [vmem:[#allocation5 + $0x598] sm:$0xff]
    %v379 = vld [vmem:[#allocation5 + $0x5a0] sm:$0xff]
    %v380 = vld [vmem:[#allocation5 + $0x5a8] sm:$0xff]
    %v381 = vld [vmem:[#allocation5 + $0x5b0] sm:$0xff]
    %v382 = vld [vmem:[#allocation5 + $0x5b8] sm:$0xff]
    %v383 = vld [vmem:[#allocation5 + $0x5c0] sm:$0xff]
    %v384 = vld [vmem:[#allocation5 + $0x5c8] sm:$0xff]
    %v385 = vld [vmem:[#allocation5 + $0x5d0] sm:$0xff]
    %v386 = vld [vmem:[#allocation5 + $0x5d8] sm:$0xff]
    %v387 = vld [vmem:[#allocation5 + $0x5e0] sm:$0xff]
    %v388 = vld [vmem:[#allocation5 + $0x5e8] sm:$0xff]
    %v389 = vld [vmem:[#allocation5 + $0x5f0] sm:$0xff]
    %v390 = vld [vmem:[#allocation5 + $0x5f8] sm:$0xff]
    %v391 = vld [vmem:[#allocation5 + $0x600] sm:$0xff]
    %v392 = vld [vmem:[#allocation5 + $0x608] sm:$0xff]
    %v393 = vld [vmem:[#allocation5 + $0x610] sm:$0xff]
    %v394 = vld [vmem:[#allocation5 + $0x618] sm:$0xff]
    %v395 = vld [vmem:[#allocation5 + $0x620] sm:$0xff]
    %v396 = vld [vmem:[#allocation5 + $0x628] sm:$0xff]
    %v397 = vld [vmem:[#allocation5 + $0x630] sm:$0xff]
    %v398 = vld [vmem:[#allocation5 + $0x638] sm:$0xff]
    %v399 = vld [vmem:[#allocation5 + $0x640] sm:$0xff]
    %v400 = vld [vmem:[#allocation5 + $0x648] sm:$0xff]
    %v401 = vld [vmem:[#allocation5 + $0x650] sm:$0xff]
    %v402 = vld [vmem:[#allocation5 + $0x658] sm:$0xff]
    %v403 = vld [vmem:[#allocation5 + $0x660] sm:$0xff]
    %v404 = vld [vmem:[#allocation5 + $0x668] sm:$0xff]
    %v405 = vld [vmem:[#allocation5 + $0x670] sm:$0xff]
    %v406 = vld [vmem:[#allocation5 + $0x678] sm:$0xff]
    %v407 = vld [vmem:[#allocation5 + $0x680] sm:$0xff]
    %v408 = vld [vmem:[#allocation5 + $0x688] sm:$0xff]
    %v409 = vld [vmem:[#allocation5 + $0x690] sm:$0xff]
    %v410 = vld [vmem:[#allocation5 + $0x698] sm:$0xff]
    %v411 = vld [vmem:[#allocation5 + $0x6a0] sm:$0xff]
    %v412 = vld [vmem:[#allocation5 + $0x6a8] sm:$0xff]
    %v413 = vld [vmem:[#allocation5 + $0x6b0] sm:$0xff]
    %v414 = vld [vmem:[#allocation5 + $0x6b8] sm:$0xff]
    %v415 = vld [vmem:[#allocation5 + $0x6c0] sm:$0xff]
    %v416 = vld [vmem:[#allocation5 + $0x6c8] sm:$0xff]
    %v417 = vld [vmem:[#allocation5 + $0x6d0] sm:$0xff]
    %v418 = vld [vmem:[#allocation5 + $0x6d8] sm:$0xff]
    %v419 = vld [vmem:[#allocation5 + $0x6e0] sm:$0xff]
    %v420 = vld [vmem:[#allocation5 + $0x6e8] sm:$0xff]
    %v421 = vld [vmem:[#allocation5 + $0x6f0] sm:$0xff]
    %v422 = vld [vmem:[#allocation5 + $0x6f8] sm:$0xff]
    %v423 = vld [vmem:[#allocation5 + $0x700] sm:$0xff]
    %v424 = vld [vmem:[#allocation5 + $0x708] sm:$0xff]
    %v425 = vld [vmem:[#allocation5 + $0x710] sm:$0xff]
    %v426 = vld [vmem:[#allocation5 + $0x718] sm:$0xff]
    %v427 = vld [vmem:[#allocation5 + $0x720] sm:$0xff]
    %v428 = vld [vmem:[#allocation5 + $0x728] sm:$0xff]
    %v429 = vld [vmem:[#allocation5 + $0x730] sm:$0xff]
    %v430 = vld [vmem:[#allocation5 + $0x738] sm:$0xff]
    %v431 = vld [vmem:[#allocation5 + $0x740] sm:$0xff]
    %v432 = vld [vmem:[#allocation5 + $0x748] sm:$0xff]
    %v433 = vld [vmem:[#allocation5 + $0x750] sm:$0xff]
    %v434 = vld [vmem:[#allocation5 + $0x758] sm:$0xff]
    %v435 = vld [vmem:[#allocation5 + $0x760] sm:$0xff]
    %v436 = vld [vmem:[#allocation5 + $0x768] sm:$0xff]
    %v437 = vld [vmem:[#allocation5 + $0x770] sm:$0xff]
    %v438 = vld [vmem:[#allocation5 + $0x778] sm:$0xff]
    %v439 = vld [vmem:[#allocation5 + $0x780] sm:$0xff]
    %v440 = vld [vmem:[#allocation5 + $0x788] sm:$0xff]
    %v441 = vld [vmem:[#allocation5 + $0x790] sm:$0xff]
    %v442 = vld [vmem:[#allocation5 + $0x798] sm:$0xff]
    %v443 = vld [vmem:[#allocation5 + $0x7a0] sm:$0xff]
    %v444 = vld [vmem:[#allocation5 + $0x7a8] sm:$0xff]
    %v445 = vld [vmem:[#allocation5 + $0x7b0] sm:$0xff]
    %v446 = vld [vmem:[#allocation5 + $0x7b8] sm:$0xff]
    %v447 = vld [vmem:[#allocation5 + $0x7c0] sm:$0xff]
    %v448 = vld [vmem:[#allocation5 + $0x7c8] sm:$0xff]
    %v449 = vld [vmem:[#allocation5 + $0x7d0] sm:$0xff]
    %v450 = vld [vmem:[#allocation5 + $0x7d8] sm:$0xff]
    %v451 = vld [vmem:[#allocation5 + $0x7e0] sm:$0xff]
    %v452 = vld [vmem:[#allocation5 + $0x7e8] sm:$0xff]
    %v453 = vld [vmem:[#allocation5 + $0x7f0] sm:$0xff]
    %v454 = vld [vmem:[#allocation5 + $0x7f8] sm:$0xff]
    %v455 = vld [vmem:[#allocation7] sm:$0xf]
    %v457 = vperm.slane %v455, 0
    %v458 = vperm.slane %v455, 1
    %v459 = vperm.slane %v455, 2
    %v460 = vperm.slane %v455, 3
    %v721 = vunpack.c.l.b16 %v199
    %v722 = vunpack.c.h.b16 %v199
    %v723 = vunpack.c.l.b16 %v200
    %v724 = vunpack.c.h.b16 %v200
    %v725 = vunpack.c.l.b16 %v201
    %v726 = vunpack.c.h.b16 %v201
    %v727 = vunpack.c.l.b16 %v202
    %v728 = vunpack.c.h.b16 %v202
    %v729 = vunpack.c.l.b16 %v203
    %v730 = vunpack.c.h.b16 %v203
    %v731 = vunpack.c.l.b16 %v204
    %v732 = vunpack.c.h.b16 %v204
    %v733 = vunpack.c.l.b16 %v205
    %v734 = vunpack.c.h.b16 %v205
    %v735 = vunpack.c.l.b16 %v206
    %v736 = vunpack.c.h.b16 %v206
    %v737 = vunpack.c.l.b16 %v207
    %v738 = vunpack.c.h.b16 %v207
    %v739 = vunpack.c.l.b16 %v208
    %v740 = vunpack.c.h.b16 %v208
    %v741 = vunpack.c.l.b16 %v209
    %v742 = vunpack.c.h.b16 %v209
    %v743 = vunpack.c.l.b16 %v210
    %v744 = vunpack.c.h.b16 %v210
    %v745 = vunpack.c.l.b16 %v211
    %v746 = vunpack.c.h.b16 %v211
    %v747 = vunpack.c.l.b16 %v212
    %v748 = vunpack.c.h.b16 %v212
    %v749 = vunpack.c.l.b16 %v213
    %v750 = vunpack.c.h.b16 %v213
    %v751 = vunpack.c.l.b16 %v214
    %v752 = vunpack.c.h.b16 %v214
    %v753 = vunpack.c.l.b16 %v215
    %v754 = vunpack.c.h.b16 %v215
    %v755 = vunpack.c.l.b16 %v216
    %v756 = vunpack.c.h.b16 %v216
    %v757 = vunpack.c.l.b16 %v217
    %v758 = vunpack.c.h.b16 %v217
    %v759 = vunpack.c.l.b16 %v218
    %v760 = vunpack.c.h.b16 %v218
    %v761 = vunpack.c.l.b16 %v219
    %v762 = vunpack.c.h.b16 %v219
    %v763 = vunpack.c.l.b16 %v220
    %v764 = vunpack.c.h.b16 %v220
    %v765 = vunpack.c.l.b16 %v221
    %v766 = vunpack.c.h.b16 %v221
    %v767 = vunpack.c.l.b16 %v222
    %v768 = vunpack.c.h.b16 %v222
    %v769 = vunpack.c.l.b16 %v223
    %v770 = vunpack.c.h.b16 %v223
    %v771 = vunpack.c.l.b16 %v224
    %v772 = vunpack.c.h.b16 %v224
    %v773 = vunpack.c.l.b16 %v225
    %v774 = vunpack.c.h.b16 %v225
    %v775 = vunpack.c.l.b16 %v226
    %v776 = vunpack.c.h.b16 %v226
    %v777 = vunpack.c.l.b16 %v227
    %v778 = vunpack.c.h.b16 %v227
    %v779 = vunpack.c.l.b16 %v228
    %v780 = vunpack.c.h.b16 %v228
    %v781 = vunpack.c.l.b16 %v229
    %v782 = vunpack.c.h.b16 %v229
    %v783 = vunpack.c.l.b16 %v230
    %v784 = vunpack.c.h.b16 %v230
    %v785 = vunpack.c.l.b16 %v231
    %v786 = vunpack.c.h.b16 %v231
    %v787 = vunpack.c.l.b16 %v232
    %v788 = vunpack.c.h.b16 %v232
    %v789 = vunpack.c.l.b16 %v233
    %v790 = vunpack.c.h.b16 %v233
    %v791 = vunpack.c.l.b16 %v234
    %v792 = vunpack.c.h.b16 %v234
    %v793 = vunpack.c.l.b16 %v235
    %v794 = vunpack.c.h.b16 %v235
    %v795 = vunpack.c.l.b16 %v236
    %v796 = vunpack.c.h.b16 %v236
    %v797 = vunpack.c.l.b16 %v237
    %v798 = vunpack.c.h.b16 %v237
    %v799 = vunpack.c.l.b16 %v238
    %v800 = vunpack.c.h.b16 %v238
    %v801 = vunpack.c.l.b16 %v239
    %v802 = vunpack.c.h.b16 %v239
    %v803 = vunpack.c.l.b16 %v240
    %v804 = vunpack.c.h.b16 %v240
    %v805 = vunpack.c.l.b16 %v241
    %v806 = vunpack.c.h.b16 %v241
    %v807 = vunpack.c.l.b16 %v242
    %v808 = vunpack.c.h.b16 %v242
    %v809 = vunpack.c.l.b16 %v243
    %v810 = vunpack.c.h.b16 %v243
    %v811 = vunpack.c.l.b16 %v244
    %v812 = vunpack.c.h.b16 %v244
    %v813 = vunpack.c.l.b16 %v245
    %v814 = vunpack.c.h.b16 %v245
    %v815 = vunpack.c.l.b16 %v246
    %v816 = vunpack.c.h.b16 %v246
    %v817 = vunpack.c.l.b16 %v247
    %v818 = vunpack.c.h.b16 %v247
    %v819 = vunpack.c.l.b16 %v248
    %v820 = vunpack.c.h.b16 %v248
    %v821 = vunpack.c.l.b16 %v249
    %v822 = vunpack.c.h.b16 %v249
    %v823 = vunpack.c.l.b16 %v250
    %v824 = vunpack.c.h.b16 %v250
    %v825 = vunpack.c.l.b16 %v251
    %v826 = vunpack.c.h.b16 %v251
    %v827 = vunpack.c.l.b16 %v252
    %v828 = vunpack.c.h.b16 %v252
    %v829 = vunpack.c.l.b16 %v253
    %v830 = vunpack.c.h.b16 %v253
    %v831 = vunpack.c.l.b16 %v254
    %v832 = vunpack.c.h.b16 %v254
    %v833 = vunpack.c.l.b16 %v255
    %v834 = vunpack.c.h.b16 %v255
    %v835 = vunpack.c.l.b16 %v256
    %v836 = vunpack.c.h.b16 %v256
    %v837 = vunpack.c.l.b16 %v257
    %v838 = vunpack.c.h.b16 %v257
    %v839 = vunpack.c.l.b16 %v258
    %v840 = vunpack.c.h.b16 %v258
    %v841 = vunpack.c.l.b16 %v259
    %v842 = vunpack.c.h.b16 %v259
    %v843 = vunpack.c.l.b16 %v260
    %v844 = vunpack.c.h.b16 %v260
    %v845 = vunpack.c.l.b16 %v261
    %v846 = vunpack.c.h.b16 %v261
    %v847 = vunpack.c.l.b16 %v262
    %v848 = vunpack.c.h.b16 %v262
    %v849 = vunpack.c.l.b16 %v263
    %v850 = vunpack.c.h.b16 %v263
    %v851 = vunpack.c.l.b16 %v264
    %v852 = vunpack.c.h.b16 %v264
    %v853 = vunpack.c.l.b16 %v265
    %v854 = vunpack.c.h.b16 %v265
    %v855 = vunpack.c.l.b16 %v266
    %v856 = vunpack.c.h.b16 %v266
    %v857 = vunpack.c.l.b16 %v267
    %v858 = vunpack.c.h.b16 %v267
    %v859 = vunpack.c.l.b16 %v268
    %v860 = vunpack.c.h.b16 %v268
    %v861 = vunpack.c.l.b16 %v269
    %v862 = vunpack.c.h.b16 %v269
    %v863 = vunpack.c.l.b16 %v270
    %v864 = vunpack.c.h.b16 %v270
    %v865 = vunpack.c.l.b16 %v271
    %v866 = vunpack.c.h.b16 %v271
    %v867 = vunpack.c.l.b16 %v272
    %v868 = vunpack.c.h.b16 %v272
    %v869 = vunpack.c.l.b16 %v273
    %v870 = vunpack.c.h.b16 %v273
    %v871 = vunpack.c.l.b16 %v274
    %v872 = vunpack.c.h.b16 %v274
    %v873 = vunpack.c.l.b16 %v275
    %v874 = vunpack.c.h.b16 %v275
    %v875 = vunpack.c.l.b16 %v276
    %v876 = vunpack.c.h.b16 %v276
    %v877 = vunpack.c.l.b16 %v277
    %v878 = vunpack.c.h.b16 %v277
    %v879 = vunpack.c.l.b16 %v278
    %v880 = vunpack.c.h.b16 %v278
    %v881 = vunpack.c.l.b16 %v279
    %v882 = vunpack.c.h.b16 %v279
    %v883 = vunpack.c.l.b16 %v280
    %v884 = vunpack.c.h.b16 %v280
    %v885 = vunpack.c.l.b16 %v281
    %v886 = vunpack.c.h.b16 %v281
    %v887 = vunpack.c.l.b16 %v282
    %v888 = vunpack.c.h.b16 %v282
    %v889 = vunpack.c.l.b16 %v283
    %v890 = vunpack.c.h.b16 %v283
    %v891 = vunpack.c.l.b16 %v284
    %v892 = vunpack.c.h.b16 %v284
    %v893 = vunpack.c.l.b16 %v285
    %v894 = vunpack.c.h.b16 %v285
    %v895 = vunpack.c.l.b16 %v286
    %v896 = vunpack.c.h.b16 %v286
    %v897 = vunpack.c.l.b16 %v287
    %v898 = vunpack.c.h.b16 %v287
    %v899 = vunpack.c.l.b16 %v288
    %v900 = vunpack.c.h.b16 %v288
    %v901 = vunpack.c.l.b16 %v289
    %v902 = vunpack.c.h.b16 %v289
    %v903 = vunpack.c.l.b16 %v290
    %v904 = vunpack.c.h.b16 %v290
    %v905 = vunpack.c.l.b16 %v291
    %v906 = vunpack.c.h.b16 %v291
    %v907 = vunpack.c.l.b16 %v292
    %v908 = vunpack.c.h.b16 %v292
    %v909 = vunpack.c.l.b16 %v293
    %v910 = vunpack.c.h.b16 %v293
    %v911 = vunpack.c.l.b16 %v294
    %v912 = vunpack.c.h.b16 %v294
    %v913 = vunpack.c.l.b16 %v295
    %v914 = vunpack.c.h.b16 %v295
    %v915 = vunpack.c.l.b16 %v296
    %v916 = vunpack.c.h.b16 %v296
    %v917 = vunpack.c.l.b16 %v297
    %v918 = vunpack.c.h.b16 %v297
    %v919 = vunpack.c.l.b16 %v298
    %v920 = vunpack.c.h.b16 %v298
    %v921 = vunpack.c.l.b16 %v299
    %v922 = vunpack.c.h.b16 %v299
    %v923 = vunpack.c.l.b16 %v300
    %v924 = vunpack.c.h.b16 %v300
    %v925 = vunpack.c.l.b16 %v301
    %v926 = vunpack.c.h.b16 %v301
    %v927 = vunpack.c.l.b16 %v302
    %v928 = vunpack.c.h.b16 %v302
    %v929 = vunpack.c.l.b16 %v303
    %v930 = vunpack.c.h.b16 %v303
    %v931 = vunpack.c.l.b16 %v304
    %v932 = vunpack.c.h.b16 %v304
    %v933 = vunpack.c.l.b16 %v305
    %v934 = vunpack.c.h.b16 %v305
    %v935 = vunpack.c.l.b16 %v306
    %v936 = vunpack.c.h.b16 %v306
    %v937 = vunpack.c.l.b16 %v307
    %v938 = vunpack.c.h.b16 %v307
    %v939 = vunpack.c.l.b16 %v308
    %v940 = vunpack.c.h.b16 %v308
    %v941 = vunpack.c.l.b16 %v309
    %v942 = vunpack.c.h.b16 %v309
    %v943 = vunpack.c.l.b16 %v310
    %v944 = vunpack.c.h.b16 %v310
    %v945 = vunpack.c.l.b16 %v311
    %v946 = vunpack.c.h.b16 %v311
    %v947 = vunpack.c.l.b16 %v312
    %v948 = vunpack.c.h.b16 %v312
    %v949 = vunpack.c.l.b16 %v313
    %v950 = vunpack.c.h.b16 %v313
    %v951 = vunpack.c.l.b16 %v314
    %v952 = vunpack.c.h.b16 %v314
    %v953 = vunpack.c.l.b16 %v315
    %v954 = vunpack.c.h.b16 %v315
    %v955 = vunpack.c.l.b16 %v316
    %v956 = vunpack.c.h.b16 %v316
    %v957 = vunpack.c.l.b16 %v317
    %v958 = vunpack.c.h.b16 %v317
    %v959 = vunpack.c.l.b16 %v318
    %v960 = vunpack.c.h.b16 %v318
    %v961 = vunpack.c.l.b16 %v319
    %v962 = vunpack.c.h.b16 %v319
    %v963 = vunpack.c.l.b16 %v320
    %v964 = vunpack.c.h.b16 %v320
    %v965 = vunpack.c.l.b16 %v321
    %v966 = vunpack.c.h.b16 %v321
    %v967 = vunpack.c.l.b16 %v322
    %v968 = vunpack.c.h.b16 %v322
    %v969 = vunpack.c.l.b16 %v323
    %v970 = vunpack.c.h.b16 %v323
    %v971 = vunpack.c.l.b16 %v324
    %v972 = vunpack.c.h.b16 %v324
    %v973 = vunpack.c.l.b16 %v325
    %v974 = vunpack.c.h.b16 %v325
    %v975 = vunpack.c.l.b16 %v326
    %v976 = vunpack.c.h.b16 %v326
    %v977 = vunpack.c.l.b16 %v327
    %v978 = vunpack.c.h.b16 %v327
    %v979 = vunpack.c.l.b16 %v328
    %v980 = vunpack.c.h.b16 %v328
    %v981 = vunpack.c.l.b16 %v329
    %v982 = vunpack.c.h.b16 %v329
    %v983 = vunpack.c.l.b16 %v330
    %v984 = vunpack.c.h.b16 %v330
    %v985 = vunpack.c.l.b16 %v331
    %v986 = vunpack.c.h.b16 %v331
    %v987 = vunpack.c.l.b16 %v332
    %v988 = vunpack.c.h.b16 %v332
    %v989 = vunpack.c.l.b16 %v333
    %v990 = vunpack.c.h.b16 %v333
    %v991 = vunpack.c.l.b16 %v334
    %v992 = vunpack.c.h.b16 %v334
    %v993 = vunpack.c.l.b16 %v335
    %v994 = vunpack.c.h.b16 %v335
    %v995 = vunpack.c.l.b16 %v336
    %v996 = vunpack.c.h.b16 %v336
    %v997 = vunpack.c.l.b16 %v337
    %v998 = vunpack.c.h.b16 %v337
    %v999 = vunpack.c.l.b16 %v338
    %v1000 = vunpack.c.h.b16 %v338
    %v1001 = vunpack.c.l.b16 %v339
    %v1002 = vunpack.c.h.b16 %v339
    %v1003 = vunpack.c.l.b16 %v340
    %v1004 = vunpack.c.h.b16 %v340
    %v1005 = vunpack.c.l.b16 %v341
    %v1006 = vunpack.c.h.b16 %v341
    %v1007 = vunpack.c.l.b16 %v342
    %v1008 = vunpack.c.h.b16 %v342
    %v1009 = vunpack.c.l.b16 %v343
    %v1010 = vunpack.c.h.b16 %v343
    %v1011 = vunpack.c.l.b16 %v344
    %v1012 = vunpack.c.h.b16 %v344
    %v1013 = vunpack.c.l.b16 %v345
    %v1014 = vunpack.c.h.b16 %v345
    %v1015 = vunpack.c.l.b16 %v346
    %v1016 = vunpack.c.h.b16 %v346
    %v1017 = vunpack.c.l.b16 %v347
    %v1018 = vunpack.c.h.b16 %v347
    %v1019 = vunpack.c.l.b16 %v348
    %v1020 = vunpack.c.h.b16 %v348
    %v1021 = vunpack.c.l.b16 %v349
    %v1022 = vunpack.c.h.b16 %v349
    %v1023 = vunpack.c.l.b16 %v350
    %v1024 = vunpack.c.h.b16 %v350
    %v1025 = vunpack.c.l.b16 %v351
    %v1026 = vunpack.c.h.b16 %v351
    %v1027 = vunpack.c.l.b16 %v352
    %v1028 = vunpack.c.h.b16 %v352
    %v1029 = vunpack.c.l.b16 %v353
    %v1030 = vunpack.c.h.b16 %v353
    %v1031 = vunpack.c.l.b16 %v354
    %v1032 = vunpack.c.h.b16 %v354
    %v1033 = vunpack.c.l.b16 %v355
    %v1034 = vunpack.c.h.b16 %v355
    %v1035 = vunpack.c.l.b16 %v356
    %v1036 = vunpack.c.h.b16 %v356
    %v1037 = vunpack.c.l.b16 %v357
    %v1038 = vunpack.c.h.b16 %v357
    %v1039 = vunpack.c.l.b16 %v358
    %v1040 = vunpack.c.h.b16 %v358
    %v1041 = vunpack.c.l.b16 %v359
    %v1042 = vunpack.c.h.b16 %v359
    %v1043 = vunpack.c.l.b16 %v360
    %v1044 = vunpack.c.h.b16 %v360
    %v1045 = vunpack.c.l.b16 %v361
    %v1046 = vunpack.c.h.b16 %v361
    %v1047 = vunpack.c.l.b16 %v362
    %v1048 = vunpack.c.h.b16 %v362
    %v1049 = vunpack.c.l.b16 %v363
    %v1050 = vunpack.c.h.b16 %v363
    %v1051 = vunpack.c.l.b16 %v364
    %v1052 = vunpack.c.h.b16 %v364
    %v1053 = vunpack.c.l.b16 %v365
    %v1054 = vunpack.c.h.b16 %v365
    %v1055 = vunpack.c.l.b16 %v366
    %v1056 = vunpack.c.h.b16 %v366
    %v1057 = vunpack.c.l.b16 %v367
    %v1058 = vunpack.c.h.b16 %v367
    %v1059 = vunpack.c.l.b16 %v368
    %v1060 = vunpack.c.h.b16 %v368
    %v1061 = vunpack.c.l.b16 %v369
    %v1062 = vunpack.c.h.b16 %v369
    %v1063 = vunpack.c.l.b16 %v370
    %v1064 = vunpack.c.h.b16 %v370
    %v1065 = vunpack.c.l.b16 %v371
    %v1066 = vunpack.c.h.b16 %v371
    %v1067 = vunpack.c.l.b16 %v372
    %v1068 = vunpack.c.h.b16 %v372
    %v1069 = vunpack.c.l.b16 %v373
    %v1070 = vunpack.c.h.b16 %v373
    %v1071 = vunpack.c.l.b16 %v374
    %v1072 = vunpack.c.h.b16 %v374
    %v1073 = vunpack.c.l.b16 %v375
    %v1074 = vunpack.c.h.b16 %v375
    %v1075 = vunpack.c.l.b16 %v376
    %v1076 = vunpack.c.h.b16 %v376
    %v1077 = vunpack.c.l.b16 %v377
    %v1078 = vunpack.c.h.b16 %v377
    %v1079 = vunpack.c.l.b16 %v378
    %v1080 = vunpack.c.h.b16 %v378
    %v1081 = vunpack.c.l.b16 %v379
    %v1082 = vunpack.c.h.b16 %v379
    %v1083 = vunpack.c.l.b16 %v380
    %v1084 = vunpack.c.h.b16 %v380
    %v1085 = vunpack.c.l.b16 %v381
    %v1086 = vunpack.c.h.b16 %v381
    %v1087 = vunpack.c.l.b16 %v382
    %v1088 = vunpack.c.h.b16 %v382
    %v1089 = vunpack.c.l.b16 %v383
    %v1090 = vunpack.c.h.b16 %v383
    %v1091 = vunpack.c.l.b16 %v384
    %v1092 = vunpack.c.h.b16 %v384
    %v1093 = vunpack.c.l.b16 %v385
    %v1094 = vunpack.c.h.b16 %v385
    %v1095 = vunpack.c.l.b16 %v386
    %v1096 = vunpack.c.h.b16 %v386
    %v1097 = vunpack.c.l.b16 %v387
    %v1098 = vunpack.c.h.b16 %v387
    %v1099 = vunpack.c.l.b16 %v388
    %v1100 = vunpack.c.h.b16 %v388
    %v1101 = vunpack.c.l.b16 %v389
    %v1102 = vunpack.c.h.b16 %v389
    %v1103 = vunpack.c.l.b16 %v390
    %v1104 = vunpack.c.h.b16 %v390
    %v1105 = vunpack.c.l.b16 %v391
    %v1106 = vunpack.c.h.b16 %v391
    %v1107 = vunpack.c.l.b16 %v392
    %v1108 = vunpack.c.h.b16 %v392
    %v1109 = vunpack.c.l.b16 %v393
    %v1110 = vunpack.c.h.b16 %v393
    %v1111 = vunpack.c.l.b16 %v394
    %v1112 = vunpack.c.h.b16 %v394
    %v1113 = vunpack.c.l.b16 %v395
    %v1114 = vunpack.c.h.b16 %v395
    %v1115 = vunpack.c.l.b16 %v396
    %v1116 = vunpack.c.h.b16 %v396
    %v1117 = vunpack.c.l.b16 %v397
    %v1118 = vunpack.c.h.b16 %v397
    %v1119 = vunpack.c.l.b16 %v398
    %v1120 = vunpack.c.h.b16 %v398
    %v1121 = vunpack.c.l.b16 %v399
    %v1122 = vunpack.c.h.b16 %v399
    %v1123 = vunpack.c.l.b16 %v400
    %v1124 = vunpack.c.h.b16 %v400
    %v1125 = vunpack.c.l.b16 %v401
    %v1126 = vunpack.c.h.b16 %v401
    %v1127 = vunpack.c.l.b16 %v402
    %v1128 = vunpack.c.h.b16 %v402
    %v1129 = vunpack.c.l.b16 %v403
    %v1130 = vunpack.c.h.b16 %v403
    %v1131 = vunpack.c.l.b16 %v404
    %v1132 = vunpack.c.h.b16 %v404
    %v1133 = vunpack.c.l.b16 %v405
    %v1134 = vunpack.c.h.b16 %v405
    %v1135 = vunpack.c.l.b16 %v406
    %v1136 = vunpack.c.h.b16 %v406
    %v1137 = vunpack.c.l.b16 %v407
    %v1138 = vunpack.c.h.b16 %v407
    %v1139 = vunpack.c.l.b16 %v408
    %v1140 = vunpack.c.h.b16 %v408
    %v1141 = vunpack.c.l.b16 %v409
    %v1142 = vunpack.c.h.b16 %v409
    %v1143 = vunpack.c.l.b16 %v410
    %v1144 = vunpack.c.h.b16 %v410
    %v1145 = vunpack.c.l.b16 %v411
    %v1146 = vunpack.c.h.b16 %v411
    %v1147 = vunpack.c.l.b16 %v412
    %v1148 = vunpack.c.h.b16 %v412
    %v1149 = vunpack.c.l.b16 %v413
    %v1150 = vunpack.c.h.b16 %v413
    %v1151 = vunpack.c.l.b16 %v414
    %v1152 = vunpack.c.h.b16 %v414
    %v1153 = vunpack.c.l.b16 %v415
    %v1154 = vunpack.c.h.b16 %v415
    %v1155 = vunpack.c.l.b16 %v416
    %v1156 = vunpack.c.h.b16 %v416
    %v1157 = vunpack.c.l.b16 %v417
    %v1158 = vunpack.c.h.b16 %v417
    %v1159 = vunpack.c.l.b16 %v418
    %v1160 = vunpack.c.h.b16 %v418
    %v1161 = vunpack.c.l.b16 %v419
    %v1162 = vunpack.c.h.b16 %v419
    %v1163 = vunpack.c.l.b16 %v420
    %v1164 = vunpack.c.h.b16 %v420
    %v1165 = vunpack.c.l.b16 %v421
    %v1166 = vunpack.c.h.b16 %v421
    %v1167 = vunpack.c.l.b16 %v422
    %v1168 = vunpack.c.h.b16 %v422
    %v1169 = vunpack.c.l.b16 %v423
    %v1170 = vunpack.c.h.b16 %v423
    %v1171 = vunpack.c.l.b16 %v424
    %v1172 = vunpack.c.h.b16 %v424
    %v1173 = vunpack.c.l.b16 %v425
    %v1174 = vunpack.c.h.b16 %v425
    %v1175 = vunpack.c.l.b16 %v426
    %v1176 = vunpack.c.h.b16 %v426
    %v1177 = vunpack.c.l.b16 %v427
    %v1178 = vunpack.c.h.b16 %v427
    %v1179 = vunpack.c.l.b16 %v428
    %v1180 = vunpack.c.h.b16 %v428
    %v1181 = vunpack.c.l.b16 %v429
    %v1182 = vunpack.c.h.b16 %v429
    %v1183 = vunpack.c.l.b16 %v430
    %v1184 = vunpack.c.h.b16 %v430
    %v1185 = vunpack.c.l.b16 %v431
    %v1186 = vunpack.c.h.b16 %v431
    %v1187 = vunpack.c.l.b16 %v432
    %v1188 = vunpack.c.h.b16 %v432
    %v1189 = vunpack.c.l.b16 %v433
    %v1190 = vunpack.c.h.b16 %v433
    %v1191 = vunpack.c.l.b16 %v434
    %v1192 = vunpack.c.h.b16 %v434
    %v1193 = vunpack.c.l.b16 %v435
    %v1194 = vunpack.c.h.b16 %v435
    %v1195 = vunpack.c.l.b16 %v436
    %v1196 = vunpack.c.h.b16 %v436
    %v1197 = vunpack.c.l.b16 %v437
    %v1198 = vunpack.c.h.b16 %v437
    %v1199 = vunpack.c.l.b16 %v438
    %v1200 = vunpack.c.h.b16 %v438
    %v1201 = vunpack.c.l.b16 %v439
    %v1202 = vunpack.c.h.b16 %v439
    %v1203 = vunpack.c.l.b16 %v440
    %v1204 = vunpack.c.h.b16 %v440
    %v1205 = vunpack.c.l.b16 %v441
    %v1206 = vunpack.c.h.b16 %v441
    %v1207 = vunpack.c.l.b16 %v442
    %v1208 = vunpack.c.h.b16 %v442
    %v1209 = vunpack.c.l.b16 %v443
    %v1210 = vunpack.c.h.b16 %v443
    %v1211 = vunpack.c.l.b16 %v444
    %v1212 = vunpack.c.h.b16 %v444
    %v1213 = vunpack.c.l.b16 %v445
    %v1214 = vunpack.c.h.b16 %v445
    %v1215 = vunpack.c.l.b16 %v446
    %v1216 = vunpack.c.h.b16 %v446
    %v1217 = vunpack.c.l.b16 %v447
    %v1218 = vunpack.c.h.b16 %v447
    %v1219 = vunpack.c.l.b16 %v448
    %v1220 = vunpack.c.h.b16 %v448
    %v1221 = vunpack.c.l.b16 %v449
    %v1222 = vunpack.c.h.b16 %v449
    %v1223 = vunpack.c.l.b16 %v450
    %v1224 = vunpack.c.h.b16 %v450
    %v1225 = vunpack.c.l.b16 %v451
    %v1226 = vunpack.c.h.b16 %v451
    %v1227 = vunpack.c.l.b16 %v452
    %v1228 = vunpack.c.h.b16 %v452
    %v1229 = vunpack.c.l.b16 %v453
    %v1230 = vunpack.c.h.b16 %v453
    %v1231 = vunpack.c.l.b16 %v454
    %v1232 = vunpack.c.h.b16 %v454
    %v1233 = vpack.c.b16 %v725, %v721
    %v1234 = vpack.c.b16 %v726, %v722
    %v1235 = vpack.c.b16 %v727, %v723
    %v1236 = vpack.c.b16 %v728, %v724
    %v1237 = vpack.c.b16 %v733, %v729
    %v1238 = vpack.c.b16 %v734, %v730
    %v1239 = vpack.c.b16 %v735, %v731
    %v1240 = vpack.c.b16 %v736, %v732
    %v1241 = vpack.c.b16 %v741, %v737
    %v1242 = vpack.c.b16 %v742, %v738
    %v1243 = vpack.c.b16 %v743, %v739
    %v1244 = vpack.c.b16 %v744, %v740
    %v1245 = vpack.c.b16 %v749, %v745
    %v1246 = vpack.c.b16 %v750, %v746
    %v1247 = vpack.c.b16 %v751, %v747
    %v1248 = vpack.c.b16 %v752, %v748
    %v1249 = vpack.c.b16 %v757, %v753
    %v1250 = vpack.c.b16 %v758, %v754
    %v1251 = vpack.c.b16 %v759, %v755
    %v1252 = vpack.c.b16 %v760, %v756
    %v1253 = vpack.c.b16 %v765, %v761
    %v1254 = vpack.c.b16 %v766, %v762
    %v1255 = vpack.c.b16 %v767, %v763
    %v1256 = vpack.c.b16 %v768, %v764
    %v1257 = vpack.c.b16 %v773, %v769
    %v1258 = vpack.c.b16 %v774, %v770
    %v1259 = vpack.c.b16 %v775, %v771
    %v1260 = vpack.c.b16 %v776, %v772
    %v1261 = vpack.c.b16 %v781, %v777
    %v1262 = vpack.c.b16 %v782, %v778
    %v1263 = vpack.c.b16 %v783, %v779
    %v1264 = vpack.c.b16 %v784, %v780
    %v1265 = vpack.c.b16 %v789, %v785
    %v1266 = vpack.c.b16 %v790, %v786
    %v1267 = vpack.c.b16 %v791, %v787
    %v1268 = vpack.c.b16 %v792, %v788
    %v1269 = vpack.c.b16 %v797, %v793
    %v1270 = vpack.c.b16 %v798, %v794
    %v1271 = vpack.c.b16 %v799, %v795
    %v1272 = vpack.c.b16 %v800, %v796
    %v1273 = vpack.c.b16 %v805, %v801
    %v1274 = vpack.c.b16 %v806, %v802
    %v1275 = vpack.c.b16 %v807, %v803
    %v1276 = vpack.c.b16 %v808, %v804
    %v1277 = vpack.c.b16 %v813, %v809
    %v1278 = vpack.c.b16 %v814, %v810
    %v1279 = vpack.c.b16 %v815, %v811
    %v1280 = vpack.c.b16 %v816, %v812
    %v1281 = vpack.c.b16 %v821, %v817
    %v1282 = vpack.c.b16 %v822, %v818
    %v1283 = vpack.c.b16 %v823, %v819
    %v1284 = vpack.c.b16 %v824, %v820
    %v1285 = vpack.c.b16 %v829, %v825
    %v1286 = vpack.c.b16 %v830, %v826
    %v1287 = vpack.c.b16 %v831, %v827
    %v1288 = vpack.c.b16 %v832, %v828
    %v1289 = vpack.c.b16 %v837, %v833
    %v1290 = vpack.c.b16 %v838, %v834
    %v1291 = vpack.c.b16 %v839, %v835
    %v1292 = vpack.c.b16 %v840, %v836
    %v1293 = vpack.c.b16 %v845, %v841
    %v1294 = vpack.c.b16 %v846, %v842
    %v1295 = vpack.c.b16 %v847, %v843
    %v1296 = vpack.c.b16 %v848, %v844
    %v1297 = vpack.c.b16 %v853, %v849
    %v1298 = vpack.c.b16 %v854, %v850
    %v1299 = vpack.c.b16 %v855, %v851
    %v1300 = vpack.c.b16 %v856, %v852
    %v1301 = vpack.c.b16 %v861, %v857
    %v1302 = vpack.c.b16 %v862, %v858
    %v1303 = vpack.c.b16 %v863, %v859
    %v1304 = vpack.c.b16 %v864, %v860
    %v1305 = vpack.c.b16 %v869, %v865
    %v1306 = vpack.c.b16 %v870, %v866
    %v1307 = vpack.c.b16 %v871, %v867
    %v1308 = vpack.c.b16 %v872, %v868
    %v1309 = vpack.c.b16 %v877, %v873
    %v1310 = vpack.c.b16 %v878, %v874
    %v1311 = vpack.c.b16 %v879, %v875
    %v1312 = vpack.c.b16 %v880, %v876
    %v1313 = vpack.c.b16 %v885, %v881
    %v1314 = vpack.c.b16 %v886, %v882
    %v1315 = vpack.c.b16 %v887, %v883
    %v1316 = vpack.c.b16 %v888, %v884
    %v1317 = vpack.c.b16 %v893, %v889
    %v1318 = vpack.c.b16 %v894, %v890
    %v1319 = vpack.c.b16 %v895, %v891
    %v1320 = vpack.c.b16 %v896, %v892
    %v1321 = vpack.c.b16 %v901, %v897
    %v1322 = vpack.c.b16 %v902, %v898
    %v1323 = vpack.c.b16 %v903, %v899
    %v1324 = vpack.c.b16 %v904, %v900
    %v1325 = vpack.c.b16 %v909, %v905
    %v1326 = vpack.c.b16 %v910, %v906
    %v1327 = vpack.c.b16 %v911, %v907
    %v1328 = vpack.c.b16 %v912, %v908
    %v1329 = vpack.c.b16 %v917, %v913
    %v1330 = vpack.c.b16 %v918, %v914
    %v1331 = vpack.c.b16 %v919, %v915
    %v1332 = vpack.c.b16 %v920, %v916
    %v1333 = vpack.c.b16 %v925, %v921
    %v1334 = vpack.c.b16 %v926, %v922
    %v1335 = vpack.c.b16 %v927, %v923
    %v1336 = vpack.c.b16 %v928, %v924
    %v1337 = vpack.c.b16 %v933, %v929
    %v1338 = vpack.c.b16 %v934, %v930
    %v1339 = vpack.c.b16 %v935, %v931
    %v1340 = vpack.c.b16 %v936, %v932
    %v1341 = vpack.c.b16 %v941, %v937
    %v1342 = vpack.c.b16 %v942, %v938
    %v1343 = vpack.c.b16 %v943, %v939
    %v1344 = vpack.c.b16 %v944, %v940
    %v1345 = vpack.c.b16 %v949, %v945
    %v1346 = vpack.c.b16 %v950, %v946
    %v1347 = vpack.c.b16 %v951, %v947
    %v1348 = vpack.c.b16 %v952, %v948
    %v1349 = vpack.c.b16 %v957, %v953
    %v1350 = vpack.c.b16 %v958, %v954
    %v1351 = vpack.c.b16 %v959, %v955
    %v1352 = vpack.c.b16 %v960, %v956
    %v1353 = vpack.c.b16 %v965, %v961
    %v1354 = vpack.c.b16 %v966, %v962
    %v1355 = vpack.c.b16 %v967, %v963
    %v1356 = vpack.c.b16 %v968, %v964
    %v1357 = vpack.c.b16 %v973, %v969
    %v1358 = vpack.c.b16 %v974, %v970
    %v1359 = vpack.c.b16 %v975, %v971
    %v1360 = vpack.c.b16 %v976, %v972
    %v1361 = vpack.c.b16 %v981, %v977
    %v1362 = vpack.c.b16 %v982, %v978
    %v1363 = vpack.c.b16 %v983, %v979
    %v1364 = vpack.c.b16 %v984, %v980
    %v1365 = vpack.c.b16 %v989, %v985
    %v1366 = vpack.c.b16 %v990, %v986
    %v1367 = vpack.c.b16 %v991, %v987
    %v1368 = vpack.c.b16 %v992, %v988
    %v1369 = vpack.c.b16 %v997, %v993
    %v1370 = vpack.c.b16 %v998, %v994
    %v1371 = vpack.c.b16 %v999, %v995
    %v1372 = vpack.c.b16 %v1000, %v996
    %v1373 = vpack.c.b16 %v1005, %v1001
    %v1374 = vpack.c.b16 %v1006, %v1002
    %v1375 = vpack.c.b16 %v1007, %v1003
    %v1376 = vpack.c.b16 %v1008, %v1004
    %v1377 = vpack.c.b16 %v1013, %v1009
    %v1378 = vpack.c.b16 %v1014, %v1010
    %v1379 = vpack.c.b16 %v1015, %v1011
    %v1380 = vpack.c.b16 %v1016, %v1012
    %v1381 = vpack.c.b16 %v1021, %v1017
    %v1382 = vpack.c.b16 %v1022, %v1018
    %v1383 = vpack.c.b16 %v1023, %v1019
    %v1384 = vpack.c.b16 %v1024, %v1020
    %v1385 = vpack.c.b16 %v1029, %v1025
    %v1386 = vpack.c.b16 %v1030, %v1026
    %v1387 = vpack.c.b16 %v1031, %v1027
    %v1388 = vpack.c.b16 %v1032, %v1028
    %v1389 = vpack.c.b16 %v1037, %v1033
    %v1390 = vpack.c.b16 %v1038, %v1034
    %v1391 = vpack.c.b16 %v1039, %v1035
    %v1392 = vpack.c.b16 %v1040, %v1036
    %v1393 = vpack.c.b16 %v1045, %v1041
    %v1394 = vpack.c.b16 %v1046, %v1042
    %v1395 = vpack.c.b16 %v1047, %v1043
    %v1396 = vpack.c.b16 %v1048, %v1044
    %v1397 = vpack.c.b16 %v1053, %v1049
    %v1398 = vpack.c.b16 %v1054, %v1050
    %v1399 = vpack.c.b16 %v1055, %v1051
    %v1400 = vpack.c.b16 %v1056, %v1052
    %v1401 = vpack.c.b16 %v1061, %v1057
    %v1402 = vpack.c.b16 %v1062, %v1058
    %v1403 = vpack.c.b16 %v1063, %v1059
    %v1404 = vpack.c.b16 %v1064, %v1060
    %v1405 = vpack.c.b16 %v1069, %v1065
    %v1406 = vpack.c.b16 %v1070, %v1066
    %v1407 = vpack.c.b16 %v1071, %v1067
    %v1408 = vpack.c.b16 %v1072, %v1068
    %v1409 = vpack.c.b16 %v1077, %v1073
    %v1410 = vpack.c.b16 %v1078, %v1074
    %v1411 = vpack.c.b16 %v1079, %v1075
    %v1412 = vpack.c.b16 %v1080, %v1076
    %v1413 = vpack.c.b16 %v1085, %v1081
    %v1414 = vpack.c.b16 %v1086, %v1082
    %v1415 = vpack.c.b16 %v1087, %v1083
    %v1416 = vpack.c.b16 %v1088, %v1084
    %v1417 = vpack.c.b16 %v1093, %v1089
    %v1418 = vpack.c.b16 %v1094, %v1090
    %v1419 = vpack.c.b16 %v1095, %v1091
    %v1420 = vpack.c.b16 %v1096, %v1092
    %v1421 = vpack.c.b16 %v1101, %v1097
    %v1422 = vpack.c.b16 %v1102, %v1098
    %v1423 = vpack.c.b16 %v1103, %v1099
    %v1424 = vpack.c.b16 %v1104, %v1100
    %v1425 = vpack.c.b16 %v1109, %v1105
    %v1426 = vpack.c.b16 %v1110, %v1106
    %v1427 = vpack.c.b16 %v1111, %v1107
    %v1428 = vpack.c.b16 %v1112, %v1108
    %v1429 = vpack.c.b16 %v1117, %v1113
    %v1430 = vpack.c.b16 %v1118, %v1114
    %v1431 = vpack.c.b16 %v1119, %v1115
    %v1432 = vpack.c.b16 %v1120, %v1116
    %v1433 = vpack.c.b16 %v1125, %v1121
    %v1434 = vpack.c.b16 %v1126, %v1122
    %v1435 = vpack.c.b16 %v1127, %v1123
    %v1436 = vpack.c.b16 %v1128, %v1124
    %v1437 = vpack.c.b16 %v1133, %v1129
    %v1438 = vpack.c.b16 %v1134, %v1130
    %v1439 = vpack.c.b16 %v1135, %v1131
    %v1440 = vpack.c.b16 %v1136, %v1132
    %v1441 = vpack.c.b16 %v1141, %v1137
    %v1442 = vpack.c.b16 %v1142, %v1138
    %v1443 = vpack.c.b16 %v1143, %v1139
    %v1444 = vpack.c.b16 %v1144, %v1140
    %v1445 = vpack.c.b16 %v1149, %v1145
    %v1446 = vpack.c.b16 %v1150, %v1146
    %v1447 = vpack.c.b16 %v1151, %v1147
    %v1448 = vpack.c.b16 %v1152, %v1148
    %v1449 = vpack.c.b16 %v1157, %v1153
    %v1450 = vpack.c.b16 %v1158, %v1154
    %v1451 = vpack.c.b16 %v1159, %v1155
    %v1452 = vpack.c.b16 %v1160, %v1156
    %v1453 = vpack.c.b16 %v1165, %v1161
    %v1454 = vpack.c.b16 %v1166, %v1162
    %v1455 = vpack.c.b16 %v1167, %v1163
    %v1456 = vpack.c.b16 %v1168, %v1164
    %v1457 = vpack.c.b16 %v1173, %v1169
    %v1458 = vpack.c.b16 %v1174, %v1170
    %v1459 = vpack.c.b16 %v1175, %v1171
    %v1460 = vpack.c.b16 %v1176, %v1172
    %v1461 = vpack.c.b16 %v1181, %v1177
    %v1462 = vpack.c.b16 %v1182, %v1178
    %v1463 = vpack.c.b16 %v1183, %v1179
    %v1464 = vpack.c.b16 %v1184, %v1180
    %v1465 = vpack.c.b16 %v1189, %v1185
    %v1466 = vpack.c.b16 %v1190, %v1186
    %v1467 = vpack.c.b16 %v1191, %v1187
    %v1468 = vpack.c.b16 %v1192, %v1188
    %v1469 = vpack.c.b16 %v1197, %v1193
    %v1470 = vpack.c.b16 %v1198, %v1194
    %v1471 = vpack.c.b16 %v1199, %v1195
    %v1472 = vpack.c.b16 %v1200, %v1196
    %v1473 = vpack.c.b16 %v1205, %v1201
    %v1474 = vpack.c.b16 %v1206, %v1202
    %v1475 = vpack.c.b16 %v1207, %v1203
    %v1476 = vpack.c.b16 %v1208, %v1204
    %v1477 = vpack.c.b16 %v1213, %v1209
    %v1478 = vpack.c.b16 %v1214, %v1210
    %v1479 = vpack.c.b16 %v1215, %v1211
    %v1480 = vpack.c.b16 %v1216, %v1212
    %v1481 = vpack.c.b16 %v1221, %v1217
    %v1482 = vpack.c.b16 %v1222, %v1218
    %v1483 = vpack.c.b16 %v1223, %v1219
    %v1484 = vpack.c.b16 %v1224, %v1220
    %v1485 = vpack.c.b16 %v1229, %v1225
    %v1486 = vpack.c.b16 %v1230, %v1226
    %v1487 = vpack.c.b16 %v1231, %v1227
    %v1488 = vpack.c.b16 %v1232, %v1228
    %1745 = vmatpush.bf16.msra.mxu0 %v1261
    %1746 = vmatpush.bf16.msra.mxu0 %v1257
    %1747 = vmatpush.bf16.msra.mxu0 %v1253
    %1748 = vmatpush.bf16.msra.mxu0 %v1249
    %1749 = vmatpush.bf16.msra.mxu0 %v1245
    %1750 = vmatpush.bf16.msra.mxu0 %v1241
    %1751 = vmatpush.bf16.msra.mxu0 %v1237
    %1752 = vmatpush.bf16.msra.mxu0 %v1233
    %1753 = vmatmul.bf16.gmra.mxu0 %v167
    %v1754 = vpop.f32.mrf.mxu0
    %v1755 = vadd.f32 %v457, %v1754
    %v1756 = vpop.f32.mrf.mxu0
    %v1757 = vadd.f32 %v457, %v1756
    %1758 = vmatmul.bf16.gmra.mxu0 %v175
    %v1759 = vpop.f32.mrf.mxu0
    %v1760 = vadd.f32 %v457, %v1759
    %v1761 = vpop.f32.mrf.mxu0
    %v1762 = vadd.f32 %v457, %v1761
    %1763 = vmatmul.bf16.gmra.mxu0 %v183
    %v1764 = vpop.f32.mrf.mxu0
    %v1765 = vadd.f32 %v457, %v1764
    %v1766 = vpop.f32.mrf.mxu0
    %v1767 = vadd.f32 %v457, %v1766
    %1768 = vmatmul.bf16.gmra.mxu0 %v191
    %v1769 = vpop.f32.mrf.mxu0
    %v1770 = vadd.f32 %v457, %v1769
    %v1771 = vpop.f32.mrf.mxu0
    %v1772 = vadd.f32 %v457, %v1771
    %1773 = vdwg.mxu0
    %1774 = vmatpush.bf16.msra.mxu0 %v1293
    %1775 = vmatpush.bf16.msra.mxu0 %v1289
    %1776 = vmatpush.bf16.msra.mxu0 %v1285
    %1777 = vmatpush.bf16.msra.mxu0 %v1281
    %1778 = vmatpush.bf16.msra.mxu0 %v1277
    %1779 = vmatpush.bf16.msra.mxu0 %v1273
    %1780 = vmatpush.bf16.msra.mxu0 %v1269
    %1781 = vmatpush.bf16.msra.mxu0 %v1265
    %1782 = vmatmul.bf16.gmra.mxu0 %v168
    %v1783 = vpop.f32.mrf.mxu0
    %v1784 = vadd.f32 %v1755, %v1783
    %v1785 = vpop.f32.mrf.mxu0
    %v1786 = vadd.f32 %v1757, %v1785
    %1787 = vmatmul.bf16.gmra.mxu0 %v176
    %v1788 = vpop.f32.mrf.mxu0
    %v1789 = vadd.f32 %v1760, %v1788
    %v1790 = vpop.f32.mrf.mxu0
    %v1791 = vadd.f32 %v1762, %v1790
    %1792 = vmatmul.bf16.gmra.mxu0 %v184
    %v1793 = vpop.f32.mrf.mxu0
    %v1794 = vadd.f32 %v1765, %v1793
    %v1795 = vpop.f32.mrf.mxu0
    %v1796 = vadd.f32 %v1767, %v1795
    %1797 = vmatmul.bf16.gmra.mxu0 %v192
    %v1798 = vpop.f32.mrf.mxu0
    %v1799 = vadd.f32 %v1770, %v1798
    %v1800 = vpop.f32.mrf.mxu0
    %v1801 = vadd.f32 %v1772, %v1800
    %1802 = vdwg.mxu0
    %1803 = vmatpush.bf16.msra.mxu0 %v1325
    %1804 = vmatpush.bf16.msra.mxu0 %v1321
    %1805 = vmatpush.bf16.msra.mxu0 %v1317
    %1806 = vmatpush.bf16.msra.mxu0 %v1313
    %1807 = vmatpush.bf16.msra.mxu0 %v1309
    %1808 = vmatpush.bf16.msra.mxu0 %v1305
    %1809 = vmatpush.bf16.msra.mxu0 %v1301
    %1810 = vmatpush.bf16.msra.mxu0 %v1297
    %1811 = vmatmul.bf16.gmra.mxu0 %v169
    %v1812 = vpop.f32.mrf.mxu0
    %v1813 = vadd.f32 %v1784, %v1812
    %v1814 = vpop.f32.mrf.mxu0
    %v1815 = vadd.f32 %v1786, %v1814
    %1816 = vmatmul.bf16.gmra.mxu0 %v177
    %v1817 = vpop.f32.mrf.mxu0
    %v1818 = vadd.f32 %v1789, %v1817
    %v1819 = vpop.f32.mrf.mxu0
    %v1820 = vadd.f32 %v1791, %v1819
    %1821 = vmatmul.bf16.gmra.mxu0 %v185
    %v1822 = vpop.f32.mrf.mxu0
    %v1823 = vadd.f32 %v1794, %v1822
    %v1824 = vpop.f32.mrf.mxu0
    %v1825 = vadd.f32 %v1796, %v1824
    %1826 = vmatmul.bf16.gmra.mxu0 %v193
    %v1827 = vpop.f32.mrf.mxu0
    %v1828 = vadd.f32 %v1799, %v1827
    %v1829 = vpop.f32.mrf.mxu0
    %v1830 = vadd.f32 %v1801, %v1829
    %1831 = vdwg.mxu0
    %1832 = vmatpush.bf16.msra.mxu0 %v1357
    %1833 = vmatpush.bf16.msra.mxu0 %v1353
    %1834 = vmatpush.bf16.msra.mxu0 %v1349
    %1835 = vmatpush.bf16.msra.mxu0 %v1345
    %1836 = vmatpush.bf16.msra.mxu0 %v1341
    %1837 = vmatpush.bf16.msra.mxu0 %v1337
    %1838 = vmatpush.bf16.msra.mxu0 %v1333
    %1839 = vmatpush.bf16.msra.mxu0 %v1329
    %1840 = vmatmul.bf16.gmra.mxu0 %v170
    %v1841 = vpop.f32.mrf.mxu0
    %v1842 = vadd.f32 %v1813, %v1841
    %v1843 = vpop.f32.mrf.mxu0
    %v1844 = vadd.f32 %v1815, %v1843
    %1845 = vmatmul.bf16.gmra.mxu0 %v178
    %v1846 = vpop.f32.mrf.mxu0
    %v1847 = vadd.f32 %v1818, %v1846
    %v1848 = vpop.f32.mrf.mxu0
    %v1849 = vadd.f32 %v1820, %v1848
    %1850 = vmatmul.bf16.gmra.mxu0 %v186
    %v1851 = vpop.f32.mrf.mxu0
    %v1852 = vadd.f32 %v1823, %v1851
    %v1853 = vpop.f32.mrf.mxu0
    %v1854 = vadd.f32 %v1825, %v1853
    %1855 = vmatmul.bf16.gmra.mxu0 %v194
    %v1856 = vpop.f32.mrf.mxu0
    %v1857 = vadd.f32 %v1828, %v1856
    %v1858 = vpop.f32.mrf.mxu0
    %v1859 = vadd.f32 %v1830, %v1858
    %1860 = vdwg.mxu0
    %1861 = vmatpush.bf16.msra.mxu0 %v1389
    %1862 = vmatpush.bf16.msra.mxu0 %v1385
    %1863 = vmatpush.bf16.msra.mxu0 %v1381
    %1864 = vmatpush.bf16.msra.mxu0 %v1377
    %1865 = vmatpush.bf16.msra.mxu0 %v1373
    %1866 = vmatpush.bf16.msra.mxu0 %v1369
    %1867 = vmatpush.bf16.msra.mxu0 %v1365
    %1868 = vmatpush.bf16.msra.mxu0 %v1361
    %1869 = vmatmul.bf16.gmra.mxu0 %v171
    %v1870 = vpop.f32.mrf.mxu0
    %v1871 = vadd.f32 %v1842, %v1870
    %v1872 = vpop.f32.mrf.mxu0
    %v1873 = vadd.f32 %v1844, %v1872
    %1874 = vmatmul.bf16.gmra.mxu0 %v179
    %v1875 = vpop.f32.mrf.mxu0
    %v1876 = vadd.f32 %v1847, %v1875
    %v1877 = vpop.f32.mrf.mxu0
    %v1878 = vadd.f32 %v1849, %v1877
    %1879 = vmatmul.bf16.gmra.mxu0 %v187
    %v1880 = vpop.f32.mrf.mxu0
    %v1881 = vadd.f32 %v1852, %v1880
    %v1882 = vpop.f32.mrf.mxu0
    %v1883 = vadd.f32 %v1854, %v1882
    %1884 = vmatmul.bf16.gmra.mxu0 %v195
    %v1885 = vpop.f32.mrf.mxu0
    %v1886 = vadd.f32 %v1857, %v1885
    %v1887 = vpop.f32.mrf.mxu0
    %v1888 = vadd.f32 %v1859, %v1887
    %1889 = vdwg.mxu0
    %1890 = vmatpush.bf16.msra.mxu0 %v1421
    %1891 = vmatpush.bf16.msra.mxu0 %v1417
    %1892 = vmatpush.bf16.msra.mxu0 %v1413
    %1893 = vmatpush.bf16.msra.mxu0 %v1409
    %1894 = vmatpush.bf16.msra.mxu0 %v1405
    %1895 = vmatpush.bf16.msra.mxu0 %v1401
    %1896 = vmatpush.bf16.msra.mxu0 %v1397
    %1897 = vmatpush.bf16.msra.mxu0 %v1393
    %1898 = vmatmul.bf16.gmra.mxu0 %v172
    %v1899 = vpop.f32.mrf.mxu0
    %v1900 = vadd.f32 %v1871, %v1899
    %v1901 = vpop.f32.mrf.mxu0
    %v1902 = vadd.f32 %v1873, %v1901
    %1903 = vmatmul.bf16.gmra.mxu0 %v180
    %v1904 = vpop.f32.mrf.mxu0
    %v1905 = vadd.f32 %v1876, %v1904
    %v1906 = vpop.f32.mrf.mxu0
    %v1907 = vadd.f32 %v1878, %v1906
    %1908 = vmatmul.bf16.gmra.mxu0 %v188
    %v1909 = vpop.f32.mrf.mxu0
    %v1910 = vadd.f32 %v1881, %v1909
    %v1911 = vpop.f32.mrf.mxu0
    %v1912 = vadd.f32 %v1883, %v1911
    %1913 = vmatmul.bf16.gmra.mxu0 %v196
    %v1914 = vpop.f32.mrf.mxu0
    %v1915 = vadd.f32 %v1886, %v1914
    %v1916 = vpop.f32.mrf.mxu0
    %v1917 = vadd.f32 %v1888, %v1916
    %1918 = vdwg.mxu0
    %1919 = vmatpush.bf16.msra.mxu0 %v1453
    %1920 = vmatpush.bf16.msra.mxu0 %v1449
    %1921 = vmatpush.bf16.msra.mxu0 %v1445
    %1922 = vmatpush.bf16.msra.mxu0 %v1441
    %1923 = vmatpush.bf16.msra.mxu0 %v1437
    %1924 = vmatpush.bf16.msra.mxu0 %v1433
    %1925 = vmatpush.bf16.msra.mxu0 %v1429
    %1926 = vmatpush.bf16.msra.mxu0 %v1425
    %1927 = vmatmul.bf16.gmra.mxu0 %v173
    %v1928 = vpop.f32.mrf.mxu0
    %v1929 = vadd.f32 %v1900, %v1928
    %v1930 = vpop.f32.mrf.mxu0
    %v1931 = vadd.f32 %v1902, %v1930
    %1932 = vmatmul.bf16.gmra.mxu0 %v181
    %v1933 = vpop.f32.mrf.mxu0
    %v1934 = vadd.f32 %v1905, %v1933
    %v1935 = vpop.f32.mrf.mxu0
    %v1936 = vadd.f32 %v1907, %v1935
    %1937 = vmatmul.bf16.gmra.mxu0 %v189
    %v1938 = vpop.f32.mrf.mxu0
    %v1939 = vadd.f32 %v1910, %v1938
    %v1940 = vpop.f32.mrf.mxu0
    %v1941 = vadd.f32 %v1912, %v1940
    %1942 = vmatmul.bf16.gmra.mxu0 %v197
    %v1943 = vpop.f32.mrf.mxu0
    %v1944 = vadd.f32 %v1915, %v1943
    %v1945 = vpop.f32.mrf.mxu0
    %v1946 = vadd.f32 %v1917, %v1945
    %1947 = vdwg.mxu0
    %1948 = vmatpush.bf16.msra.mxu0 %v1485
    %1949 = vmatpush.bf16.msra.mxu0 %v1481
    %1950 = vmatpush.bf16.msra.mxu0 %v1477
    %1951 = vmatpush.bf16.msra.mxu0 %v1473
    %1952 = vmatpush.bf16.msra.mxu0 %v1469
    %1953 = vmatpush.bf16.msra.mxu0 %v1465
    %1954 = vmatpush.bf16.msra.mxu0 %v1461
    %1955 = vmatpush.bf16.msra.mxu0 %v1457
    %1956 = vmatmul.bf16.gmra.mxu0 %v174
    %v1957 = vpop.f32.mrf.mxu0
    %v1958 = vadd.f32 %v1929, %v1957
    %v1959 = vpop.f32.mrf.mxu0
    %v1960 = vadd.f32 %v1931, %v1959
    %1961 = vmatmul.bf16.gmra.mxu0 %v182
    %v1962 = vpop.f32.mrf.mxu0
    %v1963 = vadd.f32 %v1934, %v1962
    %v1964 = vpop.f32.mrf.mxu0
    %v1965 = vadd.f32 %v1936, %v1964
    %1966 = vmatmul.bf16.gmra.mxu0 %v190
    %v1967 = vpop.f32.mrf.mxu0
    %v1968 = vadd.f32 %v1939, %v1967
    %v1969 = vpop.f32.mrf.mxu0
    %v1970 = vadd.f32 %v1941, %v1969
    %1971 = vmatmul.bf16.gmra.mxu0 %v198
    %v1972 = vpop.f32.mrf.mxu0
    %v1973 = vadd.f32 %v1944, %v1972
    %v1974 = vpop.f32.mrf.mxu0
    %v1975 = vadd.f32 %v1946, %v1974
    %1976 = vdwg.mxu0
    %1977 = vmatpush.bf16.msra.mxu0 %v1262
    %1978 = vmatpush.bf16.msra.mxu0 %v1258
    %1979 = vmatpush.bf16.msra.mxu0 %v1254
    %1980 = vmatpush.bf16.msra.mxu0 %v1250
    %1981 = vmatpush.bf16.msra.mxu0 %v1246
    %1982 = vmatpush.bf16.msra.mxu0 %v1242
    %1983 = vmatpush.bf16.msra.mxu0 %v1238
    %1984 = vmatpush.bf16.msra.mxu0 %v1234
    %1985 = vmatmul.bf16.gmra.mxu0 %v167
    %v1986 = vpop.f32.mrf.mxu0
    %v1987 = vadd.f32 %v458, %v1986
    %v1988 = vpop.f32.mrf.mxu0
    %v1989 = vadd.f32 %v458, %v1988
    %1990 = vmatmul.bf16.gmra.mxu0 %v175
    %v1991 = vpop.f32.mrf.mxu0
    %v1992 = vadd.f32 %v458, %v1991
    %v1993 = vpop.f32.mrf.mxu0
    %v1994 = vadd.f32 %v458, %v1993
    %1995 = vmatmul.bf16.gmra.mxu0 %v183
    %v1996 = vpop.f32.mrf.mxu0
    %v1997 = vadd.f32 %v458, %v1996
    %v1998 = vpop.f32.mrf.mxu0
    %v1999 = vadd.f32 %v458, %v1998
    %2000 = vmatmul.bf16.gmra.mxu0 %v191
    %v2001 = vpop.f32.mrf.mxu0
    %v2002 = vadd.f32 %v458, %v2001
    %v2003 = vpop.f32.mrf.mxu0
    %v2004 = vadd.f32 %v458, %v2003
    %2005 = vdwg.mxu0
    %2006 = vmatpush.bf16.msra.mxu0 %v1294
    %2007 = vmatpush.bf16.msra.mxu0 %v1290
    %2008 = vmatpush.bf16.msra.mxu0 %v1286
    %2009 = vmatpush.bf16.msra.mxu0 %v1282
    %2010 = vmatpush.bf16.msra.mxu0 %v1278
    %2011 = vmatpush.bf16.msra.mxu0 %v1274
    %2012 = vmatpush.bf16.msra.mxu0 %v1270
    %2013 = vmatpush.bf16.msra.mxu0 %v1266
    %2014 = vmatmul.bf16.gmra.mxu0 %v168
    %v2015 = vpop.f32.mrf.mxu0
    %v2016 = vadd.f32 %v1987, %v2015
    %v2017 = vpop.f32.mrf.mxu0
    %v2018 = vadd.f32 %v1989, %v2017
    %2019 = vmatmul.bf16.gmra.mxu0 %v176
    %v2020 = vpop.f32.mrf.mxu0
    %v2021 = vadd.f32 %v1992, %v2020
    %v2022 = vpop.f32.mrf.mxu0
    %v2023 = vadd.f32 %v1994, %v2022
    %2024 = vmatmul.bf16.gmra.mxu0 %v184
    %v2025 = vpop.f32.mrf.mxu0
    %v2026 = vadd.f32 %v1997, %v2025
    %v2027 = vpop.f32.mrf.mxu0
    %v2028 = vadd.f32 %v1999, %v2027
    %2029 = vmatmul.bf16.gmra.mxu0 %v192
    %v2030 = vpop.f32.mrf.mxu0
    %v2031 = vadd.f32 %v2002, %v2030
    %v2032 = vpop.f32.mrf.mxu0
    %v2033 = vadd.f32 %v2004, %v2032
    %2034 = vdwg.mxu0
    %2035 = vmatpush.bf16.msra.mxu0 %v1326
    %2036 = vmatpush.bf16.msra.mxu0 %v1322
    %2037 = vmatpush.bf16.msra.mxu0 %v1318
    %2038 = vmatpush.bf16.msra.mxu0 %v1314
    %2039 = vmatpush.bf16.msra.mxu0 %v1310
    %2040 = vmatpush.bf16.msra.mxu0 %v1306
    %2041 = vmatpush.bf16.msra.mxu0 %v1302
    %2042 = vmatpush.bf16.msra.mxu0 %v1298
    %2043 = vmatmul.bf16.gmra.mxu0 %v169
    %v2044 = vpop.f32.mrf.mxu0
    %v2045 = vadd.f32 %v2016, %v2044
    %v2046 = vpop.f32.mrf.mxu0
    %v2047 = vadd.f32 %v2018, %v2046
    %2048 = vmatmul.bf16.gmra.mxu0 %v177
    %v2049 = vpop.f32.mrf.mxu0
    %v2050 = vadd.f32 %v2021, %v2049
    %v2051 = vpop.f32.mrf.mxu0
    %v2052 = vadd.f32 %v2023, %v2051
    %2053 = vmatmul.bf16.gmra.mxu0 %v185
    %v2054 = vpop.f32.mrf.mxu0
    %v2055 = vadd.f32 %v2026, %v2054
    %v2056 = vpop.f32.mrf.mxu0
    %v2057 = vadd.f32 %v2028, %v2056
    %2058 = vmatmul.bf16.gmra.mxu0 %v193
    %v2059 = vpop.f32.mrf.mxu0
    %v2060 = vadd.f32 %v2031, %v2059
    %v2061 = vpop.f32.mrf.mxu0
    %v2062 = vadd.f32 %v2033, %v2061
    %2063 = vdwg.mxu0
    %2064 = vmatpush.bf16.msra.mxu0 %v1358
    %2065 = vmatpush.bf16.msra.mxu0 %v1354
    %2066 = vmatpush.bf16.msra.mxu0 %v1350
    %2067 = vmatpush.bf16.msra.mxu0 %v1346
    %2068 = vmatpush.bf16.msra.mxu0 %v1342
    %2069 = vmatpush.bf16.msra.mxu0 %v1338
    %2070 = vmatpush.bf16.msra.mxu0 %v1334
    %2071 = vmatpush.bf16.msra.mxu0 %v1330
    %2072 = vmatmul.bf16.gmra.mxu0 %v170
    %v2073 = vpop.f32.mrf.mxu0
    %v2074 = vadd.f32 %v2045, %v2073
    %v2075 = vpop.f32.mrf.mxu0
    %v2076 = vadd.f32 %v2047, %v2075
    %2077 = vmatmul.bf16.gmra.mxu0 %v178
    %v2078 = vpop.f32.mrf.mxu0
    %v2079 = vadd.f32 %v2050, %v2078
    %v2080 = vpop.f32.mrf.mxu0
    %v2081 = vadd.f32 %v2052, %v2080
    %2082 = vmatmul.bf16.gmra.mxu0 %v186
    %v2083 = vpop.f32.mrf.mxu0
    %v2084 = vadd.f32 %v2055, %v2083
    %v2085 = vpop.f32.mrf.mxu0
    %v2086 = vadd.f32 %v2057, %v2085
    %2087 = vmatmul.bf16.gmra.mxu0 %v194
    %v2088 = vpop.f32.mrf.mxu0
    %v2089 = vadd.f32 %v2060, %v2088
    %v2090 = vpop.f32.mrf.mxu0
    %v2091 = vadd.f32 %v2062, %v2090
    %2092 = vdwg.mxu0
    %2093 = vmatpush.bf16.msra.mxu0 %v1390
    %2094 = vmatpush.bf16.msra.mxu0 %v1386
    %2095 = vmatpush.bf16.msra.mxu0 %v1382
    %2096 = vmatpush.bf16.msra.mxu0 %v1378
    %2097 = vmatpush.bf16.msra.mxu0 %v1374
    %2098 = vmatpush.bf16.msra.mxu0 %v1370
    %2099 = vmatpush.bf16.msra.mxu0 %v1366
    %2100 = vmatpush.bf16.msra.mxu0 %v1362
    %2101 = vmatmul.bf16.gmra.mxu0 %v171
    %v2102 = vpop.f32.mrf.mxu0
    %v2103 = vadd.f32 %v2074, %v2102
    %v2104 = vpop.f32.mrf.mxu0
    %v2105 = vadd.f32 %v2076, %v2104
    %2106 = vmatmul.bf16.gmra.mxu0 %v179
    %v2107 = vpop.f32.mrf.mxu0
    %v2108 = vadd.f32 %v2079, %v2107
    %v2109 = vpop.f32.mrf.mxu0
    %v2110 = vadd.f32 %v2081, %v2109
    %2111 = vmatmul.bf16.gmra.mxu0 %v187
    %v2112 = vpop.f32.mrf.mxu0
    %v2113 = vadd.f32 %v2084, %v2112
    %v2114 = vpop.f32.mrf.mxu0
    %v2115 = vadd.f32 %v2086, %v2114
    %2116 = vmatmul.bf16.gmra.mxu0 %v195
    %v2117 = vpop.f32.mrf.mxu0
    %v2118 = vadd.f32 %v2089, %v2117
    %v2119 = vpop.f32.mrf.mxu0
    %v2120 = vadd.f32 %v2091, %v2119
    %2121 = vdwg.mxu0
    %2122 = vmatpush.bf16.msra.mxu0 %v1422
    %2123 = vmatpush.bf16.msra.mxu0 %v1418
    %2124 = vmatpush.bf16.msra.mxu0 %v1414
    %2125 = vmatpush.bf16.msra.mxu0 %v1410
    %2126 = vmatpush.bf16.msra.mxu0 %v1406
    %2127 = vmatpush.bf16.msra.mxu0 %v1402
    %2128 = vmatpush.bf16.msra.mxu0 %v1398
    %2129 = vmatpush.bf16.msra.mxu0 %v1394
    %2130 = vmatmul.bf16.gmra.mxu0 %v172
    %v2131 = vpop.f32.mrf.mxu0
    %v2132 = vadd.f32 %v2103, %v2131
    %v2133 = vpop.f32.mrf.mxu0
    %v2134 = vadd.f32 %v2105, %v2133
    %2135 = vmatmul.bf16.gmra.mxu0 %v180
    %v2136 = vpop.f32.mrf.mxu0
    %v2137 = vadd.f32 %v2108, %v2136
    %v2138 = vpop.f32.mrf.mxu0
    %v2139 = vadd.f32 %v2110, %v2138
    %2140 = vmatmul.bf16.gmra.mxu0 %v188
    %v2141 = vpop.f32.mrf.mxu0
    %v2142 = vadd.f32 %v2113, %v2141
    %v2143 = vpop.f32.mrf.mxu0
    %v2144 = vadd.f32 %v2115, %v2143
    %2145 = vmatmul.bf16.gmra.mxu0 %v196
    %v2146 = vpop.f32.mrf.mxu0
    %v2147 = vadd.f32 %v2118, %v2146
    %v2148 = vpop.f32.mrf.mxu0
    %v2149 = vadd.f32 %v2120, %v2148
    %2150 = vdwg.mxu0
    %2151 = vmatpush.bf16.msra.mxu0 %v1454
    %2152 = vmatpush.bf16.msra.mxu0 %v1450
    %2153 = vmatpush.bf16.msra.mxu0 %v1446
    %2154 = vmatpush.bf16.msra.mxu0 %v1442
    %2155 = vmatpush.bf16.msra.mxu0 %v1438
    %2156 = vmatpush.bf16.msra.mxu0 %v1434
    %2157 = vmatpush.bf16.msra.mxu0 %v1430
    %2158 = vmatpush.bf16.msra.mxu0 %v1426
    %2159 = vmatmul.bf16.gmra.mxu0 %v173
    %v2160 = vpop.f32.mrf.mxu0
    %v2161 = vadd.f32 %v2132, %v2160
    %v2162 = vpop.f32.mrf.mxu0
    %v2163 = vadd.f32 %v2134, %v2162
    %2164 = vmatmul.bf16.gmra.mxu0 %v181
    %v2165 = vpop.f32.mrf.mxu0
    %v2166 = vadd.f32 %v2137, %v2165
    %v2167 = vpop.f32.mrf.mxu0
    %v2168 = vadd.f32 %v2139, %v2167
    %2169 = vmatmul.bf16.gmra.mxu0 %v189
    %v2170 = vpop.f32.mrf.mxu0
    %v2171 = vadd.f32 %v2142, %v2170
    %v2172 = vpop.f32.mrf.mxu0
    %v2173 = vadd.f32 %v2144, %v2172
    %2174 = vmatmul.bf16.gmra.mxu0 %v197
    %v2175 = vpop.f32.mrf.mxu0
    %v2176 = vadd.f32 %v2147, %v2175
    %v2177 = vpop.f32.mrf.mxu0
    %v2178 = vadd.f32 %v2149, %v2177
    %2179 = vdwg.mxu0
    %2180 = vmatpush.bf16.msra.mxu0 %v1486
    %2181 = vmatpush.bf16.msra.mxu0 %v1482
    %2182 = vmatpush.bf16.msra.mxu0 %v1478
    %2183 = vmatpush.bf16.msra.mxu0 %v1474
    %2184 = vmatpush.bf16.msra.mxu0 %v1470
    %2185 = vmatpush.bf16.msra.mxu0 %v1466
    %2186 = vmatpush.bf16.msra.mxu0 %v1462
    %2187 = vmatpush.bf16.msra.mxu0 %v1458
    %2188 = vmatmul.bf16.gmra.mxu0 %v174
    %v2189 = vpop.f32.mrf.mxu0
    %v2190 = vadd.f32 %v2161, %v2189
    %v2191 = vpop.f32.mrf.mxu0
    %v2192 = vadd.f32 %v2163, %v2191
    %2193 = vmatmul.bf16.gmra.mxu0 %v182
    %v2194 = vpop.f32.mrf.mxu0
    %v2195 = vadd.f32 %v2166, %v2194
    %v2196 = vpop.f32.mrf.mxu0
    %v2197 = vadd.f32 %v2168, %v2196
    %2198 = vmatmul.bf16.gmra.mxu0 %v190
    %v2199 = vpop.f32.mrf.mxu0
    %v2200 = vadd.f32 %v2171, %v2199
    %v2201 = vpop.f32.mrf.mxu0
    %v2202 = vadd.f32 %v2173, %v2201
    %2203 = vmatmul.bf16.gmra.mxu0 %v198
    %v2204 = vpop.f32.mrf.mxu0
    %v2205 = vadd.f32 %v2176, %v2204
    %v2206 = vpop.f32.mrf.mxu0
    %v2207 = vadd.f32 %v2178, %v2206
    %2208 = vdwg.mxu0
    %2209 = vmatpush.bf16.msra.mxu0 %v1263
    %2210 = vmatpush.bf16.msra.mxu0 %v1259
    %2211 = vmatpush.bf16.msra.mxu0 %v1255
    %2212 = vmatpush.bf16.msra.mxu0 %v1251
    %2213 = vmatpush.bf16.msra.mxu0 %v1247
    %2214 = vmatpush.bf16.msra.mxu0 %v1243
    %2215 = vmatpush.bf16.msra.mxu0 %v1239
    %2216 = vmatpush.bf16.msra.mxu0 %v1235
    %2217 = vmatmul.bf16.gmra.mxu0 %v167
    %v2218 = vpop.f32.mrf.mxu0
    %v2219 = vadd.f32 %v459, %v2218
    %v2220 = vpop.f32.mrf.mxu0
    %v2221 = vadd.f32 %v459, %v2220
    %2222 = vmatmul.bf16.gmra.mxu0 %v175
    %v2223 = vpop.f32.mrf.mxu0
    %v2224 = vadd.f32 %v459, %v2223
    %v2225 = vpop.f32.mrf.mxu0
    %v2226 = vadd.f32 %v459, %v2225
    %2227 = vmatmul.bf16.gmra.mxu0 %v183
    %v2228 = vpop.f32.mrf.mxu0
    %v2229 = vadd.f32 %v459, %v2228
    %v2230 = vpop.f32.mrf.mxu0
    %v2231 = vadd.f32 %v459, %v2230
    %2232 = vmatmul.bf16.gmra.mxu0 %v191
    %v2233 = vpop.f32.mrf.mxu0
    %v2234 = vadd.f32 %v459, %v2233
    %v2235 = vpop.f32.mrf.mxu0
    %v2236 = vadd.f32 %v459, %v2235
    %2237 = vdwg.mxu0
    %2238 = vmatpush.bf16.msra.mxu0 %v1295
    %2239 = vmatpush.bf16.msra.mxu0 %v1291
    %2240 = vmatpush.bf16.msra.mxu0 %v1287
    %2241 = vmatpush.bf16.msra.mxu0 %v1283
    %2242 = vmatpush.bf16.msra.mxu0 %v1279
    %2243 = vmatpush.bf16.msra.mxu0 %v1275
    %2244 = vmatpush.bf16.msra.mxu0 %v1271
    %2245 = vmatpush.bf16.msra.mxu0 %v1267
    %2246 = vmatmul.bf16.gmra.mxu0 %v168
    %v2247 = vpop.f32.mrf.mxu0
    %v2248 = vadd.f32 %v2219, %v2247
    %v2249 = vpop.f32.mrf.mxu0
    %v2250 = vadd.f32 %v2221, %v2249
    %2251 = vmatmul.bf16.gmra.mxu0 %v176
    %v2252 = vpop.f32.mrf.mxu0
    %v2253 = vadd.f32 %v2224, %v2252
    %v2254 = vpop.f32.mrf.mxu0
    %v2255 = vadd.f32 %v2226, %v2254
    %2256 = vmatmul.bf16.gmra.mxu0 %v184
    %v2257 = vpop.f32.mrf.mxu0
    %v2258 = vadd.f32 %v2229, %v2257
    %v2259 = vpop.f32.mrf.mxu0
    %v2260 = vadd.f32 %v2231, %v2259
    %2261 = vmatmul.bf16.gmra.mxu0 %v192
    %v2262 = vpop.f32.mrf.mxu0
    %v2263 = vadd.f32 %v2234, %v2262
    %v2264 = vpop.f32.mrf.mxu0
    %v2265 = vadd.f32 %v2236, %v2264
    %2266 = vdwg.mxu0
    %2267 = vmatpush.bf16.msra.mxu0 %v1327
    %2268 = vmatpush.bf16.msra.mxu0 %v1323
    %2269 = vmatpush.bf16.msra.mxu0 %v1319
    %2270 = vmatpush.bf16.msra.mxu0 %v1315
    %2271 = vmatpush.bf16.msra.mxu0 %v1311
    %2272 = vmatpush.bf16.msra.mxu0 %v1307
    %2273 = vmatpush.bf16.msra.mxu0 %v1303
    %2274 = vmatpush.bf16.msra.mxu0 %v1299
    %2275 = vmatmul.bf16.gmra.mxu0 %v169
    %v2276 = vpop.f32.mrf.mxu0
    %v2277 = vadd.f32 %v2248, %v2276
    %v2278 = vpop.f32.mrf.mxu0
    %v2279 = vadd.f32 %v2250, %v2278
    %2280 = vmatmul.bf16.gmra.mxu0 %v177
    %v2281 = vpop.f32.mrf.mxu0
    %v2282 = vadd.f32 %v2253, %v2281
    %v2283 = vpop.f32.mrf.mxu0
    %v2284 = vadd.f32 %v2255, %v2283
    %2285 = vmatmul.bf16.gmra.mxu0 %v185
    %v2286 = vpop.f32.mrf.mxu0
    %v2287 = vadd.f32 %v2258, %v2286
    %v2288 = vpop.f32.mrf.mxu0
    %v2289 = vadd.f32 %v2260, %v2288
    %2290 = vmatmul.bf16.gmra.mxu0 %v193
    %v2291 = vpop.f32.mrf.mxu0
    %v2292 = vadd.f32 %v2263, %v2291
    %v2293 = vpop.f32.mrf.mxu0
    %v2294 = vadd.f32 %v2265, %v2293
    %2295 = vdwg.mxu0
    %2296 = vmatpush.bf16.msra.mxu0 %v1359
    %2297 = vmatpush.bf16.msra.mxu0 %v1355
    %2298 = vmatpush.bf16.msra.mxu0 %v1351
    %2299 = vmatpush.bf16.msra.mxu0 %v1347
    %2300 = vmatpush.bf16.msra.mxu0 %v1343
    %2301 = vmatpush.bf16.msra.mxu0 %v1339
    %2302 = vmatpush.bf16.msra.mxu0 %v1335
    %2303 = vmatpush.bf16.msra.mxu0 %v1331
    %2304 = vmatmul.bf16.gmra.mxu0 %v170
    %v2305 = vpop.f32.mrf.mxu0
    %v2306 = vadd.f32 %v2277, %v2305
    %v2307 = vpop.f32.mrf.mxu0
    %v2308 = vadd.f32 %v2279, %v2307
    %2309 = vmatmul.bf16.gmra.mxu0 %v178
    %v2310 = vpop.f32.mrf.mxu0
    %v2311 = vadd.f32 %v2282, %v2310
    %v2312 = vpop.f32.mrf.mxu0
    %v2313 = vadd.f32 %v2284, %v2312
    %2314 = vmatmul.bf16.gmra.mxu0 %v186
    %v2315 = vpop.f32.mrf.mxu0
    %v2316 = vadd.f32 %v2287, %v2315
    %v2317 = vpop.f32.mrf.mxu0
    %v2318 = vadd.f32 %v2289, %v2317
    %2319 = vmatmul.bf16.gmra.mxu0 %v194
    %v2320 = vpop.f32.mrf.mxu0
    %v2321 = vadd.f32 %v2292, %v2320
    %v2322 = vpop.f32.mrf.mxu0
    %v2323 = vadd.f32 %v2294, %v2322
    %2324 = vdwg.mxu0
    %2325 = vmatpush.bf16.msra.mxu0 %v1391
    %2326 = vmatpush.bf16.msra.mxu0 %v1387
    %2327 = vmatpush.bf16.msra.mxu0 %v1383
    %2328 = vmatpush.bf16.msra.mxu0 %v1379
    %2329 = vmatpush.bf16.msra.mxu0 %v1375
    %2330 = vmatpush.bf16.msra.mxu0 %v1371
    %2331 = vmatpush.bf16.msra.mxu0 %v1367
    %2332 = vmatpush.bf16.msra.mxu0 %v1363
    %2333 = vmatmul.bf16.gmra.mxu0 %v171
    %v2334 = vpop.f32.mrf.mxu0
    %v2335 = vadd.f32 %v2306, %v2334
    %v2336 = vpop.f32.mrf.mxu0
    %v2337 = vadd.f32 %v2308, %v2336
    %2338 = vmatmul.bf16.gmra.mxu0 %v179
    %v2339 = vpop.f32.mrf.mxu0
    %v2340 = vadd.f32 %v2311, %v2339
    %v2341 = vpop.f32.mrf.mxu0
    %v2342 = vadd.f32 %v2313, %v2341
    %2343 = vmatmul.bf16.gmra.mxu0 %v187
    %v2344 = vpop.f32.mrf.mxu0
    %v2345 = vadd.f32 %v2316, %v2344
    %v2346 = vpop.f32.mrf.mxu0
    %v2347 = vadd.f32 %v2318, %v2346
    %2348 = vmatmul.bf16.gmra.mxu0 %v195
    %v2349 = vpop.f32.mrf.mxu0
    %v2350 = vadd.f32 %v2321, %v2349
    %v2351 = vpop.f32.mrf.mxu0
    %v2352 = vadd.f32 %v2323, %v2351
    %2353 = vdwg.mxu0
    %2354 = vmatpush.bf16.msra.mxu0 %v1423
    %2355 = vmatpush.bf16.msra.mxu0 %v1419
    %2356 = vmatpush.bf16.msra.mxu0 %v1415
    %2357 = vmatpush.bf16.msra.mxu0 %v1411
    %2358 = vmatpush.bf16.msra.mxu0 %v1407
    %2359 = vmatpush.bf16.msra.mxu0 %v1403
    %2360 = vmatpush.bf16.msra.mxu0 %v1399
    %2361 = vmatpush.bf16.msra.mxu0 %v1395
    %2362 = vmatmul.bf16.gmra.mxu0 %v172
    %v2363 = vpop.f32.mrf.mxu0
    %v2364 = vadd.f32 %v2335, %v2363
    %v2365 = vpop.f32.mrf.mxu0
    %v2366 = vadd.f32 %v2337, %v2365
    %2367 = vmatmul.bf16.gmra.mxu0 %v180
    %v2368 = vpop.f32.mrf.mxu0
    %v2369 = vadd.f32 %v2340, %v2368
    %v2370 = vpop.f32.mrf.mxu0
    %v2371 = vadd.f32 %v2342, %v2370
    %2372 = vmatmul.bf16.gmra.mxu0 %v188
    %v2373 = vpop.f32.mrf.mxu0
    %v2374 = vadd.f32 %v2345, %v2373
    %v2375 = vpop.f32.mrf.mxu0
    %v2376 = vadd.f32 %v2347, %v2375
    %2377 = vmatmul.bf16.gmra.mxu0 %v196
    %v2378 = vpop.f32.mrf.mxu0
    %v2379 = vadd.f32 %v2350, %v2378
    %v2380 = vpop.f32.mrf.mxu0
    %v2381 = vadd.f32 %v2352, %v2380
    %2382 = vdwg.mxu0
    %2383 = vmatpush.bf16.msra.mxu0 %v1455
    %2384 = vmatpush.bf16.msra.mxu0 %v1451
    %2385 = vmatpush.bf16.msra.mxu0 %v1447
    %2386 = vmatpush.bf16.msra.mxu0 %v1443
    %2387 = vmatpush.bf16.msra.mxu0 %v1439
    %2388 = vmatpush.bf16.msra.mxu0 %v1435
    %2389 = vmatpush.bf16.msra.mxu0 %v1431
    %2390 = vmatpush.bf16.msra.mxu0 %v1427
    %2391 = vmatmul.bf16.gmra.mxu0 %v173
    %v2392 = vpop.f32.mrf.mxu0
    %v2393 = vadd.f32 %v2364, %v2392
    %v2394 = vpop.f32.mrf.mxu0
    %v2395 = vadd.f32 %v2366, %v2394
    %2396 = vmatmul.bf16.gmra.mxu0 %v181
    %v2397 = vpop.f32.mrf.mxu0
    %v2398 = vadd.f32 %v2369, %v2397
    %v2399 = vpop.f32.mrf.mxu0
    %v2400 = vadd.f32 %v2371, %v2399
    %2401 = vmatmul.bf16.gmra.mxu0 %v189
    %v2402 = vpop.f32.mrf.mxu0
    %v2403 = vadd.f32 %v2374, %v2402
    %v2404 = vpop.f32.mrf.mxu0
    %v2405 = vadd.f32 %v2376, %v2404
    %2406 = vmatmul.bf16.gmra.mxu0 %v197
    %v2407 = vpop.f32.mrf.mxu0
    %v2408 = vadd.f32 %v2379, %v2407
    %v2409 = vpop.f32.mrf.mxu0
    %v2410 = vadd.f32 %v2381, %v2409
    %2411 = vdwg.mxu0
    %2412 = vmatpush.bf16.msra.mxu0 %v1487
    %2413 = vmatpush.bf16.msra.mxu0 %v1483
    %2414 = vmatpush.bf16.msra.mxu0 %v1479
    %2415 = vmatpush.bf16.msra.mxu0 %v1475
    %2416 = vmatpush.bf16.msra.mxu0 %v1471
    %2417 = vmatpush.bf16.msra.mxu0 %v1467
    %2418 = vmatpush.bf16.msra.mxu0 %v1463
    %2419 = vmatpush.bf16.msra.mxu0 %v1459
    %2420 = vmatmul.bf16.gmra.mxu0 %v174
    %v2421 = vpop.f32.mrf.mxu0
    %v2422 = vadd.f32 %v2393, %v2421
    %v2423 = vpop.f32.mrf.mxu0
    %v2424 = vadd.f32 %v2395, %v2423
    %2425 = vmatmul.bf16.gmra.mxu0 %v182
    %v2426 = vpop.f32.mrf.mxu0
    %v2427 = vadd.f32 %v2398, %v2426
    %v2428 = vpop.f32.mrf.mxu0
    %v2429 = vadd.f32 %v2400, %v2428
    %2430 = vmatmul.bf16.gmra.mxu0 %v190
    %v2431 = vpop.f32.mrf.mxu0
    %v2432 = vadd.f32 %v2403, %v2431
    %v2433 = vpop.f32.mrf.mxu0
    %v2434 = vadd.f32 %v2405, %v2433
    %2435 = vmatmul.bf16.gmra.mxu0 %v198
    %v2436 = vpop.f32.mrf.mxu0
    %v2437 = vadd.f32 %v2408, %v2436
    %v2438 = vpop.f32.mrf.mxu0
    %v2439 = vadd.f32 %v2410, %v2438
    %2440 = vdwg.mxu0
    %2441 = vmatpush.bf16.msra.mxu0 %v1264
    %2442 = vmatpush.bf16.msra.mxu0 %v1260
    %2443 = vmatpush.bf16.msra.mxu0 %v1256
    %2444 = vmatpush.bf16.msra.mxu0 %v1252
    %2445 = vmatpush.bf16.msra.mxu0 %v1248
    %2446 = vmatpush.bf16.msra.mxu0 %v1244
    %2447 = vmatpush.bf16.msra.mxu0 %v1240
    %2448 = vmatpush.bf16.msra.mxu0 %v1236
    %2449 = vmatmul.bf16.gmra.mxu0 %v167
    %v2450 = vpop.f32.mrf.mxu0
    %v2451 = vadd.f32 %v460, %v2450
    %v2452 = vpop.f32.mrf.mxu0
    %v2453 = vadd.f32 %v460, %v2452
    %2454 = vmatmul.bf16.gmra.mxu0 %v175
    %v2455 = vpop.f32.mrf.mxu0
    %v2456 = vadd.f32 %v460, %v2455
    %v2457 = vpop.f32.mrf.mxu0
    %v2458 = vadd.f32 %v460, %v2457
    %2459 = vmatmul.bf16.gmra.mxu0 %v183
    %v2460 = vpop.f32.mrf.mxu0
    %v2461 = vadd.f32 %v460, %v2460
    %v2462 = vpop.f32.mrf.mxu0
    %v2463 = vadd.f32 %v460, %v2462
    %2464 = vmatmul.bf16.gmra.mxu0 %v191
    %v2465 = vpop.f32.mrf.mxu0
    %v2466 = vadd.f32 %v460, %v2465
    %v2467 = vpop.f32.mrf.mxu0
    %v2468 = vadd.f32 %v460, %v2467
    %2469 = vdwg.mxu0
    %2470 = vmatpush.bf16.msra.mxu0 %v1296
    %2471 = vmatpush.bf16.msra.mxu0 %v1292
    %2472 = vmatpush.bf16.msra.mxu0 %v1288
    %2473 = vmatpush.bf16.msra.mxu0 %v1284
    %2474 = vmatpush.bf16.msra.mxu0 %v1280
    %2475 = vmatpush.bf16.msra.mxu0 %v1276
    %2476 = vmatpush.bf16.msra.mxu0 %v1272
    %2477 = vmatpush.bf16.msra.mxu0 %v1268
    %2478 = vmatmul.bf16.gmra.mxu0 %v168
    %v2479 = vpop.f32.mrf.mxu0
    %v2480 = vadd.f32 %v2451, %v2479
    %v2481 = vpop.f32.mrf.mxu0
    %v2482 = vadd.f32 %v2453, %v2481
    %2483 = vmatmul.bf16.gmra.mxu0 %v176
    %v2484 = vpop.f32.mrf.mxu0
    %v2485 = vadd.f32 %v2456, %v2484
    %v2486 = vpop.f32.mrf.mxu0
    %v2487 = vadd.f32 %v2458, %v2486
    %2488 = vmatmul.bf16.gmra.mxu0 %v184
    %v2489 = vpop.f32.mrf.mxu0
    %v2490 = vadd.f32 %v2461, %v2489
    %v2491 = vpop.f32.mrf.mxu0
    %v2492 = vadd.f32 %v2463, %v2491
    %2493 = vmatmul.bf16.gmra.mxu0 %v192
    %v2494 = vpop.f32.mrf.mxu0
    %v2495 = vadd.f32 %v2466, %v2494
    %v2496 = vpop.f32.mrf.mxu0
    %v2497 = vadd.f32 %v2468, %v2496
    %2498 = vdwg.mxu0
    %2499 = vmatpush.bf16.msra.mxu0 %v1328
    %2500 = vmatpush.bf16.msra.mxu0 %v1324
    %2501 = vmatpush.bf16.msra.mxu0 %v1320
    %2502 = vmatpush.bf16.msra.mxu0 %v1316
    %2503 = vmatpush.bf16.msra.mxu0 %v1312
    %2504 = vmatpush.bf16.msra.mxu0 %v1308
    %2505 = vmatpush.bf16.msra.mxu0 %v1304
    %2506 = vmatpush.bf16.msra.mxu0 %v1300
    %2507 = vmatmul.bf16.gmra.mxu0 %v169
    %v2508 = vpop.f32.mrf.mxu0
    %v2509 = vadd.f32 %v2480, %v2508
    %v2510 = vpop.f32.mrf.mxu0
    %v2511 = vadd.f32 %v2482, %v2510
    %2512 = vmatmul.bf16.gmra.mxu0 %v177
    %v2513 = vpop.f32.mrf.mxu0
    %v2514 = vadd.f32 %v2485, %v2513
    %v2515 = vpop.f32.mrf.mxu0
    %v2516 = vadd.f32 %v2487, %v2515
    %2517 = vmatmul.bf16.gmra.mxu0 %v185
    %v2518 = vpop.f32.mrf.mxu0
    %v2519 = vadd.f32 %v2490, %v2518
    %v2520 = vpop.f32.mrf.mxu0
    %v2521 = vadd.f32 %v2492, %v2520
    %2522 = vmatmul.bf16.gmra.mxu0 %v193
    %v2523 = vpop.f32.mrf.mxu0
    %v2524 = vadd.f32 %v2495, %v2523
    %v2525 = vpop.f32.mrf.mxu0
    %v2526 = vadd.f32 %v2497, %v2525
    %2527 = vdwg.mxu0
    %2528 = vmatpush.bf16.msra.mxu0 %v1360
    %2529 = vmatpush.bf16.msra.mxu0 %v1356
    %2530 = vmatpush.bf16.msra.mxu0 %v1352
    %2531 = vmatpush.bf16.msra.mxu0 %v1348
    %2532 = vmatpush.bf16.msra.mxu0 %v1344
    %2533 = vmatpush.bf16.msra.mxu0 %v1340
    %2534 = vmatpush.bf16.msra.mxu0 %v1336
    %2535 = vmatpush.bf16.msra.mxu0 %v1332
    %2536 = vmatmul.bf16.gmra.mxu0 %v170
    %v2537 = vpop.f32.mrf.mxu0
    %v2538 = vadd.f32 %v2509, %v2537
    %v2539 = vpop.f32.mrf.mxu0
    %v2540 = vadd.f32 %v2511, %v2539
    %2541 = vmatmul.bf16.gmra.mxu0 %v178
    %v2542 = vpop.f32.mrf.mxu0
    %v2543 = vadd.f32 %v2514, %v2542
    %v2544 = vpop.f32.mrf.mxu0
    %v2545 = vadd.f32 %v2516, %v2544
    %2546 = vmatmul.bf16.gmra.mxu0 %v186
    %v2547 = vpop.f32.mrf.mxu0
    %v2548 = vadd.f32 %v2519, %v2547
    %v2549 = vpop.f32.mrf.mxu0
    %v2550 = vadd.f32 %v2521, %v2549
    %2551 = vmatmul.bf16.gmra.mxu0 %v194
    %v2552 = vpop.f32.mrf.mxu0
    %v2553 = vadd.f32 %v2524, %v2552
    %v2554 = vpop.f32.mrf.mxu0
    %v2555 = vadd.f32 %v2526, %v2554
    %2556 = vdwg.mxu0
    %2557 = vmatpush.bf16.msra.mxu0 %v1392
    %2558 = vmatpush.bf16.msra.mxu0 %v1388
    %2559 = vmatpush.bf16.msra.mxu0 %v1384
    %2560 = vmatpush.bf16.msra.mxu0 %v1380
    %2561 = vmatpush.bf16.msra.mxu0 %v1376
    %2562 = vmatpush.bf16.msra.mxu0 %v1372
    %2563 = vmatpush.bf16.msra.mxu0 %v1368
    %2564 = vmatpush.bf16.msra.mxu0 %v1364
    %2565 = vmatmul.bf16.gmra.mxu0 %v171
    %v2566 = vpop.f32.mrf.mxu0
    %v2567 = vadd.f32 %v2538, %v2566
    %v2568 = vpop.f32.mrf.mxu0
    %v2569 = vadd.f32 %v2540, %v2568
    %2570 = vmatmul.bf16.gmra.mxu0 %v179
    %v2571 = vpop.f32.mrf.mxu0
    %v2572 = vadd.f32 %v2543, %v2571
    %v2573 = vpop.f32.mrf.mxu0
    %v2574 = vadd.f32 %v2545, %v2573
    %2575 = vmatmul.bf16.gmra.mxu0 %v187
    %v2576 = vpop.f32.mrf.mxu0
    %v2577 = vadd.f32 %v2548, %v2576
    %v2578 = vpop.f32.mrf.mxu0
    %v2579 = vadd.f32 %v2550, %v2578
    %2580 = vmatmul.bf16.gmra.mxu0 %v195
    %v2581 = vpop.f32.mrf.mxu0
    %v2582 = vadd.f32 %v2553, %v2581
    %v2583 = vpop.f32.mrf.mxu0
    %v2584 = vadd.f32 %v2555, %v2583
    %2585 = vdwg.mxu0
    %2586 = vmatpush.bf16.msra.mxu0 %v1424
    %2587 = vmatpush.bf16.msra.mxu0 %v1420
    %2588 = vmatpush.bf16.msra.mxu0 %v1416
    %2589 = vmatpush.bf16.msra.mxu0 %v1412
    %2590 = vmatpush.bf16.msra.mxu0 %v1408
    %2591 = vmatpush.bf16.msra.mxu0 %v1404
    %2592 = vmatpush.bf16.msra.mxu0 %v1400
    %2593 = vmatpush.bf16.msra.mxu0 %v1396
    %2594 = vmatmul.bf16.gmra.mxu0 %v172
    %v2595 = vpop.f32.mrf.mxu0
    %v2596 = vadd.f32 %v2567, %v2595
    %v2597 = vpop.f32.mrf.mxu0
    %v2598 = vadd.f32 %v2569, %v2597
    %2599 = vmatmul.bf16.gmra.mxu0 %v180
    %v2600 = vpop.f32.mrf.mxu0
    %v2601 = vadd.f32 %v2572, %v2600
    %v2602 = vpop.f32.mrf.mxu0
    %v2603 = vadd.f32 %v2574, %v2602
    %2604 = vmatmul.bf16.gmra.mxu0 %v188
    %v2605 = vpop.f32.mrf.mxu0
    %v2606 = vadd.f32 %v2577, %v2605
    %v2607 = vpop.f32.mrf.mxu0
    %v2608 = vadd.f32 %v2579, %v2607
    %2609 = vmatmul.bf16.gmra.mxu0 %v196
    %v2610 = vpop.f32.mrf.mxu0
    %v2611 = vadd.f32 %v2582, %v2610
    %v2612 = vpop.f32.mrf.mxu0
    %v2613 = vadd.f32 %v2584, %v2612
    %2614 = vdwg.mxu0
    %2615 = vmatpush.bf16.msra.mxu0 %v1456
    %2616 = vmatpush.bf16.msra.mxu0 %v1452
    %2617 = vmatpush.bf16.msra.mxu0 %v1448
    %2618 = vmatpush.bf16.msra.mxu0 %v1444
    %2619 = vmatpush.bf16.msra.mxu0 %v1440
    %2620 = vmatpush.bf16.msra.mxu0 %v1436
    %2621 = vmatpush.bf16.msra.mxu0 %v1432
    %2622 = vmatpush.bf16.msra.mxu0 %v1428
    %2623 = vmatmul.bf16.gmra.mxu0 %v173
    %v2624 = vpop.f32.mrf.mxu0
    %v2625 = vadd.f32 %v2596, %v2624
    %v2626 = vpop.f32.mrf.mxu0
    %v2627 = vadd.f32 %v2598, %v2626
    %2628 = vmatmul.bf16.gmra.mxu0 %v181
    %v2629 = vpop.f32.mrf.mxu0
    %v2630 = vadd.f32 %v2601, %v2629
    %v2631 = vpop.f32.mrf.mxu0
    %v2632 = vadd.f32 %v2603, %v2631
    %2633 = vmatmul.bf16.gmra.mxu0 %v189
    %v2634 = vpop.f32.mrf.mxu0
    %v2635 = vadd.f32 %v2606, %v2634
    %v2636 = vpop.f32.mrf.mxu0
    %v2637 = vadd.f32 %v2608, %v2636
    %2638 = vmatmul.bf16.gmra.mxu0 %v197
    %v2639 = vpop.f32.mrf.mxu0
    %v2640 = vadd.f32 %v2611, %v2639
    %v2641 = vpop.f32.mrf.mxu0
    %v2642 = vadd.f32 %v2613, %v2641
    %2643 = vdwg.mxu0
    %2644 = vmatpush.bf16.msra.mxu0 %v1488
    %2645 = vmatpush.bf16.msra.mxu0 %v1484
    %2646 = vmatpush.bf16.msra.mxu0 %v1480
    %2647 = vmatpush.bf16.msra.mxu0 %v1476
    %2648 = vmatpush.bf16.msra.mxu0 %v1472
    %2649 = vmatpush.bf16.msra.mxu0 %v1468
    %2650 = vmatpush.bf16.msra.mxu0 %v1464
    %2651 = vmatpush.bf16.msra.mxu0 %v1460
    %2652 = vmatmul.bf16.gmra.mxu0 %v174
    %v2653 = vpop.f32.mrf.mxu0
    %v2654 = vadd.f32 %v2625, %v2653
    %v2655 = vpop.f32.mrf.mxu0
    %v2656 = vadd.f32 %v2627, %v2655
    %2657 = vmatmul.bf16.gmra.mxu0 %v182
    %v2658 = vpop.f32.mrf.mxu0
    %v2659 = vadd.f32 %v2630, %v2658
    %v2660 = vpop.f32.mrf.mxu0
    %v2661 = vadd.f32 %v2632, %v2660
    %2662 = vmatmul.bf16.gmra.mxu0 %v190
    %v2663 = vpop.f32.mrf.mxu0
    %v2664 = vadd.f32 %v2635, %v2663
    %v2665 = vpop.f32.mrf.mxu0
    %v2666 = vadd.f32 %v2637, %v2665
    %2667 = vmatmul.bf16.gmra.mxu0 %v198
    %v2668 = vpop.f32.mrf.mxu0
    %v2669 = vadd.f32 %v2640, %v2668
    %v2670 = vpop.f32.mrf.mxu0
    %v2671 = vadd.f32 %v2642, %v2670
    %2672 = vdwg.mxu0
    %v2673 = vmax.f32 %v1958, 0.0
    %v2674 = vmax.f32 %v2190, 0.0
    %v2675 = vmax.f32 %v2422, 0.0
    %v2676 = vmax.f32 %v2654, 0.0
    %v2677 = vmax.f32 %v1960, 0.0
    %v2678 = vmax.f32 %v2192, 0.0
    %v2679 = vmax.f32 %v2424, 0.0
    %v2680 = vmax.f32 %v2656, 0.0
    %v2681 = vmax.f32 %v1963, 0.0
    %v2682 = vmax.f32 %v2195, 0.0
    %v2683 = vmax.f32 %v2427, 0.0
    %v2684 = vmax.f32 %v2659, 0.0
    %v2685 = vmax.f32 %v1965, 0.0
    %v2686 = vmax.f32 %v2197, 0.0
    %v2687 = vmax.f32 %v2429, 0.0
    %v2688 = vmax.f32 %v2661, 0.0
    %v2689 = vmax.f32 %v1968, 0.0
    %v2690 = vmax.f32 %v2200, 0.0
    %v2691 = vmax.f32 %v2432, 0.0
    %v2692 = vmax.f32 %v2664, 0.0
    %v2693 = vmax.f32 %v1970, 0.0
    %v2694 = vmax.f32 %v2202, 0.0
    %v2695 = vmax.f32 %v2434, 0.0
    %v2696 = vmax.f32 %v2666, 0.0
    %v2697 = vmax.f32 %v1973, 0.0
    %v2698 = vmax.f32 %v2205, 0.0
    %v2699 = vmax.f32 %v2437, 0.0
    %v2700 = vmax.f32 %v2669, 0.0
    %v2701 = vmax.f32 %v1975, 0.0
    %v2702 = vmax.f32 %v2207, 0.0
    %v2703 = vmax.f32 %v2439, 0.0
    %v2704 = vmax.f32 %v2671, 0.0
    %v2705 = vpack.c.bf16 %v2677, %v2673
    %v2706 = vpack.c.bf16 %v2678, %v2674
    %v2707 = vpack.c.bf16 %v2679, %v2675
    %v2708 = vpack.c.bf16 %v2680, %v2676
    %v2709 = vpack.c.bf16 %v2685, %v2681
    %v2710 = vpack.c.bf16 %v2686, %v2682
    %v2711 = vpack.c.bf16 %v2687, %v2683
    %v2712 = vpack.c.bf16 %v2688, %v2684
    %v2713 = vpack.c.bf16 %v2693, %v2689
    %v2714 = vpack.c.bf16 %v2694, %v2690
    %v2715 = vpack.c.bf16 %v2695, %v2691
    %v2716 = vpack.c.bf16 %v2696, %v2692
    %v2717 = vpack.c.bf16 %v2701, %v2697
    %v2718 = vpack.c.bf16 %v2702, %v2698
    %v2719 = vpack.c.bf16 %v2703, %v2699
    %v2720 = vpack.c.bf16 %v2704, %v2700
    %v2721 = vld [vmem:[#allocation8] sm:$0xff]
    %v2722 = vld [vmem:[#allocation8 + $0x8] sm:$0xff]
    %v2723 = vld [vmem:[#allocation8 + $0x10] sm:$0xff]
    %v2724 = vld [vmem:[#allocation8 + $0x18] sm:$0xff]
    %v2725 = vld [vmem:[#allocation8 + $0x20] sm:$0xff]
    %v2726 = vld [vmem:[#allocation8 + $0x28] sm:$0xff]
    %v2727 = vld [vmem:[#allocation8 + $0x30] sm:$0xff]
    %v2728 = vld [vmem:[#allocation8 + $0x38] sm:$0xff]
    %v2729 = vld [vmem:[#allocation8 + $0x40] sm:$0xff]
    %v2730 = vld [vmem:[#allocation8 + $0x48] sm:$0xff]
    %v2731 = vld [vmem:[#allocation8 + $0x50] sm:$0xff]
    %v2732 = vld [vmem:[#allocation8 + $0x58] sm:$0xff]
    %v2733 = vld [vmem:[#allocation8 + $0x60] sm:$0xff]
    %v2734 = vld [vmem:[#allocation8 + $0x68] sm:$0xff]
    %v2735 = vld [vmem:[#allocation8 + $0x70] sm:$0xff]
    %v2736 = vld [vmem:[#allocation8 + $0x78] sm:$0xff]
    %v2737 = vld [vmem:[#allocation8 + $0x80] sm:$0xff]
    %v2738 = vld [vmem:[#allocation8 + $0x88] sm:$0xff]
    %v2739 = vld [vmem:[#allocation8 + $0x90] sm:$0xff]
    %v2740 = vld [vmem:[#allocation8 + $0x98] sm:$0xff]
    %v2741 = vld [vmem:[#allocation8 + $0xa0] sm:$0xff]
    %v2742 = vld [vmem:[#allocation8 + $0xa8] sm:$0xff]
    %v2743 = vld [vmem:[#allocation8 + $0xb0] sm:$0xff]
    %v2744 = vld [vmem:[#allocation8 + $0xb8] sm:$0xff]
    %v2745 = vld [vmem:[#allocation8 + $0xc0] sm:$0xff]
    %v2746 = vld [vmem:[#allocation8 + $0xc8] sm:$0xff]
    %v2747 = vld [vmem:[#allocation8 + $0xd0] sm:$0xff]
    %v2748 = vld [vmem:[#allocation8 + $0xd8] sm:$0xff]
    %v2749 = vld [vmem:[#allocation8 + $0xe0] sm:$0xff]
    %v2750 = vld [vmem:[#allocation8 + $0xe8] sm:$0xff]
    %v2751 = vld [vmem:[#allocation8 + $0xf0] sm:$0xff]
    %v2752 = vld [vmem:[#allocation8 + $0xf8] sm:$0xff]
    %v2753 = vld [vmem:[#allocation8 + $0x100] sm:$0xff]
    %v2754 = vld [vmem:[#allocation8 + $0x108] sm:$0xff]
    %v2755 = vld [vmem:[#allocation8 + $0x110] sm:$0xff]
    %v2756 = vld [vmem:[#allocation8 + $0x118] sm:$0xff]
    %v2757 = vld [vmem:[#allocation8 + $0x120] sm:$0xff]
    %v2758 = vld [vmem:[#allocation8 + $0x128] sm:$0xff]
    %v2759 = vld [vmem:[#allocation8 + $0x130] sm:$0xff]
    %v2760 = vld [vmem:[#allocation8 + $0x138] sm:$0xff]
    %v2761 = vld [vmem:[#allocation8 + $0x140] sm:$0xff]
    %v2762 = vld [vmem:[#allocation8 + $0x148] sm:$0xff]
    %v2763 = vld [vmem:[#allocation8 + $0x150] sm:$0xff]
    %v2764 = vld [vmem:[#allocation8 + $0x158] sm:$0xff]
    %v2765 = vld [vmem:[#allocation8 + $0x160] sm:$0xff]
    %v2766 = vld [vmem:[#allocation8 + $0x168] sm:$0xff]
    %v2767 = vld [vmem:[#allocation8 + $0x170] sm:$0xff]
    %v2768 = vld [vmem:[#allocation8 + $0x178] sm:$0xff]
    %v2769 = vld [vmem:[#allocation8 + $0x180] sm:$0xff]
    %v2770 = vld [vmem:[#allocation8 + $0x188] sm:$0xff]
    %v2771 = vld [vmem:[#allocation8 + $0x190] sm:$0xff]
    %v2772 = vld [vmem:[#allocation8 + $0x198] sm:$0xff]
    %v2773 = vld [vmem:[#allocation8 + $0x1a0] sm:$0xff]
    %v2774 = vld [vmem:[#allocation8 + $0x1a8] sm:$0xff]
    %v2775 = vld [vmem:[#allocation8 + $0x1b0] sm:$0xff]
    %v2776 = vld [vmem:[#allocation8 + $0x1b8] sm:$0xff]
    %v2777 = vld [vmem:[#allocation8 + $0x1c0] sm:$0xff]
    %v2778 = vld [vmem:[#allocation8 + $0x1c8] sm:$0xff]
    %v2779 = vld [vmem:[#allocation8 + $0x1d0] sm:$0xff]
    %v2780 = vld [vmem:[#allocation8 + $0x1d8] sm:$0xff]
    %v2781 = vld [vmem:[#allocation8 + $0x1e0] sm:$0xff]
    %v2782 = vld [vmem:[#allocation8 + $0x1e8] sm:$0xff]
    %v2783 = vld [vmem:[#allocation8 + $0x1f0] sm:$0xff]
    %v2784 = vld [vmem:[#allocation8 + $0x1f8] sm:$0xff]
    %v2785 = vld [vmem:[%s4] sm:$0x3]
    %v2787 = vperm.slane %v2785, 0
    %v2788 = vperm.slane %v2785, 1
    %v2855 = vunpack.c.l.b16 %v2721
    %v2856 = vunpack.c.h.b16 %v2721
    %v2857 = vunpack.c.l.b16 %v2722
    %v2858 = vunpack.c.h.b16 %v2722
    %v2859 = vunpack.c.l.b16 %v2723
    %v2860 = vunpack.c.h.b16 %v2723
    %v2861 = vunpack.c.l.b16 %v2724
    %v2862 = vunpack.c.h.b16 %v2724
    %v2863 = vunpack.c.l.b16 %v2725
    %v2864 = vunpack.c.h.b16 %v2725
    %v2865 = vunpack.c.l.b16 %v2726
    %v2866 = vunpack.c.h.b16 %v2726
    %v2867 = vunpack.c.l.b16 %v2727
    %v2868 = vunpack.c.h.b16 %v2727
    %v2869 = vunpack.c.l.b16 %v2728
    %v2870 = vunpack.c.h.b16 %v2728
    %v2871 = vunpack.c.l.b16 %v2729
    %v2872 = vunpack.c.h.b16 %v2729
    %v2873 = vunpack.c.l.b16 %v2730
    %v2874 = vunpack.c.h.b16 %v2730
    %v2875 = vunpack.c.l.b16 %v2731
    %v2876 = vunpack.c.h.b16 %v2731
    %v2877 = vunpack.c.l.b16 %v2732
    %v2878 = vunpack.c.h.b16 %v2732
    %v2879 = vunpack.c.l.b16 %v2733
    %v2880 = vunpack.c.h.b16 %v2733
    %v2881 = vunpack.c.l.b16 %v2734
    %v2882 = vunpack.c.h.b16 %v2734
    %v2883 = vunpack.c.l.b16 %v2735
    %v2884 = vunpack.c.h.b16 %v2735
    %v2885 = vunpack.c.l.b16 %v2736
    %v2886 = vunpack.c.h.b16 %v2736
    %v2887 = vunpack.c.l.b16 %v2737
    %v2888 = vunpack.c.h.b16 %v2737
    %v2889 = vunpack.c.l.b16 %v2738
    %v2890 = vunpack.c.h.b16 %v2738
    %v2891 = vunpack.c.l.b16 %v2739
    %v2892 = vunpack.c.h.b16 %v2739
    %v2893 = vunpack.c.l.b16 %v2740
    %v2894 = vunpack.c.h.b16 %v2740
    %v2895 = vunpack.c.l.b16 %v2741
    %v2896 = vunpack.c.h.b16 %v2741
    %v2897 = vunpack.c.l.b16 %v2742
    %v2898 = vunpack.c.h.b16 %v2742
    %v2899 = vunpack.c.l.b16 %v2743
    %v2900 = vunpack.c.h.b16 %v2743
    %v2901 = vunpack.c.l.b16 %v2744
    %v2902 = vunpack.c.h.b16 %v2744
    %v2903 = vunpack.c.l.b16 %v2745
    %v2904 = vunpack.c.h.b16 %v2745
    %v2905 = vunpack.c.l.b16 %v2746
    %v2906 = vunpack.c.h.b16 %v2746
    %v2907 = vunpack.c.l.b16 %v2747
    %v2908 = vunpack.c.h.b16 %v2747
    %v2909 = vunpack.c.l.b16 %v2748
    %v2910 = vunpack.c.h.b16 %v2748
    %v2911 = vunpack.c.l.b16 %v2749
    %v2912 = vunpack.c.h.b16 %v2749
    %v2913 = vunpack.c.l.b16 %v2750
    %v2914 = vunpack.c.h.b16 %v2750
    %v2915 = vunpack.c.l.b16 %v2751
    %v2916 = vunpack.c.h.b16 %v2751
    %v2917 = vunpack.c.l.b16 %v2752
    %v2918 = vunpack.c.h.b16 %v2752
    %v2919 = vunpack.c.l.b16 %v2753
    %v2920 = vunpack.c.h.b16 %v2753
    %v2921 = vunpack.c.l.b16 %v2754
    %v2922 = vunpack.c.h.b16 %v2754
    %v2923 = vunpack.c.l.b16 %v2755
    %v2924 = vunpack.c.h.b16 %v2755
    %v2925 = vunpack.c.l.b16 %v2756
    %v2926 = vunpack.c.h.b16 %v2756
    %v2927 = vunpack.c.l.b16 %v2757
    %v2928 = vunpack.c.h.b16 %v2757
    %v2929 = vunpack.c.l.b16 %v2758
    %v2930 = vunpack.c.h.b16 %v2758
    %v2931 = vunpack.c.l.b16 %v2759
    %v2932 = vunpack.c.h.b16 %v2759
    %v2933 = vunpack.c.l.b16 %v2760
    %v2934 = vunpack.c.h.b16 %v2760
    %v2935 = vunpack.c.l.b16 %v2761
    %v2936 = vunpack.c.h.b16 %v2761
    %v2937 = vunpack.c.l.b16 %v2762
    %v2938 = vunpack.c.h.b16 %v2762
    %v2939 = vunpack.c.l.b16 %v2763
    %v2940 = vunpack.c.h.b16 %v2763
    %v2941 = vunpack.c.l.b16 %v2764
    %v2942 = vunpack.c.h.b16 %v2764
    %v2943 = vunpack.c.l.b16 %v2765
    %v2944 = vunpack.c.h.b16 %v2765
    %v2945 = vunpack.c.l.b16 %v2766
    %v2946 = vunpack.c.h.b16 %v2766
    %v2947 = vunpack.c.l.b16 %v2767
    %v2948 = vunpack.c.h.b16 %v2767
    %v2949 = vunpack.c.l.b16 %v2768
    %v2950 = vunpack.c.h.b16 %v2768
    %v2951 = vunpack.c.l.b16 %v2769
    %v2952 = vunpack.c.h.b16 %v2769
    %v2953 = vunpack.c.l.b16 %v2770
    %v2954 = vunpack.c.h.b16 %v2770
    %v2955 = vunpack.c.l.b16 %v2771
    %v2956 = vunpack.c.h.b16 %v2771
    %v2957 = vunpack.c.l.b16 %v2772
    %v2958 = vunpack.c.h.b16 %v2772
    %v2959 = vunpack.c.l.b16 %v2773
    %v2960 = vunpack.c.h.b16 %v2773
    %v2961 = vunpack.c.l.b16 %v2774
    %v2962 = vunpack.c.h.b16 %v2774
    %v2963 = vunpack.c.l.b16 %v2775
    %v2964 = vunpack.c.h.b16 %v2775
    %v2965 = vunpack.c.l.b16 %v2776
    %v2966 = vunpack.c.h.b16 %v2776
    %v2967 = vunpack.c.l.b16 %v2777
    %v2968 = vunpack.c.h.b16 %v2777
    %v2969 = vunpack.c.l.b16 %v2778
    %v2970 = vunpack.c.h.b16 %v2778
    %v2971 = vunpack.c.l.b16 %v2779
    %v2972 = vunpack.c.h.b16 %v2779
    %v2973 = vunpack.c.l.b16 %v2780
    %v2974 = vunpack.c.h.b16 %v2780
    %v2975 = vunpack.c.l.b16 %v2781
    %v2976 = vunpack.c.h.b16 %v2781
    %v2977 = vunpack.c.l.b16 %v2782
    %v2978 = vunpack.c.h.b16 %v2782
    %v2979 = vunpack.c.l.b16 %v2783
    %v2980 = vunpack.c.h.b16 %v2783
    %v2981 = vunpack.c.l.b16 %v2784
    %v2982 = vunpack.c.h.b16 %v2784
    %v2983 = vpack.c.b16 %v2857, %v2855
    %v2984 = vpack.c.b16 %v2858, %v2856
    %v2985 = vpack.c.b16 %v2861, %v2859
    %v2986 = vpack.c.b16 %v2862, %v2860
    %v2987 = vpack.c.b16 %v2865, %v2863
    %v2988 = vpack.c.b16 %v2866, %v2864
    %v2989 = vpack.c.b16 %v2869, %v2867
    %v2990 = vpack.c.b16 %v2870, %v2868
    %v2991 = vpack.c.b16 %v2873, %v2871
    %v2992 = vpack.c.b16 %v2874, %v2872
    %v2993 = vpack.c.b16 %v2877, %v2875
    %v2994 = vpack.c.b16 %v2878, %v2876
    %v2995 = vpack.c.b16 %v2881, %v2879
    %v2996 = vpack.c.b16 %v2882, %v2880
    %v2997 = vpack.c.b16 %v2885, %v2883
    %v2998 = vpack.c.b16 %v2886, %v2884
    %v2999 = vpack.c.b16 %v2889, %v2887
    %v3000 = vpack.c.b16 %v2890, %v2888
    %v3001 = vpack.c.b16 %v2893, %v2891
    %v3002 = vpack.c.b16 %v2894, %v2892
    %v3003 = vpack.c.b16 %v2897, %v2895
    %v3004 = vpack.c.b16 %v2898, %v2896
    %v3005 = vpack.c.b16 %v2901, %v2899
    %v3006 = vpack.c.b16 %v2902, %v2900
    %v3007 = vpack.c.b16 %v2905, %v2903
    %v3008 = vpack.c.b16 %v2906, %v2904
    %v3009 = vpack.c.b16 %v2909, %v2907
    %v3010 = vpack.c.b16 %v2910, %v2908
    %v3011 = vpack.c.b16 %v2913, %v2911
    %v3012 = vpack.c.b16 %v2914, %v2912
    %v3013 = vpack.c.b16 %v2917, %v2915
    %v3014 = vpack.c.b16 %v2918, %v2916
    %v3015 = vpack.c.b16 %v2921, %v2919
    %v3016 = vpack.c.b16 %v2922, %v2920
    %v3017 = vpack.c.b16 %v2925, %v2923
    %v3018 = vpack.c.b16 %v2926, %v2924
    %v3019 = vpack.c.b16 %v2929, %v2927
    %v3020 = vpack.c.b16 %v2930, %v2928
    %v3021 = vpack.c.b16 %v2933, %v2931
    %v3022 = vpack.c.b16 %v2934, %v2932
    %v3023 = vpack.c.b16 %v2937, %v2935
    %v3024 = vpack.c.b16 %v2938, %v2936
    %v3025 = vpack.c.b16 %v2941, %v2939
    %v3026 = vpack.c.b16 %v2942, %v2940
    %v3027 = vpack.c.b16 %v2945, %v2943
    %v3028 = vpack.c.b16 %v2946, %v2944
    %v3029 = vpack.c.b16 %v2949, %v2947
    %v3030 = vpack.c.b16 %v2950, %v2948
    %v3031 = vpack.c.b16 %v2953, %v2951
    %v3032 = vpack.c.b16 %v2954, %v2952
    %v3033 = vpack.c.b16 %v2957, %v2955
    %v3034 = vpack.c.b16 %v2958, %v2956
    %v3035 = vpack.c.b16 %v2961, %v2959
    %v3036 = vpack.c.b16 %v2962, %v2960
    %v3037 = vpack.c.b16 %v2965, %v2963
    %v3038 = vpack.c.b16 %v2966, %v2964
    %v3039 = vpack.c.b16 %v2969, %v2967
    %v3040 = vpack.c.b16 %v2970, %v2968
    %v3041 = vpack.c.b16 %v2973, %v2971
    %v3042 = vpack.c.b16 %v2974, %v2972
    %v3043 = vpack.c.b16 %v2977, %v2975
    %v3044 = vpack.c.b16 %v2978, %v2976
    %v3045 = vpack.c.b16 %v2981, %v2979
    %v3046 = vpack.c.b16 %v2982, %v2980
    %3111 = vmatpush.bf16.msra.mxu0 %v2997
    %3112 = vmatpush.bf16.msra.mxu0 %v2995
    %3113 = vmatpush.bf16.msra.mxu0 %v2993
    %3114 = vmatpush.bf16.msra.mxu0 %v2991
    %3115 = vmatpush.bf16.msra.mxu0 %v2989
    %3116 = vmatpush.bf16.msra.mxu0 %v2987
    %3117 = vmatpush.bf16.msra.mxu0 %v2985
    %3118 = vmatpush.bf16.msra.mxu0 %v2983
    %3119 = vmatmul.bf16.gmra.mxu0 %v2705
    %v3120 = vpop.f32.mrf.mxu0
    %v3121 = vadd.f32 %v2787, %v3120
    %v3122 = vpop.f32.mrf.mxu0
    %v3123 = vadd.f32 %v2787, %v3122
    %3124 = vmatmul.bf16.gmra.mxu0 %v2709
    %v3125 = vpop.f32.mrf.mxu0
    %v3126 = vadd.f32 %v2787, %v3125
    %v3127 = vpop.f32.mrf.mxu0
    %v3128 = vadd.f32 %v2787, %v3127
    %3129 = vmatmul.bf16.gmra.mxu0 %v2713
    %v3130 = vpop.f32.mrf.mxu0
    %v3131 = vadd.f32 %v2787, %v3130
    %v3132 = vpop.f32.mrf.mxu0
    %v3133 = vadd.f32 %v2787, %v3132
    %3134 = vmatmul.bf16.gmra.mxu0 %v2717
    %v3135 = vpop.f32.mrf.mxu0
    %v3136 = vadd.f32 %v2787, %v3135
    %v3137 = vpop.f32.mrf.mxu0
    %v3138 = vadd.f32 %v2787, %v3137
    %3139 = vdwg.mxu0
    %3140 = vmatpush.bf16.msra.mxu0 %v3013
    %3141 = vmatpush.bf16.msra.mxu0 %v3011
    %3142 = vmatpush.bf16.msra.mxu0 %v3009
    %3143 = vmatpush.bf16.msra.mxu0 %v3007
    %3144 = vmatpush.bf16.msra.mxu0 %v3005
    %3145 = vmatpush.bf16.msra.mxu0 %v3003
    %3146 = vmatpush.bf16.msra.mxu0 %v3001
    %3147 = vmatpush.bf16.msra.mxu0 %v2999
    %3148 = vmatmul.bf16.gmra.mxu0 %v2706
    %v3149 = vpop.f32.mrf.mxu0
    %v3150 = vadd.f32 %v3121, %v3149
    %v3151 = vpop.f32.mrf.mxu0
    %v3152 = vadd.f32 %v3123, %v3151
    %3153 = vmatmul.bf16.gmra.mxu0 %v2710
    %v3154 = vpop.f32.mrf.mxu0
    %v3155 = vadd.f32 %v3126, %v3154
    %v3156 = vpop.f32.mrf.mxu0
    %v3157 = vadd.f32 %v3128, %v3156
    %3158 = vmatmul.bf16.gmra.mxu0 %v2714
    %v3159 = vpop.f32.mrf.mxu0
    %v3160 = vadd.f32 %v3131, %v3159
    %v3161 = vpop.f32.mrf.mxu0
    %v3162 = vadd.f32 %v3133, %v3161
    %3163 = vmatmul.bf16.gmra.mxu0 %v2718
    %v3164 = vpop.f32.mrf.mxu0
    %v3165 = vadd.f32 %v3136, %v3164
    %v3166 = vpop.f32.mrf.mxu0
    %v3167 = vadd.f32 %v3138, %v3166
    %3168 = vdwg.mxu0
    %3169 = vmatpush.bf16.msra.mxu0 %v3029
    %3170 = vmatpush.bf16.msra.mxu0 %v3027
    %3171 = vmatpush.bf16.msra.mxu0 %v3025
    %3172 = vmatpush.bf16.msra.mxu0 %v3023
    %3173 = vmatpush.bf16.msra.mxu0 %v3021
    %3174 = vmatpush.bf16.msra.mxu0 %v3019
    %3175 = vmatpush.bf16.msra.mxu0 %v3017
    %3176 = vmatpush.bf16.msra.mxu0 %v3015
    %3177 = vmatmul.bf16.gmra.mxu0 %v2707
    %v3178 = vpop.f32.mrf.mxu0
    %v3179 = vadd.f32 %v3150, %v3178
    %v3180 = vpop.f32.mrf.mxu0
    %v3181 = vadd.f32 %v3152, %v3180
    %3182 = vmatmul.bf16.gmra.mxu0 %v2711
    %v3183 = vpop.f32.mrf.mxu0
    %v3184 = vadd.f32 %v3155, %v3183
    %v3185 = vpop.f32.mrf.mxu0
    %v3186 = vadd.f32 %v3157, %v3185
    %3187 = vmatmul.bf16.gmra.mxu0 %v2715
    %v3188 = vpop.f32.mrf.mxu0
    %v3189 = vadd.f32 %v3160, %v3188
    %v3190 = vpop.f32.mrf.mxu0
    %v3191 = vadd.f32 %v3162, %v3190
    %3192 = vmatmul.bf16.gmra.mxu0 %v2719
    %v3193 = vpop.f32.mrf.mxu0
    %v3194 = vadd.f32 %v3165, %v3193
    %v3195 = vpop.f32.mrf.mxu0
    %v3196 = vadd.f32 %v3167, %v3195
    %3197 = vdwg.mxu0
    %3198 = vmatpush.bf16.msra.mxu0 %v3045
    %3199 = vmatpush.bf16.msra.mxu0 %v3043
    %3200 = vmatpush.bf16.msra.mxu0 %v3041
    %3201 = vmatpush.bf16.msra.mxu0 %v3039
    %3202 = vmatpush.bf16.msra.mxu0 %v3037
    %3203 = vmatpush.bf16.msra.mxu0 %v3035
    %3204 = vmatpush.bf16.msra.mxu0 %v3033
    %3205 = vmatpush.bf16.msra.mxu0 %v3031
    %3206 = vmatmul.bf16.gmra.mxu0 %v2708
    %v3207 = vpop.f32.mrf.mxu0
    %v3208 = vadd.f32 %v3179, %v3207
    %v3209 = vpop.f32.mrf.mxu0
    %v3210 = vadd.f32 %v3181, %v3209
    %3211 = vmatmul.bf16.gmra.mxu0 %v2712
    %v3212 = vpop.f32.mrf.mxu0
    %v3213 = vadd.f32 %v3184, %v3212
    %v3214 = vpop.f32.mrf.mxu0
    %v3215 = vadd.f32 %v3186, %v3214
    %3216 = vmatmul.bf16.gmra.mxu0 %v2716
    %v3217 = vpop.f32.mrf.mxu0
    %v3218 = vadd.f32 %v3189, %v3217
    %v3219 = vpop.f32.mrf.mxu0
    %v3220 = vadd.f32 %v3191, %v3219
    %3221 = vmatmul.bf16.gmra.mxu0 %v2720
    %v3222 = vpop.f32.mrf.mxu0
    %v3223 = vadd.f32 %v3194, %v3222
    %v3224 = vpop.f32.mrf.mxu0
    %v3225 = vadd.f32 %v3196, %v3224
    %3226 = vdwg.mxu0
    %3227 = vmatpush.bf16.msra.mxu0 %v2998
    %3228 = vmatpush.bf16.msra.mxu0 %v2996
    %3229 = vmatpush.bf16.msra.mxu0 %v2994
    %3230 = vmatpush.bf16.msra.mxu0 %v2992
    %3231 = vmatpush.bf16.msra.mxu0 %v2990
    %3232 = vmatpush.bf16.msra.mxu0 %v2988
    %3233 = vmatpush.bf16.msra.mxu0 %v2986
    %3234 = vmatpush.bf16.msra.mxu0 %v2984
    %3235 = vmatmul.bf16.gmra.mxu0 %v2705
    %v3236 = vpop.f32.mrf.mxu0
    %v3237 = vadd.f32 %v2788, %v3236
    %v3238 = vpop.f32.mrf.mxu0
    %v3239 = vadd.f32 %v2788, %v3238
    %3240 = vmatmul.bf16.gmra.mxu0 %v2709
    %v3241 = vpop.f32.mrf.mxu0
    %v3242 = vadd.f32 %v2788, %v3241
    %v3243 = vpop.f32.mrf.mxu0
    %v3244 = vadd.f32 %v2788, %v3243
    %3245 = vmatmul.bf16.gmra.mxu0 %v2713
    %v3246 = vpop.f32.mrf.mxu0
    %v3247 = vadd.f32 %v2788, %v3246
    %v3248 = vpop.f32.mrf.mxu0
    %v3249 = vadd.f32 %v2788, %v3248
    %3250 = vmatmul.bf16.gmra.mxu0 %v2717
    %v3251 = vpop.f32.mrf.mxu0
    %v3252 = vadd.f32 %v2788, %v3251
    %v3253 = vpop.f32.mrf.mxu0
    %v3254 = vadd.f32 %v2788, %v3253
    %3255 = vdwg.mxu0
    %3256 = vmatpush.bf16.msra.mxu0 %v3014
    %3257 = vmatpush.bf16.msra.mxu0 %v3012
    %3258 = vmatpush.bf16.msra.mxu0 %v3010
    %3259 = vmatpush.bf16.msra.mxu0 %v3008
    %3260 = vmatpush.bf16.msra.mxu0 %v3006
    %3261 = vmatpush.bf16.msra.mxu0 %v3004
    %3262 = vmatpush.bf16.msra.mxu0 %v3002
    %3263 = vmatpush.bf16.msra.mxu0 %v3000
    %3264 = vmatmul.bf16.gmra.mxu0 %v2706
    %v3265 = vpop.f32.mrf.mxu0
    %v3266 = vadd.f32 %v3237, %v3265
    %v3267 = vpop.f32.mrf.mxu0
    %v3268 = vadd.f32 %v3239, %v3267
    %3269 = vmatmul.bf16.gmra.mxu0 %v2710
    %v3270 = vpop.f32.mrf.mxu0
    %v3271 = vadd.f32 %v3242, %v3270
    %v3272 = vpop.f32.mrf.mxu0
    %v3273 = vadd.f32 %v3244, %v3272
    %3274 = vmatmul.bf16.gmra.mxu0 %v2714
    %v3275 = vpop.f32.mrf.mxu0
    %v3276 = vadd.f32 %v3247, %v3275
    %v3277 = vpop.f32.mrf.mxu0
    %v3278 = vadd.f32 %v3249, %v3277
    %3279 = vmatmul.bf16.gmra.mxu0 %v2718
    %v3280 = vpop.f32.mrf.mxu0
    %v3281 = vadd.f32 %v3252, %v3280
    %v3282 = vpop.f32.mrf.mxu0
    %v3283 = vadd.f32 %v3254, %v3282
    %3284 = vdwg.mxu0
    %3285 = vmatpush.bf16.msra.mxu0 %v3030
    %3286 = vmatpush.bf16.msra.mxu0 %v3028
    %3287 = vmatpush.bf16.msra.mxu0 %v3026
    %3288 = vmatpush.bf16.msra.mxu0 %v3024
    %3289 = vmatpush.bf16.msra.mxu0 %v3022
    %3290 = vmatpush.bf16.msra.mxu0 %v3020
    %3291 = vmatpush.bf16.msra.mxu0 %v3018
    %3292 = vmatpush.bf16.msra.mxu0 %v3016
    %3293 = vmatmul.bf16.gmra.mxu0 %v2707
    %v3294 = vpop.f32.mrf.mxu0
    %v3295 = vadd.f32 %v3266, %v3294
    %v3296 = vpop.f32.mrf.mxu0
    %v3297 = vadd.f32 %v3268, %v3296
    %3298 = vmatmul.bf16.gmra.mxu0 %v2711
    %v3299 = vpop.f32.mrf.mxu0
    %v3300 = vadd.f32 %v3271, %v3299
    %v3301 = vpop.f32.mrf.mxu0
    %v3302 = vadd.f32 %v3273, %v3301
    %3303 = vmatmul.bf16.gmra.mxu0 %v2715
    %v3304 = vpop.f32.mrf.mxu0
    %v3305 = vadd.f32 %v3276, %v3304
    %v3306 = vpop.f32.mrf.mxu0
    %v3307 = vadd.f32 %v3278, %v3306
    %3308 = vmatmul.bf16.gmra.mxu0 %v2719
    %v3309 = vpop.f32.mrf.mxu0
    %v3310 = vadd.f32 %v3281, %v3309
    %v3311 = vpop.f32.mrf.mxu0
    %v3312 = vadd.f32 %v3283, %v3311
    %3313 = vdwg.mxu0
    %3314 = vmatpush.bf16.msra.mxu0 %v3046
    %3315 = vmatpush.bf16.msra.mxu0 %v3044
    %3316 = vmatpush.bf16.msra.mxu0 %v3042
    %3317 = vmatpush.bf16.msra.mxu0 %v3040
    %3318 = vmatpush.bf16.msra.mxu0 %v3038
    %3319 = vmatpush.bf16.msra.mxu0 %v3036
    %3320 = vmatpush.bf16.msra.mxu0 %v3034
    %3321 = vmatpush.bf16.msra.mxu0 %v3032
    %3322 = vmatmul.bf16.gmra.mxu0 %v2708
    %v3323 = vpop.f32.mrf.mxu0
    %v3324 = vadd.f32 %v3295, %v3323
    %v3325 = vpop.f32.mrf.mxu0
    %v3326 = vadd.f32 %v3297, %v3325
    %3327 = vmatmul.bf16.gmra.mxu0 %v2712
    %v3328 = vpop.f32.mrf.mxu0
    %v3329 = vadd.f32 %v3300, %v3328
    %v3330 = vpop.f32.mrf.mxu0
    %v3331 = vadd.f32 %v3302, %v3330
    %3332 = vmatmul.bf16.gmra.mxu0 %v2716
    %v3333 = vpop.f32.mrf.mxu0
    %v3334 = vadd.f32 %v3305, %v3333
    %v3335 = vpop.f32.mrf.mxu0
    %v3336 = vadd.f32 %v3307, %v3335
    %3337 = vmatmul.bf16.gmra.mxu0 %v2720
    %v3338 = vpop.f32.mrf.mxu0
    %v3339 = vadd.f32 %v3310, %v3338
    %v3340 = vpop.f32.mrf.mxu0
    %v3341 = vadd.f32 %v3312, %v3340
    %3342 = vdwg.mxu0
    %v3343 = vmax.f32 %v3208, 0.0
    %v3344 = vmax.f32 %v3324, 0.0
    %v3345 = vmax.f32 %v3210, 0.0
    %v3346 = vmax.f32 %v3326, 0.0
    %v3347 = vmax.f32 %v3213, 0.0
    %v3348 = vmax.f32 %v3329, 0.0
    %v3349 = vmax.f32 %v3215, 0.0
    %v3350 = vmax.f32 %v3331, 0.0
    %v3351 = vmax.f32 %v3218, 0.0
    %v3352 = vmax.f32 %v3334, 0.0
    %v3353 = vmax.f32 %v3220, 0.0
    %v3354 = vmax.f32 %v3336, 0.0
    %v3355 = vmax.f32 %v3223, 0.0
    %v3356 = vmax.f32 %v3339, 0.0
    %v3357 = vmax.f32 %v3225, 0.0
    %v3358 = vmax.f32 %v3341, 0.0
    %v3359 = vpack.c.bf16 %v3345, %v3343
    %v3360 = vpack.c.bf16 %v3346, %v3344
    %v3361 = vpack.c.bf16 %v3349, %v3347
    %v3362 = vpack.c.bf16 %v3350, %v3348
    %v3363 = vpack.c.bf16 %v3353, %v3351
    %v3364 = vpack.c.bf16 %v3354, %v3352
    %v3365 = vpack.c.bf16 %v3357, %v3355
    %v3366 = vpack.c.bf16 %v3358, %v3356
    %v3367 = vld [vmem:[#allocation10] sm:$0xf]
    %v3368 = vld [vmem:[#allocation10 + $0x4] sm:$0xf]
    %v3369 = vld [vmem:[#allocation10 + $0x8] sm:$0xf]
    %v3370 = vld [vmem:[#allocation10 + $0xc] sm:$0xf]
    %v3371 = vld [vmem:[#allocation10 + $0x10] sm:$0xf]
    %v3372 = vld [vmem:[#allocation10 + $0x14] sm:$0xf]
    %v3373 = vld [vmem:[#allocation10 + $0x18] sm:$0xf]
    %v3374 = vld [vmem:[#allocation10 + $0x1c] sm:$0xf]
    %v3375 = vld [vmem:[#allocation10 + $0x20] sm:$0xf]
    %v3376 = vld [vmem:[#allocation10 + $0x24] sm:$0xf]
    %v3377 = vld [vmem:[#allocation10 + $0x28] sm:$0xf]
    %v3378 = vld [vmem:[#allocation10 + $0x2c] sm:$0xf]
    %v3379 = vld [vmem:[#allocation10 + $0x30] sm:$0xf]
    %v3380 = vld [vmem:[#allocation10 + $0x34] sm:$0xf]
    %v3381 = vld [vmem:[#allocation10 + $0x38] sm:$0xf]
    %v3382 = vld [vmem:[#allocation10 + $0x3c] sm:$0xf]
    %v3383 = vld [vmem:[#allocation10 + $0x40] sm:$0xf]
    %v3384 = vld [vmem:[#allocation10 + $0x44] sm:$0xf]
    %v3385 = vld [vmem:[#allocation10 + $0x48] sm:$0xf]
    %v3386 = vld [vmem:[#allocation10 + $0x4c] sm:$0xf]
    %v3387 = vld [vmem:[#allocation10 + $0x50] sm:$0xf]
    %v3388 = vld [vmem:[#allocation10 + $0x54] sm:$0xf]
    %v3389 = vld [vmem:[#allocation10 + $0x58] sm:$0xf]
    %v3390 = vld [vmem:[#allocation10 + $0x5c] sm:$0xf]
    %v3391 = vld [vmem:[#allocation10 + $0x60] sm:$0xf]
    %v3392 = vld [vmem:[#allocation10 + $0x64] sm:$0xf]
    %v3393 = vld [vmem:[#allocation10 + $0x68] sm:$0xf]
    %v3394 = vld [vmem:[#allocation10 + $0x6c] sm:$0xf]
    %v3395 = vld [vmem:[#allocation10 + $0x70] sm:$0xf]
    %v3396 = vld [vmem:[#allocation10 + $0x74] sm:$0xf]
    %v3397 = vld [vmem:[#allocation10 + $0x78] sm:$0xf]
    %v3398 = vld [vmem:[#allocation10 + $0x7c] sm:$0xf]
    %v3399 = vld [vmem:[%s6] sm:$0x1]
    %v3401 = vperm.slane %v3399, 0
    %v3435 = vunpack.c.l.b16 %v3367
    %v3436 = vunpack.c.l.b16 %v3368
    %v3437 = vunpack.c.l.b16 %v3369
    %v3438 = vunpack.c.l.b16 %v3370
    %v3439 = vunpack.c.l.b16 %v3371
    %v3440 = vunpack.c.l.b16 %v3372
    %v3441 = vunpack.c.l.b16 %v3373
    %v3442 = vunpack.c.l.b16 %v3374
    %v3443 = vunpack.c.l.b16 %v3375
    %v3444 = vunpack.c.l.b16 %v3376
    %v3445 = vunpack.c.l.b16 %v3377
    %v3446 = vunpack.c.l.b16 %v3378
    %v3447 = vunpack.c.l.b16 %v3379
    %v3448 = vunpack.c.l.b16 %v3380
    %v3449 = vunpack.c.l.b16 %v3381
    %v3450 = vunpack.c.l.b16 %v3382
    %v3451 = vunpack.c.l.b16 %v3383
    %v3452 = vunpack.c.l.b16 %v3384
    %v3453 = vunpack.c.l.b16 %v3385
    %v3454 = vunpack.c.l.b16 %v3386
    %v3455 = vunpack.c.l.b16 %v3387
    %v3456 = vunpack.c.l.b16 %v3388
    %v3457 = vunpack.c.l.b16 %v3389
    %v3458 = vunpack.c.l.b16 %v3390
    %v3459 = vunpack.c.l.b16 %v3391
    %v3460 = vunpack.c.l.b16 %v3392
    %v3461 = vunpack.c.l.b16 %v3393
    %v3462 = vunpack.c.l.b16 %v3394
    %v3463 = vunpack.c.l.b16 %v3395
    %v3464 = vunpack.c.l.b16 %v3396
    %v3465 = vunpack.c.l.b16 %v3397
    %v3466 = vunpack.c.l.b16 %v3398
    %v3467 = vpack.c.b16 %v3436, %v3435
    %v3468 = vpack.c.b16 %v3438, %v3437
    %v3469 = vpack.c.b16 %v3440, %v3439
    %v3470 = vpack.c.b16 %v3442, %v3441
    %v3471 = vpack.c.b16 %v3444, %v3443
    %v3472 = vpack.c.b16 %v3446, %v3445
    %v3473 = vpack.c.b16 %v3448, %v3447
    %v3474 = vpack.c.b16 %v3450, %v3449
    %v3475 = vpack.c.b16 %v3452, %v3451
    %v3476 = vpack.c.b16 %v3454, %v3453
    %v3477 = vpack.c.b16 %v3456, %v3455
    %v3478 = vpack.c.b16 %v3458, %v3457
    %v3479 = vpack.c.b16 %v3460, %v3459
    %v3480 = vpack.c.b16 %v3462, %v3461
    %v3481 = vpack.c.b16 %v3464, %v3463
    %v3482 = vpack.c.b16 %v3466, %v3465
    %3499 = vmatpush.bf16.msra.mxu0 %v3474
    %3500 = vmatpush.bf16.msra.mxu0 %v3473
    %3501 = vmatpush.bf16.msra.mxu0 %v3472
    %3502 = vmatpush.bf16.msra.mxu0 %v3471
    %3503 = vmatpush.bf16.msra.mxu0 %v3470
    %3504 = vmatpush.bf16.msra.mxu0 %v3469
    %3505 = vmatpush.bf16.msra.mxu0 %v3468
    %3506 = vmatpush.bf16.msra.mxu0 %v3467
    %3507 = vmatmul.bf16.gmra.mxu0 %v3359
    %v3508 = vpop.f32.mrf.mxu0
    %v3509 = vadd.f32 %v3401, %v3508
    %v3510 = vpop.f32.mrf.mxu0
    %v3511 = vadd.f32 %v3401, %v3510
    %3512 = vmatmul.bf16.gmra.mxu0 %v3361
    %v3513 = vpop.f32.mrf.mxu0
    %v3514 = vadd.f32 %v3401, %v3513
    %v3515 = vpop.f32.mrf.mxu0
    %v3516 = vadd.f32 %v3401, %v3515
    %3517 = vmatmul.bf16.gmra.mxu0 %v3363
    %v3518 = vpop.f32.mrf.mxu0
    %v3519 = vadd.f32 %v3401, %v3518
    %v3520 = vpop.f32.mrf.mxu0
    %v3521 = vadd.f32 %v3401, %v3520
    %3522 = vmatmul.bf16.gmra.mxu0 %v3365
    %v3523 = vpop.f32.mrf.mxu0
    %v3524 = vadd.f32 %v3401, %v3523
    %v3525 = vpop.f32.mrf.mxu0
    %v3526 = vadd.f32 %v3401, %v3525
    %3527 = vdwg.mxu0
    %3528 = vmatpush.bf16.msra.mxu0 %v3482
    %3529 = vmatpush.bf16.msra.mxu0 %v3481
    %3530 = vmatpush.bf16.msra.mxu0 %v3480
    %3531 = vmatpush.bf16.msra.mxu0 %v3479
    %3532 = vmatpush.bf16.msra.mxu0 %v3478
    %3533 = vmatpush.bf16.msra.mxu0 %v3477
    %3534 = vmatpush.bf16.msra.mxu0 %v3476
    %3535 = vmatpush.bf16.msra.mxu0 %v3475
    %3536 = vmatmul.bf16.gmra.mxu0 %v3360
    %v3537 = vpop.f32.mrf.mxu0
    %v3538 = vadd.f32 %v3509, %v3537
    %v3539 = vpop.f32.mrf.mxu0
    %v3540 = vadd.f32 %v3511, %v3539
    %3541 = vmatmul.bf16.gmra.mxu0 %v3362
    %v3542 = vpop.f32.mrf.mxu0
    %v3543 = vadd.f32 %v3514, %v3542
    %v3544 = vpop.f32.mrf.mxu0
    %v3545 = vadd.f32 %v3516, %v3544
    %3546 = vmatmul.bf16.gmra.mxu0 %v3364
    %v3547 = vpop.f32.mrf.mxu0
    %v3548 = vadd.f32 %v3519, %v3547
    %v3549 = vpop.f32.mrf.mxu0
    %v3550 = vadd.f32 %v3521, %v3549
    %3551 = vmatmul.bf16.gmra.mxu0 %v3366
    %v3552 = vpop.f32.mrf.mxu0
    %v3553 = vadd.f32 %v3524, %v3552
    %v3554 = vpop.f32.mrf.mxu0
    %v3555 = vadd.f32 %v3526, %v3554
    %3556 = vdwg.mxu0
    %v3557 = vmul.f32 %v3538, %v3538
    %v3558 = vmul.f32 %v3540, %v3540
    %v3559 = vmul.f32 %v3543, %v3543
    %v3560 = vmul.f32 %v3545, %v3545
    %v3561 = vmul.f32 %v3548, %v3548
    %v3562 = vmul.f32 %v3550, %v3550
    %v3563 = vmul.f32 %v3553, %v3553
    %v3564 = vmul.f32 %v3555, %v3555
    %3565 = vadd.xlane.f32.xlu0 %v3557
    %v3566 = vpop.xlane.xlu0 %3565
    %3567 = vadd.xlane.f32.xlu0 %v3558
    %v3568 = vpop.xlane.xlu0 %3567
    %3569 = vadd.xlane.f32.xlu0 %v3559
    %v3570 = vpop.xlane.xlu0 %3569
    %3571 = vadd.xlane.f32.xlu0 %v3560
    %v3572 = vpop.xlane.xlu0 %3571
    %3573 = vadd.xlane.f32.xlu0 %v3561
    %v3574 = vpop.xlane.xlu0 %3573
    %3575 = vadd.xlane.f32.xlu0 %v3562
    %v3576 = vpop.xlane.xlu0 %3575
    %3577 = vadd.xlane.f32.xlu0 %v3563
    %v3578 = vpop.xlane.xlu0 %3577
    %3579 = vadd.xlane.f32.xlu0 %v3564
    %v3580 = vpop.xlane.xlu0 %3579
    %v3581 = vmax.f32 %v3566, 1e-24
    %v3582 = vmax.f32 %v3568, 1e-24
    %v3583 = vmax.f32 %v3570, 1e-24
    %v3584 = vmax.f32 %v3572, 1e-24
    %v3585 = vmax.f32 %v3574, 1e-24
    %v3586 = vmax.f32 %v3576, 1e-24
    %v3587 = vmax.f32 %v3578, 1e-24
    %v3588 = vmax.f32 %v3580, 1e-24
    %v3589 = vrsqrt.pop %v3581
    %v3590 = vmul.f32 %v3589, %v3581
    %v3591 = vmul.f32 %v3590, %v3589
    %v3592 = vmul.f32 0.5, %v3591
    %v3593 = vsub.f32 1.5, %v3592
    %v3594 = vmul.f32 %v3589, %v3593
    %vm3595 = vweird.f32 %v3581
    %vm3596 = vweird.f32 %v3589
    %vm3597 = vmor %vm3595, %vm3596
    %v3598 = vsel %vm3597, %v3589, %v3594
    %v3599 = vrsqrt.pop %v3582
    %v3600 = vmul.f32 %v3599, %v3582
    %v3601 = vmul.f32 %v3600, %v3599
    %v3602 = vmul.f32 0.5, %v3601
    %v3603 = vsub.f32 1.5, %v3602
    %v3604 = vmul.f32 %v3599, %v3603
    %vm3605 = vweird.f32 %v3582
    %vm3606 = vweird.f32 %v3599
    %vm3607 = vmor %vm3605, %vm3606
    %v3608 = vsel %vm3607, %v3599, %v3604
    %v3609 = vrsqrt.pop %v3583
    %v3610 = vmul.f32 %v3609, %v3583
    %v3611 = vmul.f32 %v3610, %v3609
    %v3612 = vmul.f32 0.5, %v3611
    %v3613 = vsub.f32 1.5, %v3612
    %v3614 = vmul.f32 %v3609, %v3613
    %vm3615 = vweird.f32 %v3583
    %vm3616 = vweird.f32 %v3609
    %vm3617 = vmor %vm3615, %vm3616
    %v3618 = vsel %vm3617, %v3609, %v3614
    %v3619 = vrsqrt.pop %v3584
    %v3620 = vmul.f32 %v3619, %v3584
    %v3621 = vmul.f32 %v3620, %v3619
    %v3622 = vmul.f32 0.5, %v3621
    %v3623 = vsub.f32 1.5, %v3622
    %v3624 = vmul.f32 %v3619, %v3623
    %vm3625 = vweird.f32 %v3584
    %vm3626 = vweird.f32 %v3619
    %vm3627 = vmor %vm3625, %vm3626
    %v3628 = vsel %vm3627, %v3619, %v3624
    %v3629 = vrsqrt.pop %v3585
    %v3630 = vmul.f32 %v3629, %v3585
    %v3631 = vmul.f32 %v3630, %v3629
    %v3632 = vmul.f32 0.5, %v3631
    %v3633 = vsub.f32 1.5, %v3632
    %v3634 = vmul.f32 %v3629, %v3633
    %vm3635 = vweird.f32 %v3585
    %vm3636 = vweird.f32 %v3629
    %vm3637 = vmor %vm3635, %vm3636
    %v3638 = vsel %vm3637, %v3629, %v3634
    %v3639 = vrsqrt.pop %v3586
    %v3640 = vmul.f32 %v3639, %v3586
    %v3641 = vmul.f32 %v3640, %v3639
    %v3642 = vmul.f32 0.5, %v3641
    %v3643 = vsub.f32 1.5, %v3642
    %v3644 = vmul.f32 %v3639, %v3643
    %vm3645 = vweird.f32 %v3586
    %vm3646 = vweird.f32 %v3639
    %vm3647 = vmor %vm3645, %vm3646
    %v3648 = vsel %vm3647, %v3639, %v3644
    %v3649 = vrsqrt.pop %v3587
    %v3650 = vmul.f32 %v3649, %v3587
    %v3651 = vmul.f32 %v3650, %v3649
    %v3652 = vmul.f32 0.5, %v3651
    %v3653 = vsub.f32 1.5, %v3652
    %v3654 = vmul.f32 %v3649, %v3653
    %vm3655 = vweird.f32 %v3587
    %vm3656 = vweird.f32 %v3649
    %vm3657 = vmor %vm3655, %vm3656
    %v3658 = vsel %vm3657, %v3649, %v3654
    %v3659 = vrsqrt.pop %v3588
    %v3660 = vmul.f32 %v3659, %v3588
    %v3661 = vmul.f32 %v3660, %v3659
    %v3662 = vmul.f32 0.5, %v3661
    %v3663 = vsub.f32 1.5, %v3662
    %v3664 = vmul.f32 %v3659, %v3663
    %vm3665 = vweird.f32 %v3588
    %vm3666 = vweird.f32 %v3659
    %vm3667 = vmor %vm3665, %vm3666
    %v3668 = vsel %vm3667, %v3659, %v3664
    %v3669 = vmul.f32 %v3538, %v3598
    %v3670 = vmul.f32 %v3540, %v3608
    %v3671 = vmul.f32 %v3543, %v3618
    %v3672 = vmul.f32 %v3545, %v3628
    %v3673 = vmul.f32 %v3548, %v3638
    %v3674 = vmul.f32 %v3550, %v3648
    %v3675 = vmul.f32 %v3553, %v3658
    %v3676 = vmul.f32 %v3555, %v3668
    %3677 = vst [vmem:[#allocation11] sm:$0xff] %v3669
    %3678 = vst [vmem:[#allocation11 + $0x8] sm:$0xff] %v3670
    %3679 = vst [vmem:[#allocation11 + $0x10] sm:$0xff] %v3671
    %3680 = vst [vmem:[#allocation11 + $0x18] sm:$0xff] %v3672
    %3681 = vst [vmem:[#allocation11 + $0x20] sm:$0xff] %v3673
    %3682 = vst [vmem:[#allocation11 + $0x28] sm:$0xff] %v3674
    %3683 = vst [vmem:[#allocation11 + $0x30] sm:$0xff] %v3675
    %3684 = vst [vmem:[#allocation11 + $0x38] sm:$0xff] %v3676
    // Predicated region
    $region50: #{tpu_custom_call.1} parent=1 // pred_check
      _
    $region51: #{tpu_custom_call.1} parent=1 // pred_check_branch
      %3686 = sbr.rel (0) target = $region53
    $region52: #{tpu_custom_call.1} parent=1 // pred_region
      %3688 = vsyncadd [#allocation4], 0
      %s3689 = sshll.u32 [#allocation11], 4
      %s3690 = int_to_ptr.vmem [resolvable:$true] %s3689
      %s3691 = sshll.u32 %s7, 4
      %s3692 = int_to_ptr.hbm [resolvable:$true] %s3691
      %3697 = dma.vmem_to_hbm [thread:$0]  %s3690, 1024, %s3692, [#allocation4], 128, 128, 8
    $region53: #{tpu_custom_call.1} parent=1 // pred_fallthru
      _
    // Predicated region
    $region54: #{tpu_custom_call.1} parent=1 // pred_check
      _
    $region55: #{tpu_custom_call.1} parent=1 // pred_check_branch
      %3699 = sbr.rel (0) target = $region57
    $region56: #{tpu_custom_call.1} parent=1 // pred_region
      %3701 = dma.done [#allocation4], 1024
    $region57: #{tpu_custom_call.1} parent=1 // pred_fallthru
      _
    %3702 = vsyncpa [#allocation3], 1
    %3703 = vsyncpa [#allocation6], 1
    %3704 = vsyncpa [#allocation9], 1
    %3705 = vsyncpa [#allocation4], 1

</llo_original>
